<compile_context>
chip_gen: v5e
topology: v5e:2x2
jax: 0.10.0
libtpu: 0.0.40
codegen_flags: <defaults>
</compile_context>

<pallas_src>
import functools

import jax
import jax.numpy as jnp
from jax import lax
from jax.experimental import pallas as pl
from jax.experimental.pallas import tpu as pltpu

LANE = 128     # channel dims are zero-padded to a full lane width (VMEM only)
SUBLANE = 8    # padded image width rounds up to sublane granularity


def _round_up(x, m):
    return (x + m - 1) // m * m


def _strip_height(h):
    """Largest strip height <= 8 that divides H."""
    for t in (8, 4, 2, 1):
        if h % t == 0:
            return t
    return 1


def _basic_block_kernel(x_ref, w1_ref, b1_ref, w2_ref, b2_ref, out_ref,
                        xpad_ref, mid_ref, *, th):
    """One batch element per grid step; row-strip loops inside.

    x_ref   : (H, W, Cin)    bf16  raw NHWC input block (no padding in HBM).
    w1_ref  : (3*CP, 3*FP)   bf16  conv1 weights, BN1 scale folded;
                                   row = dy*CP + cin, col = dx*FP + cout.
    b1_ref  : (1, FP)        f32   BN1 bias (beta - mean*scale).
    w2_ref  : (3*FP, 3*FP)   bf16  conv2 weights, BN2 scale folded.
    b2_ref  : (1, FP)        f32   BN2 bias.
    out_ref : (H, W, FP)     bf16  output block (padded cout are zero).
    xpad_ref: (H+2, WP, CP)  bf16  scratch: zero-ring, channel-padded input.
    mid_ref : (H+2, WP, FP)  bf16  scratch: zero-ring conv1 output.
    """
    H, W, Cin = x_ref.shape
    _, WP, CP = xpad_ref.shape
    FP = out_ref.shape[-1]
    ns = H // th
    bf16 = jnp.bfloat16

    # Every row of both scratches is rewritten every grid step (full-width slab
    # stores only), so the kernel is megacore-safe under "parallel" sharding
    # and never reads stale / uninitialized VMEM.
    xpad_ref[0:1] = jnp.zeros((1, WP, CP), bf16)
    xpad_ref[H + 1:H + 2] = jnp.zeros((1, WP, CP), bf16)
    mid_ref[0:1] = jnp.zeros((1, WP, FP), bf16)
    mid_ref[H + 1:H + 2] = jnp.zeros((1, WP, FP), bf16)

    # ---- stage input: zero ring + channel padding, per row strip -------------
    @pl.loop(0, ns)
    def _stage(s):
        r = s * th
        xs = x_ref[pl.ds(r, th)]                                  # (th, W, Cin)
        if CP > Cin:                                              # pad channels
            xs = jnp.concatenate(
                [xs, jnp.zeros((th, W, CP - Cin), bf16)], axis=2)
        xs = jnp.concatenate(                                     # zero cols L/R
            [jnp.zeros((th, 1, CP), bf16), xs,
             jnp.zeros((th, WP - W - 1, CP), bf16)], axis=1)      # (th, WP, CP)
        xpad_ref[pl.ds(r + 1, th)] = xs

    def conv3x3_strip(src_ref, row, w_ref, k):
        # Conv output rows [row, row+th) from padded rows [row, row+th+2).
        # dy taps fused into the contraction (K = 3*k); the 3 dx taps are the
        # three 128-lane output blocks of a single MXU matmul.
        xcat = jnp.concatenate(
            [src_ref[pl.ds(row + dy, th)] for dy in range(3)], axis=-1)
        acc = jnp.dot(xcat.reshape(th * WP, 3 * k), w_ref[...],
                      preferred_element_type=jnp.float32)
        acc = acc.reshape(th, WP, 3 * FP)
        # out[:, q] = acc_dx0[:, q] + acc_dx1[:, q+1] + acc_dx2[:, q+2]
        return (acc[:, 0:W, 0:FP]
                + acc[:, 1:W + 1, FP:2 * FP]
                + acc[:, 2:W + 2, 2 * FP:3 * FP])                 # (th, W, FP)

    # ---- conv1 + folded-BN1 bias + ReLU -> zero-ring mid scratch -------------
    @pl.loop(0, ns)
    def _conv1(s):
        r = s * th
        b1 = b1_ref[0, :]
        y = jnp.maximum(conv3x3_strip(xpad_ref, r, w1_ref, CP)
                        + b1[None, None, :], 0.0)
        slab = jnp.concatenate(                                   # full-width slab
            [jnp.zeros((th, 1, FP), bf16), y.astype(bf16),
             jnp.zeros((th, WP - W - 1, FP), bf16)], axis=1)
        mid_ref[pl.ds(r + 1, th)] = slab

    # ---- conv2 + folded-BN2 bias + ReLU -> output -----------------------------
    @pl.loop(0, ns)
    def _conv2(s):
        r = s * th
        b2 = b2_ref[0, :]
        y = jnp.maximum(conv3x3_strip(mid_ref, r, w2_ref, FP)
                        + b2[None, None, :], 0.0)
        out_ref[pl.ds(r, th)] = y.astype(out_ref.dtype)


def basic_block_nhwc(x_nhwc, w1_oihw, bn1, w2_oihw, bn2, *, eps=1e-5):
    """Core call: (N, H, W, Cin) -> (N, H, W, FP) bf16 with FP = round_up(F, 128)."""
    N, H, W, Cin = x_nhwc.shape
    F = w1_oihw.shape[0]
    CP = _round_up(Cin, LANE)
    FP = _round_up(F, LANE)
    WP = _round_up(W + 2, SUBLANE)
    TH = _strip_height(H)

    def fold(bn):
        gamma, beta, mean, var = bn
        scale = gamma * lax.rsqrt(var + eps)
        return scale.astype(jnp.float32), (beta - mean * scale).astype(jnp.float32)

    s1, b1 = fold(bn1)
    s2, b2 = fold(bn2)

    def prep_w(w_oihw, scale, cin_p):
        o, i = w_oihw.shape[0], w_oihw.shape[1]
        w = jnp.transpose(w_oihw, (2, 1, 3, 0)).astype(jnp.float32)  # (dy,cin,dx,cout)
        w = w * scale[None, None, None, :]                           # fold BN scale
        w = jnp.pad(w, ((0, 0), (0, cin_p - i), (0, 0), (0, FP - o)))
        return w.reshape(3 * cin_p, 3 * FP).astype(jnp.bfloat16)

    w1c = prep_w(w1_oihw, s1, CP)
    w2c = prep_w(w2_oihw, s2, FP)
    b1p = jnp.pad(b1, (0, FP - F)).reshape(1, FP)
    b2p = jnp.pad(b2, (0, FP - F)).reshape(1, FP)

    kernel = functools.partial(_basic_block_kernel, th=TH)

    return pl.pallas_call(
        kernel,
        out_shape=jax.ShapeDtypeStruct((N, H, W, FP), jnp.bfloat16),
        grid_spec=pltpu.PrefetchScalarGridSpec(
            num_scalar_prefetch=0,
            grid=(N,),
            in_specs=[
                pl.BlockSpec((None, H, W, Cin), lambda n: (n, 0, 0, 0)),
                pl.BlockSpec((3 * CP, 3 * FP), lambda n: (0, 0)),
                pl.BlockSpec((1, FP), lambda n: (0, 0)),
                pl.BlockSpec((3 * FP, 3 * FP), lambda n: (0, 0)),
                pl.BlockSpec((1, FP), lambda n: (0, 0)),
            ],
            out_specs=pl.BlockSpec((None, H, W, FP), lambda n: (n, 0, 0, 0)),
            scratch_shapes=[
                pltpu.VMEM((H + 2, WP, CP), jnp.bfloat16),
                pltpu.VMEM((H + 2, WP, FP), jnp.bfloat16),
            ],
        ),
        compiler_params=pltpu.CompilerParams(
            dimension_semantics=("parallel",),
            vmem_limit_bytes=32 * 1024 * 1024,
        ),
    )(x_nhwc.astype(jnp.bfloat16), w1c, b1p, w2c, b2p)


@jax.jit
def basic_block_forward(x_nchw, w1_oihw, bn1, w2_oihw, bn2):
    """Module-equivalent NCHW API: (N, Cin, H, W) f32 -> (N, F, H, W) f32."""
    F = w1_oihw.shape[0]
    x = jnp.transpose(x_nchw, (0, 2, 3, 1))          # NCHW -> NHWC (one XLA pass)
    out = basic_block_nhwc(x, w1_oihw, bn1, w2_oihw, bn2)
    out = out[..., :F].astype(jnp.float32)           # drop padded cout
    return jnp.transpose(out, (0, 3, 1, 2))          # NHWC -> NCHW


def _reference_forward(x_nchw, w1, bn1, w2, bn2):
    """Pure-JAX reference (lax.conv, f32) mirroring the PyTorch module."""
    eps = 1e-5

    def conv(x, w):
        return lax.conv_general_dilated(
            x, w, window_strides=(1, 1), padding="SAME",
            dimension_numbers=("NCHW", "OIHW", "NCHW"))

    def bn(x, p):
        gamma, beta, mean, var = p
        s = gamma * lax.rsqrt(var + eps)
        b = beta - mean * s
        return x * s[None, :, None, None] + b[None, :, None, None]

    y = jnp.maximum(bn(conv(x_nchw, w1), bn1), 0.0)
    y = bn(conv(y, w2), bn2)
    return jnp.maximum(y, 0.0)


if __name__ == "__main__":
    key = jax.random.PRNGKey(0)
    k_x, k_w1, k_w2, k_g1, k_b1, k_m1, k_v1, k_g2, k_b2, k_m2, k_v2 = (
        jax.random.split(key, 11))

    N, Cin, H, W = 2, 4, 16, 16    # batch, in_channels, spatial
    F = 8                          # features

    # Inputs are bf16-representable (the kernel runs bf16 operands on the MXU).
    x = jax.random.normal(k_x, (N, Cin, H, W), dtype=jnp.float32)
    x = x.astype(jnp.bfloat16).astype(jnp.float32)

    # Conv weights (OIHW, bias=False).
    w1 = jax.random.normal(k_w1, (F, Cin, 3, 3), dtype=jnp.float32) * 0.1
    w2 = jax.random.normal(k_w2, (F, F, 3, 3), dtype=jnp.float32) * 0.1

    # BatchNorm params: (gamma, beta, running_mean, running_var)
    bn1 = (jax.random.normal(k_g1, (F,)) * 0.1 + 1.0,
           jax.random.normal(k_b1, (F,)) * 0.1,
           jax.random.normal(k_m1, (F,)) * 0.1,
           jax.random.uniform(k_v1, (F,), minval=0.5, maxval=1.5))
    bn2 = (jax.random.normal(k_g2, (F,)) * 0.1 + 1.0,
           jax.random.normal(k_b2, (F,)) * 0.1,
           jax.random.normal(k_m2, (F,)) * 0.1,
           jax.random.uniform(k_v2, (F,), minval=0.5, maxval=1.5))

    out = jax.block_until_ready(basic_block_forward(x, w1, bn1, w2, bn2))
    ref = jax.block_until_ready(_reference_forward(x, w1, bn1, w2, bn2))

    assert out.shape == (N, F, H, W)
    # bf16 operands / folded bf16 weights / bf16 output vs f32 reference.
    assert jnp.allclose(out, ref, atol=5e-2, rtol=5e-2), "mismatch vs reference"

    print("KERNEL_OK")
</pallas_src>

<mosaic_0001>
module attributes {stable_mosaic.version = 11 : i64} {
  func.func @_basic_block_kernel(%arg0: i32, %arg1: memref<1x16x16x4xbf16, #tpu.memory_space<vmem>>, %arg2: memref<384x384xbf16, #tpu.memory_space<vmem>>, %arg3: memref<1x128xf32, #tpu.memory_space<vmem>>, %arg4: memref<384x384xbf16, #tpu.memory_space<vmem>>, %arg5: memref<1x128xf32, #tpu.memory_space<vmem>>, %arg6: memref<1x16x16x128xbf16, #tpu.memory_space<vmem>>, %arg7: memref<18x24x128xbf16, #tpu.memory_space<vmem>>, %arg8: memref<18x24x128xbf16, #tpu.memory_space<vmem>>) attributes {dimension_semantics = [#tpu.dimension_semantics<parallel>], iteration_bounds = array<i64: 2>, scalar_prefetch = 0 : i64, scratch_operands = 2 : i64, tpu.core_type = #tpu.core_type<tc>, window_params = [{transform_indices = @transform_0, window_bounds = array<i64: 1, 16, 16, 4>}, {pipeline_mode = #tpu.pipeline_mode<synchronous>, transform_indices = @transform_1, window_bounds = array<i64: 384, 384>}, {pipeline_mode = #tpu.pipeline_mode<synchronous>, transform_indices = @transform_2, window_bounds = array<i64: 1, 128>}, {pipeline_mode = #tpu.pipeline_mode<synchronous>, transform_indices = @transform_3, window_bounds = array<i64: 384, 384>}, {pipeline_mode = #tpu.pipeline_mode<synchronous>, transform_indices = @transform_4, window_bounds = array<i64: 1, 128>}, {transform_indices = @transform_5, window_bounds = array<i64: 1, 16, 16, 128>}]} {
    %cst = arith.constant 0.000000e+00 : bf16
    %0 = vector.broadcast %cst : bf16 to vector<1x24x128xbf16>
    %c0 = arith.constant 0 : index
    %c0_0 = arith.constant 0 : index
    %c0_1 = arith.constant 0 : index
    %1 = vector.load %arg7[%c0, %c0_0, %c0_1] : memref<18x24x128xbf16, #tpu.memory_space<vmem>>, vector<1x24x128xbf16>
    tpu.vector_store %arg7[%c0, %c0_0, %c0_1], %0 {strides = array<i32>} : memref<18x24x128xbf16, #tpu.memory_space<vmem>>, vector<1x24x128xbf16>,
    %cst_2 = arith.constant 0.000000e+00 : bf16
    %2 = vector.broadcast %cst_2 : bf16 to vector<1x24x128xbf16>
    %c17 = arith.constant 17 : index
    %c0_3 = arith.constant 0 : index
    %c0_4 = arith.constant 0 : index
    %3 = vector.load %arg7[%c17, %c0_3, %c0_4] : memref<18x24x128xbf16, #tpu.memory_space<vmem>>, vector<1x24x128xbf16>
    tpu.vector_store %arg7[%c17, %c0_3, %c0_4], %2 {strides = array<i32>} : memref<18x24x128xbf16, #tpu.memory_space<vmem>>, vector<1x24x128xbf16>,
    %cst_5 = arith.constant 0.000000e+00 : bf16
    %4 = vector.broadcast %cst_5 : bf16 to vector<1x24x128xbf16>
    %c0_6 = arith.constant 0 : index
    %c0_7 = arith.constant 0 : index
    %c0_8 = arith.constant 0 : index
    %5 = vector.load %arg8[%c0_6, %c0_7, %c0_8] : memref<18x24x128xbf16, #tpu.memory_space<vmem>>, vector<1x24x128xbf16>
    tpu.vector_store %arg8[%c0_6, %c0_7, %c0_8], %4 {strides = array<i32>} : memref<18x24x128xbf16, #tpu.memory_space<vmem>>, vector<1x24x128xbf16>,
    %cst_9 = arith.constant 0.000000e+00 : bf16
    %6 = vector.broadcast %cst_9 : bf16 to vector<1x24x128xbf16>
    %c17_10 = arith.constant 17 : index
    %c0_11 = arith.constant 0 : index
    %c0_12 = arith.constant 0 : index
    %7 = vector.load %arg8[%c17_10, %c0_11, %c0_12] : memref<18x24x128xbf16, #tpu.memory_space<vmem>>, vector<1x24x128xbf16>
    tpu.vector_store %arg8[%c17_10, %c0_11, %c0_12], %6 {strides = array<i32>} : memref<18x24x128xbf16, #tpu.memory_space<vmem>>, vector<1x24x128xbf16>,
    %c0_i32 = arith.constant 0 : i32
    %c2_i32 = arith.constant 2 : i32
    %8 = arith.addi %c0_i32, %c2_i32 : i32
    %c1_i32 = arith.constant 1 : i32
    scf.for %arg9 = %c0_i32 to %8 step %c1_i32  : i32 {
      %c1_i32_22 = arith.constant 1 : i32
      %11 = arith.muli %arg9, %c1_i32_22 : i32
      %c0_i32_23 = arith.constant 0 : i32
      %12 = arith.addi %c0_i32_23, %11 : i32
      %c8_i32 = arith.constant 8 : i32
      %13 = arith.muli %12, %c8_i32 : i32
      %c0_24 = arith.constant 0 : index
      %14 = arith.index_cast %13 : i32 to index
      %c0_25 = arith.constant 0 : index
      %c0_26 = arith.constant 0 : index
      %15 = vector.load %arg1[%c0_24, %14, %c0_25, %c0_26] : memref<1x16x16x4xbf16, #tpu.memory_space<vmem>>, vector<1x8x16x4xbf16>
      %16 = vector.shape_cast %15 : vector<1x8x16x4xbf16> to vector<8x16x4xbf16>
      %cst_27 = arith.constant 0.000000e+00 : bf16
      %17 = vector.broadcast %cst_27 : bf16 to vector<8x16x124xbf16>
      %18 = tpu.concatenate %16, %17 in 2 : vector<8x16x4xbf16>, vector<8x16x124xbf16> -> vector<8x16x128xbf16>
      %cst_28 = arith.constant 0.000000e+00 : bf16
      %19 = vector.broadcast %cst_28 : bf16 to vector<8x1x128xbf16>
      %cst_29 = arith.constant 0.000000e+00 : bf16
      %20 = vector.broadcast %cst_29 : bf16 to vector<8x7x128xbf16>
      %21 = tpu.concatenate %19, %18, %20 in 1 : vector<8x1x128xbf16>, vector<8x16x128xbf16>, vector<8x7x128xbf16> -> vector<8x24x128xbf16>
      %c1_i32_30 = arith.constant 1 : i32
      %22 = arith.addi %13, %c1_i32_30 : i32
      %23 = arith.index_cast %22 : i32 to index
      %c0_31 = arith.constant 0 : index
      %c0_32 = arith.constant 0 : index
      %24 = vector.load %arg7[%23, %c0_31, %c0_32] : memref<18x24x128xbf16, #tpu.memory_space<vmem>>, vector<8x24x128xbf16>
      tpu.vector_store %arg7[%23, %c0_31, %c0_32], %21 {strides = array<i32>} : memref<18x24x128xbf16, #tpu.memory_space<vmem>>, vector<8x24x128xbf16>,
    }
    %c2_i32_13 = arith.constant 2 : i32
    %c0_i32_14 = arith.constant 0 : i32
    %c2_i32_15 = arith.constant 2 : i32
    %9 = arith.addi %c0_i32_14, %c2_i32_15 : i32
    %c1_i32_16 = arith.constant 1 : i32
    scf.for %arg9 = %c0_i32_14 to %9 step %c1_i32_16  : i32 {
      %c1_i32_22 = arith.constant 1 : i32
      %11 = arith.muli %arg9, %c1_i32_22 : i32
      %c0_i32_23 = arith.constant 0 : i32
      %12 = arith.addi %c0_i32_23, %11 : i32
      %c8_i32 = arith.constant 8 : i32
      %13 = arith.muli %12, %c8_i32 : i32
      %c0_24 = arith.constant 0 : index
      %c0_25 = arith.constant 0 : index
      %14 = vector.load %arg3[%c0_24, %c0_25] : memref<1x128xf32, #tpu.memory_space<vmem>>, vector<1x128xf32>
      %15 = vector.shape_cast %14 : vector<1x128xf32> to vector<128xf32>
      %c0_i32_26 = arith.constant 0 : i32
      %16 = arith.addi %13, %c0_i32_26 : i32
      %17 = arith.index_cast %16 : i32 to index
      %c0_27 = arith.constant 0 : index
      %c0_28 = arith.constant 0 : index
      %18 = vector.load %arg7[%17, %c0_27, %c0_28] : memref<18x24x128xbf16, #tpu.memory_space<vmem>>, vector<8x24x128xbf16>
      %c1_i32_29 = arith.constant 1 : i32
      %19 = arith.addi %13, %c1_i32_29 : i32
      %20 = arith.index_cast %19 : i32 to index
      %c0_30 = arith.constant 0 : index
      %c0_31 = arith.constant 0 : index
      %21 = vector.load %arg7[%20, %c0_30, %c0_31] : memref<18x24x128xbf16, #tpu.memory_space<vmem>>, vector<8x24x128xbf16>
      %c2_i32_32 = arith.constant 2 : i32
      %22 = arith.addi %13, %c2_i32_32 : i32
      %23 = arith.index_cast %22 : i32 to index
      %c0_33 = arith.constant 0 : index
      %c0_34 = arith.constant 0 : index
      %24 = vector.load %arg7[%23, %c0_33, %c0_34] : memref<18x24x128xbf16, #tpu.memory_space<vmem>>, vector<8x24x128xbf16>
      %25 = tpu.concatenate %18, %21, %24 in 2 : vector<8x24x128xbf16>, vector<8x24x128xbf16>, vector<8x24x128xbf16> -> vector<8x24x384xbf16>
      %26 = vector.shape_cast %25 : vector<8x24x384xbf16> to vector<192x384xbf16>
      %c0_35 = arith.constant 0 : index
      %c0_36 = arith.constant 0 : index
      %27 = vector.load %arg2[%c0_35, %c0_36] : memref<384x384xbf16, #tpu.memory_space<vmem>>, vector<384x384xbf16>
      %cst_37 = arith.constant dense<0.000000e+00> : vector<192x384xf32>
      %28 = tpu.matmul %26, %27, %cst_37 {dimension_numbers = #tpu.dot_dimension_numbers<[1], [0], [0], [1], [0, 0, 1, 1], [], []>} : vector<192x384xbf16>, vector<384x384xbf16>, vector<192x384xf32> -> vector<192x384xf32>
      %29 = vector.shape_cast %28 : vector<192x384xf32> to vector<8x24x384xf32>
      %30 = vector.extract_strided_slice %29 {offsets = [0, 0, 0], sizes = [8, 16, 128], strides = [1, 1, 1]} : vector<8x24x384xf32> to vector<8x16x128xf32>
      %31 = vector.extract_strided_slice %29 {offsets = [0, 1, 128], sizes = [8, 16, 128], strides = [1, 1, 1]} : vector<8x24x384xf32> to vector<8x16x128xf32>
      %32 = arith.addf %30, %31 : vector<8x16x128xf32>
      %33 = vector.extract_strided_slice %29 {offsets = [0, 2, 256], sizes = [8, 16, 128], strides = [1, 1, 1]} : vector<8x24x384xf32> to vector<8x16x128xf32>
      %34 = arith.addf %32, %33 : vector<8x16x128xf32>
      %35 = vector.shape_cast %15 : vector<128xf32> to vector<1x1x128xf32>
      %36 = vector.broadcast %35 : vector<1x1x128xf32> to vector<8x16x128xf32>
      %37 = arith.addf %34, %36 : vector<8x16x128xf32>
      %cst_38 = arith.constant 0.000000e+00 : f32
      %38 = vector.broadcast %cst_38 : f32 to vector<8x16x128xf32>
      %39 = arith.maximumf %37, %38 : vector<8x16x128xf32>
      %cst_39 = arith.constant 0.000000e+00 : bf16
      %40 = vector.broadcast %cst_39 : bf16 to vector<8x1x128xbf16>
      %41 = arith.truncf %39 : vector<8x16x128xf32> to vector<8x16x128xbf16>
      %cst_40 = arith.constant 0.000000e+00 : bf16
      %42 = vector.broadcast %cst_40 : bf16 to vector<8x7x128xbf16>
      %43 = tpu.concatenate %40, %41, %42 in 1 : vector<8x1x128xbf16>, vector<8x16x128xbf16>, vector<8x7x128xbf16> -> vector<8x24x128xbf16>
      %c1_i32_41 = arith.constant 1 : i32
      %44 = arith.addi %13, %c1_i32_41 : i32
      %45 = arith.index_cast %44 : i32 to index
      %c0_42 = arith.constant 0 : index
      %c0_43 = arith.constant 0 : index
      %46 = vector.load %arg8[%45, %c0_42, %c0_43] : memref<18x24x128xbf16, #tpu.memory_space<vmem>>, vector<8x24x128xbf16>
      tpu.vector_store %arg8[%45, %c0_42, %c0_43], %43 {strides = array<i32>} : memref<18x24x128xbf16, #tpu.memory_space<vmem>>, vector<8x24x128xbf16>,
    }
    %c2_i32_17 = arith.constant 2 : i32
    %c0_i32_18 = arith.constant 0 : i32
    %c2_i32_19 = arith.constant 2 : i32
    %10 = arith.addi %c0_i32_18, %c2_i32_19 : i32
    %c1_i32_20 = arith.constant 1 : i32
    scf.for %arg9 = %c0_i32_18 to %10 step %c1_i32_20  : i32 {
      %c1_i32_22 = arith.constant 1 : i32
      %11 = arith.muli %arg9, %c1_i32_22 : i32
      %c0_i32_23 = arith.constant 0 : i32
      %12 = arith.addi %c0_i32_23, %11 : i32
      %c8_i32 = arith.constant 8 : i32
      %13 = arith.muli %12, %c8_i32 : i32
      %c0_24 = arith.constant 0 : index
      %c0_25 = arith.constant 0 : index
      %14 = vector.load %arg5[%c0_24, %c0_25] : memref<1x128xf32, #tpu.memory_space<vmem>>, vector<1x128xf32>
      %15 = vector.shape_cast %14 : vector<1x128xf32> to vector<128xf32>
      %c0_i32_26 = arith.constant 0 : i32
      %16 = arith.addi %13, %c0_i32_26 : i32
      %17 = arith.index_cast %16 : i32 to index
      %c0_27 = arith.constant 0 : index
      %c0_28 = arith.constant 0 : index
      %18 = vector.load %arg8[%17, %c0_27, %c0_28] : memref<18x24x128xbf16, #tpu.memory_space<vmem>>, vector<8x24x128xbf16>
      %c1_i32_29 = arith.constant 1 : i32
      %19 = arith.addi %13, %c1_i32_29 : i32
      %20 = arith.index_cast %19 : i32 to index
      %c0_30 = arith.constant 0 : index
      %c0_31 = arith.constant 0 : index
      %21 = vector.load %arg8[%20, %c0_30, %c0_31] : memref<18x24x128xbf16, #tpu.memory_space<vmem>>, vector<8x24x128xbf16>
      %c2_i32_32 = arith.constant 2 : i32
      %22 = arith.addi %13, %c2_i32_32 : i32
      %23 = arith.index_cast %22 : i32 to index
      %c0_33 = arith.constant 0 : index
      %c0_34 = arith.constant 0 : index
      %24 = vector.load %arg8[%23, %c0_33, %c0_34] : memref<18x24x128xbf16, #tpu.memory_space<vmem>>, vector<8x24x128xbf16>
      %25 = tpu.concatenate %18, %21, %24 in 2 : vector<8x24x128xbf16>, vector<8x24x128xbf16>, vector<8x24x128xbf16> -> vector<8x24x384xbf16>
      %26 = vector.shape_cast %25 : vector<8x24x384xbf16> to vector<192x384xbf16>
      %c0_35 = arith.constant 0 : index
      %c0_36 = arith.constant 0 : index
      %27 = vector.load %arg4[%c0_35, %c0_36] : memref<384x384xbf16, #tpu.memory_space<vmem>>, vector<384x384xbf16>
      %cst_37 = arith.constant dense<0.000000e+00> : vector<192x384xf32>
      %28 = tpu.matmul %26, %27, %cst_37 {dimension_numbers = #tpu.dot_dimension_numbers<[1], [0], [0], [1], [0, 0, 1, 1], [], []>} : vector<192x384xbf16>, vector<384x384xbf16>, vector<192x384xf32> -> vector<192x384xf32>
      %29 = vector.shape_cast %28 : vector<192x384xf32> to vector<8x24x384xf32>
      %30 = vector.extract_strided_slice %29 {offsets = [0, 0, 0], sizes = [8, 16, 128], strides = [1, 1, 1]} : vector<8x24x384xf32> to vector<8x16x128xf32>
      %31 = vector.extract_strided_slice %29 {offsets = [0, 1, 128], sizes = [8, 16, 128], strides = [1, 1, 1]} : vector<8x24x384xf32> to vector<8x16x128xf32>
      %32 = arith.addf %30, %31 : vector<8x16x128xf32>
      %33 = vector.extract_strided_slice %29 {offsets = [0, 2, 256], sizes = [8, 16, 128], strides = [1, 1, 1]} : vector<8x24x384xf32> to vector<8x16x128xf32>
      %34 = arith.addf %32, %33 : vector<8x16x128xf32>
      %35 = vector.shape_cast %15 : vector<128xf32> to vector<1x1x128xf32>
      %36 = vector.broadcast %35 : vector<1x1x128xf32> to vector<8x16x128xf32>
      %37 = arith.addf %34, %36 : vector<8x16x128xf32>
      %cst_38 = arith.constant 0.000000e+00 : f32
      %38 = vector.broadcast %cst_38 : f32 to vector<8x16x128xf32>
      %39 = arith.maximumf %37, %38 : vector<8x16x128xf32>
      %40 = arith.truncf %39 : vector<8x16x128xf32> to vector<8x16x128xbf16>
      %c0_39 = arith.constant 0 : index
      %41 = arith.index_cast %13 : i32 to index
      %c0_40 = arith.constant 0 : index
      %c0_41 = arith.constant 0 : index
      %42 = vector.load %arg6[%c0_39, %41, %c0_40, %c0_41] : memref<1x16x16x128xbf16, #tpu.memory_space<vmem>>, vector<1x8x16x128xbf16>
      %43 = vector.shape_cast %42 : vector<1x8x16x128xbf16> to vector<8x16x128xbf16>
      %44 = vector.shape_cast %40 : vector<8x16x128xbf16> to vector<1x8x16x128xbf16>
      tpu.vector_store %arg6[%c0_39, %41, %c0_40, %c0_41], %44 {strides = array<i32>} : memref<1x16x16x128xbf16, #tpu.memory_space<vmem>>, vector<1x8x16x128xbf16>,
    }
    %c2_i32_21 = arith.constant 2 : i32
    return
  }
  func.func @transform_0(%arg0: i32) -> (i32, i32, i32, i32) {
    %c0_i32 = arith.constant 0 : i32
    %c0_i32_0 = arith.constant 0 : i32
    %c0_i32_1 = arith.constant 0 : i32
    %c0_i32_2 = arith.constant 0 : i32
    return %arg0, %c0_i32, %c0_i32_0, %c0_i32_1 : i32, i32, i32, i32
  }
  func.func @transform_1(%arg0: i32) -> (i32, i32) {
    %c0_i32 = arith.constant 0 : i32
    %c0_i32_0 = arith.constant 0 : i32
    %c0_i32_1 = arith.constant 0 : i32
    return %c0_i32, %c0_i32_0 : i32, i32
  }
  func.func @transform_2(%arg0: i32) -> (i32, i32) {
    %c0_i32 = arith.constant 0 : i32
    %c0_i32_0 = arith.constant 0 : i32
    %c0_i32_1 = arith.constant 0 : i32
    return %c0_i32, %c0_i32_0 : i32, i32
  }
  func.func @transform_3(%arg0: i32) -> (i32, i32) {
    %c0_i32 = arith.constant 0 : i32
    %c0_i32_0 = arith.constant 0 : i32
    %c0_i32_1 = arith.constant 0 : i32
    return %c0_i32, %c0_i32_0 : i32, i32
  }
  func.func @transform_4(%arg0: i32) -> (i32, i32) {
    %c0_i32 = arith.constant 0 : i32
    %c0_i32_0 = arith.constant 0 : i32
    %c0_i32_1 = arith.constant 0 : i32
    return %c0_i32, %c0_i32_0 : i32, i32
  }
  func.func @transform_5(%arg0: i32) -> (i32, i32, i32, i32) {
    %c0_i32 = arith.constant 0 : i32
    %c0_i32_0 = arith.constant 0 : i32
    %c0_i32_1 = arith.constant 0 : i32
    %c0_i32_2 = arith.constant 0 : i32
    return %arg0, %c0_i32, %c0_i32_0, %c0_i32_1 : i32, i32, i32, i32
  }
}

</mosaic_0001>

<llo_original>
// kernel: basic_block_forward.1
$region0: #{basic_block_forward.1}
  #allocation0 [shape = 'u32[]', space=smem, size = 0x4, offset = 0x4, fixed_abs, tag = 'smem constant byte address 0x4 - core index']
  #allocation1 [shape = 'u32[72,128]{1,0:T(1,128)}', space=vmem, size = 0x9000, scoped, tag = 'internal scratch']
  #allocation2 [shape = 'bf16[18,24,128]{2,1,0:T(8,128)(2,1)}', space=vmem, size = 0x1b000, scoped, tag = 'scratch operand']
  #allocation3 [shape = 'bf16[18,24,128]{2,1,0:T(8,128)(2,1)}', space=vmem, size = 0x1b000, scoped, tag = 'scratch operand']
  %s0 = inlined_call_operand.vmem [shape: bf16[2,16,16,4], index: 0, kind: input, shape index: {}]
  %s1 = inlined_call_operand.vmem [shape: bf16[384,384], index: 1, kind: input, shape index: {}]
  %s2 = inlined_call_operand.vmem [shape: f32[1,128], index: 2, kind: input, shape index: {}]
  %s3 = inlined_call_operand.vmem [shape: bf16[384,384], index: 3, kind: input, shape index: {}]
  %s4 = inlined_call_operand.vmem [shape: f32[1,128], index: 4, kind: input, shape index: {}]
  %s5 = inlined_call_operand.vmem [shape: bf16[2,16,16,128], index: 5, kind: output, shape index: {}]
  %s6 = sld [smem:[#allocation0]]
  $region74: #{basic_block_forward.1} parent=0
    _
  %s8 = ssub.s32 1, %s6
  %s9 = scalar_select 0, %s8, %s6
  loop: start=0, step=1, limit=4
  $region2: #{basic_block_forward.1} parent=0 // loop_pre_header
    _
  $region3: #{basic_block_forward.1} parent=0 // loop_header
    %s11 = sphi 0, %s15
    %p12 = scmp.ge.s32.totalorder %s11, 4
    %s21 = sphi 0, %s23
    %s24 = sphi 0, %s21
    %s25 = sphi 0, %s24
    %s41 = sphi 0, %s25
    %s45 = sphi 0, %s45
    %s47 = sphi 0, %s45
    %s48 = sphi 0, %s47
    %s62 = sphi 0, %s48
    %s66 = sphi 0, %s66
    %s68 = sphi 0, %s66
    %s69 = sphi 0, %s68
    %s83 = sphi 0, %s69
    %s87 = sphi 0, %s87
    %s89 = sphi 0, %s87
    %s90 = sphi 0, %s89
    %s104 = sphi 0, %s90
    %s108 = sphi 0, %s108
    %s110 = sphi 0, %s108
    %s111 = sphi 0, %s110
    %s125 = sphi 0, %s111
    %s131 = sphi 0, %s133
    %s134 = sphi 0, %s131
    %s135 = sphi 0, %s134
    %s151 = sphi 0, %s135
  $region4: #{basic_block_forward.1} parent=0 // loop_header_branch
    %14 = sbr.rel (%p12) target = $region8
  $region5: #{basic_block_forward.1} parent=0 // loop_body
    %s16 = ssub.s32 %s11, 1
    %s17 = ssub.s32 %s11, 2
    %s18 = sadd.s32 %s11, 1
    %s19 = ssub.s32 %s11, %s18
    %p20 = scmp.eq.s32.totalorder %s19, 0
    %s22 = sadd.s32 %s21, 1
    %s23 = scalar_select %p20, %s21, %s22
    %p26 = pneg %p20
    %p27 = scmp.eq.s32.totalorder %s11, 1
    %p28 = por %p26, %p27
    %p29 = scmp.ne.s32.totalorder %s21, %s24
    %p30 = scmp.eq.s32.totalorder %s11, 0
    %p31 = por %p29, %p30
    %p32 = scmp.ne.s32.totalorder %s21, %s24
    %p33 = scmp.eq.s32.totalorder %s16, 1
    %p34 = por %p32, %p33
    %p35 = scmp.ne.s32.totalorder %s24, %s25
    %p36 = scmp.eq.s32.totalorder %s16, 0
    %p37 = por %p35, %p36
    %p38 = scmp.ne.s32.totalorder %s24, %s25
    %p39 = scmp.eq.s32.totalorder %s17, 1
    %p40 = por %p38, %p39
    %p42 = scmp.ne.s32.totalorder %s25, %s41
    %p43 = scmp.eq.s32.totalorder %s17, 0
    %p44 = por %p42, %p43
    %s46 = sadd.s32 %s45, 1
    %p49 = scmp.eq.s32.totalorder %s11, 1
    %p50 = scmp.ne.s32.totalorder %s45, %s47
    %p51 = scmp.eq.s32.totalorder %s11, 0
    %p52 = por %p50, %p51
    %p53 = scmp.ne.s32.totalorder %s45, %s47
    %p54 = scmp.eq.s32.totalorder %s16, 1
    %p55 = por %p53, %p54
    %p56 = scmp.ne.s32.totalorder %s47, %s48
    %p57 = scmp.eq.s32.totalorder %s16, 0
    %p58 = por %p56, %p57
    %p59 = scmp.ne.s32.totalorder %s47, %s48
    %p60 = scmp.eq.s32.totalorder %s17, 1
    %p61 = por %p59, %p60
    %p63 = scmp.ne.s32.totalorder %s48, %s62
    %p64 = scmp.eq.s32.totalorder %s17, 0
    %p65 = por %p63, %p64
    %s67 = sadd.s32 %s66, 1
    %p70 = scmp.eq.s32.totalorder %s11, 1
    %p71 = scmp.ne.s32.totalorder %s66, %s68
    %p72 = scmp.eq.s32.totalorder %s11, 0
    %p73 = por %p71, %p72
    %p74 = scmp.ne.s32.totalorder %s66, %s68
    %p75 = scmp.eq.s32.totalorder %s16, 1
    %p76 = por %p74, %p75
    %p77 = scmp.ne.s32.totalorder %s68, %s69
    %p78 = scmp.eq.s32.totalorder %s16, 0
    %p79 = por %p77, %p78
    %p80 = scmp.ne.s32.totalorder %s68, %s69
    %p81 = scmp.eq.s32.totalorder %s17, 1
    %p82 = por %p80, %p81
    %p84 = scmp.ne.s32.totalorder %s69, %s83
    %p85 = scmp.eq.s32.totalorder %s17, 0
    %p86 = por %p84, %p85
    %s88 = sadd.s32 %s87, 1
    %p91 = scmp.eq.s32.totalorder %s11, 1
    %p92 = scmp.ne.s32.totalorder %s87, %s89
    %p93 = scmp.eq.s32.totalorder %s11, 0
    %p94 = por %p92, %p93
    %p95 = scmp.ne.s32.totalorder %s87, %s89
    %p96 = scmp.eq.s32.totalorder %s16, 1
    %p97 = por %p95, %p96
    %p98 = scmp.ne.s32.totalorder %s89, %s90
    %p99 = scmp.eq.s32.totalorder %s16, 0
    %p100 = por %p98, %p99
    %p101 = scmp.ne.s32.totalorder %s89, %s90
    %p102 = scmp.eq.s32.totalorder %s17, 1
    %p103 = por %p101, %p102
    %p105 = scmp.ne.s32.totalorder %s90, %s104
    %p106 = scmp.eq.s32.totalorder %s17, 0
    %p107 = por %p105, %p106
    %s109 = sadd.s32 %s108, 1
    %p112 = scmp.eq.s32.totalorder %s11, 1
    %p113 = scmp.ne.s32.totalorder %s108, %s110
    %p114 = scmp.eq.s32.totalorder %s11, 0
    %p115 = por %p113, %p114
    %p116 = scmp.ne.s32.totalorder %s108, %s110
    %p117 = scmp.eq.s32.totalorder %s16, 1
    %p118 = por %p116, %p117
    %p119 = scmp.ne.s32.totalorder %s110, %s111
    %p120 = scmp.eq.s32.totalorder %s16, 0
    %p121 = por %p119, %p120
    %p122 = scmp.ne.s32.totalorder %s110, %s111
    %p123 = scmp.eq.s32.totalorder %s17, 1
    %p124 = por %p122, %p123
    %p126 = scmp.ne.s32.totalorder %s111, %s125
    %p127 = scmp.eq.s32.totalorder %s17, 0
    %p128 = por %p126, %p127
    %s129 = ssub.s32 %s11, %s18
    %p130 = scmp.eq.s32.totalorder %s129, 0
    %s132 = sadd.s32 %s131, 1
    %s133 = scalar_select %p130, %s131, %s132
    %p136 = pneg %p130
    %p137 = scmp.eq.s32.totalorder %s11, 1
    %p138 = por %p136, %p137
    %p139 = scmp.ne.s32.totalorder %s131, %s134
    %p140 = scmp.eq.s32.totalorder %s11, 0
    %p141 = por %p139, %p140
    %p142 = scmp.ne.s32.totalorder %s131, %s134
    %p143 = scmp.eq.s32.totalorder %s16, 1
    %p144 = por %p142, %p143
    %p145 = scmp.ne.s32.totalorder %s134, %s135
    %p146 = scmp.eq.s32.totalorder %s16, 0
    %p147 = por %p145, %p146
    %p148 = scmp.ne.s32.totalorder %s134, %s135
    %p149 = scmp.eq.s32.totalorder %s17, 1
    %p150 = por %p148, %p149
    %p152 = scmp.ne.s32.totalorder %s135, %s151
    %p153 = scmp.eq.s32.totalorder %s17, 0
    %p154 = por %p152, %p153
    %p155 = scmp.le.s32.totalorder 1, %s11
    %p156 = scmp.lt.s32.totalorder %s11, 3
    %p157 = pnand %p155, %p156
    %p158 = pneg %p157
    // Predicated region
    $region9: #{basic_block_forward.1} parent=5 // pred_check
      _
    $region10: #{basic_block_forward.1} parent=5 // pred_check_branch
      %160 = sbr.rel (%p157) target = $region12
    $region11: #{basic_block_forward.1} parent=5 // pred_region
      %s161 = ssub.s32 %s11, 1
      // Predicated region
      $region13: #{basic_block_forward.1} parent=11 // pred_check
        %p162 = pneg %p58
      $region14: #{basic_block_forward.1} parent=11 // pred_check_branch
        %164 = sbr.rel (%p162) target = $region16
      $region15: #{basic_block_forward.1} parent=11 // pred_region
        _
      $region16: #{basic_block_forward.1} parent=11 // pred_fallthru
        _
      // Predicated region
      $region17: #{basic_block_forward.1} parent=11 // pred_check
        %p165 = pneg %p79
      $region18: #{basic_block_forward.1} parent=11 // pred_check_branch
        %167 = sbr.rel (%p165) target = $region20
      $region19: #{basic_block_forward.1} parent=11 // pred_region
        _
      $region20: #{basic_block_forward.1} parent=11 // pred_fallthru
        _
      // Predicated region
      $region21: #{basic_block_forward.1} parent=11 // pred_check
        %p168 = pneg %p100
      $region22: #{basic_block_forward.1} parent=11 // pred_check_branch
        %170 = sbr.rel (%p168) target = $region24
      $region23: #{basic_block_forward.1} parent=11 // pred_region
        _
      $region24: #{basic_block_forward.1} parent=11 // pred_fallthru
        _
      // Predicated region
      $region25: #{basic_block_forward.1} parent=11 // pred_check
        %p171 = pneg %p121
      $region26: #{basic_block_forward.1} parent=11 // pred_check_branch
        %173 = sbr.rel (%p171) target = $region28
      $region27: #{basic_block_forward.1} parent=11 // pred_region
        _
      $region28: #{basic_block_forward.1} parent=11 // pred_fallthru
        _
    $region12: #{basic_block_forward.1} parent=5 // pred_fallthru
      _
    %p174 = scmp.lt.s32.totalorder %s11, 2
    // Predicated region
    $region29: #{basic_block_forward.1} parent=5 // pred_check
      %p175 = pneg %p174
    $region30: #{basic_block_forward.1} parent=5 // pred_check_branch
      %177 = sbr.rel (%p175) target = $region32
    $region31: #{basic_block_forward.1} parent=5 // pred_region
      // Predicated region
      $region33: #{basic_block_forward.1} parent=31 // pred_check
        %p178 = pneg %p31
      $region34: #{basic_block_forward.1} parent=31 // pred_check_branch
        %180 = sbr.rel (%p178) target = $region36
      $region35: #{basic_block_forward.1} parent=31 // pred_region
        %p181 = scmp.lt.s32.totalorder %s11, 1
        %s182 = scalar_select %p181, %s11, 1
        %s183 = smul.addr %s182, 32
        %s184 = smul.addr %s183, 4
        %s185 = scalar_lea.vmem %s0, %s184
      $region36: #{basic_block_forward.1} parent=31 // pred_fallthru
        _
    $region32: #{basic_block_forward.1} parent=5 // pred_fallthru
      _
    %p186 = scmp.le.s32.totalorder 1, %s11
    %p187 = scmp.lt.s32.totalorder %s11, 3
    %p188 = pnand %p186, %p187
    %p189 = pneg %p188
    // Predicated region
    $region37: #{basic_block_forward.1} parent=5 // pred_check
      _
    $region38: #{basic_block_forward.1} parent=5 // pred_check_branch
      %191 = sbr.rel (%p188) target = $region40
    $region39: #{basic_block_forward.1} parent=5 // pred_region
      %s192 = ssub.s32 %s11, 1
      %p193 = scmp.lt.s32.totalorder %s16, 1
      %s194 = scalar_select %p193, %s16, 1
      %s195 = smul.addr %s194, 32
      %s196 = smul.addr %s195, 4
      %s197 = scalar_lea.vmem %s0, %s196
      %p198 = pneg %p37
      %p199 = pneg %p34
      %p200 = pneg %p58
      %p201 = pneg %p55
      %p202 = pneg %p79
      %p203 = pneg %p76
      %p204 = pneg %p100
      %p205 = pneg %p97
      %p206 = pneg %p121
      %p207 = pneg %p118
      %p208 = pneg %p147
      %p209 = pneg %p144
      %p210 = scmp.lt.s32.totalorder %s16, 1
      %s211 = scalar_select %p210, %s16, 1
      %s212 = smul.addr %s211, 32
      %s213 = smul.addr %s212, 4
      %s214 = scalar_lea.vmem %s5, %s213
      %p215 = scmp.lt.s32.totalorder %s16, 1
      %s216 = scalar_select %p215, %s16, 1
      %s217 = smul.addr %s216, 32
      %s218 = smul.addr %s217, 4
      %s219 = scalar_lea.vmem %s0, %s218
      %p220 = scmp.lt.s32.totalorder %s16, 1
      %s221 = scalar_select %p220, %s16, 1
      %s222 = smul.addr %s221, 32
      %s223 = smul.addr %s222, 4
      %s224 = scalar_lea.vmem %s5, %s223
      %226 = vst [vmem:[#allocation2] sm:$0xf] 0
      %227 = vst [vmem:[#allocation2 + $0x4] sm:$0xf] 0
      %228 = vst [vmem:[#allocation2 + $0x8] sm:$0xf] 0
      %s229 = scalar_lea.vmem [#allocation2], 204
      %230 = vst [vmem:[%s229] sm:$0xf] 0
      %231 = vst [vmem:[%s229 + $0x4] sm:$0xf] 0
      %232 = vst [vmem:[%s229 + $0x8] sm:$0xf] 0
      %233 = vst [vmem:[#allocation3] sm:$0xf] 0
      %234 = vst [vmem:[#allocation3 + $0x4] sm:$0xf] 0
      %235 = vst [vmem:[#allocation3 + $0x8] sm:$0xf] 0
      %s236 = scalar_lea.vmem [#allocation3], 204
      %237 = vst [vmem:[%s236] sm:$0xf] 0
      %238 = vst [vmem:[%s236 + $0x4] sm:$0xf] 0
      %239 = vst [vmem:[%s236 + $0x8] sm:$0xf] 0
      loop: start=0, step=1, limit=2
      $region41: #{basic_block_forward.1} parent=39 // loop_pre_header
        _
      $region42: #{basic_block_forward.1} parent=39 // loop_header
        %s241 = sphi 0, %s245
        %p242 = scmp.ge.s32.totalorder %s241, 2
      $region43: #{basic_block_forward.1} parent=39 // loop_header_branch
        %244 = sbr.rel (%p242) target = $region47
      $region44: #{basic_block_forward.1} parent=39 // loop_body
        %s246 = smul.u32 %s241, 8
        %s247 = smul.u32 %s246, 2
        %s248 = smul.addr %s247, 4
        %s249 = scalar_lea.vmem %s219, %s248
        %v250 = vld [vmem:[%s249] sm:$0xf]
        %v251 = vld [vmem:[%s249 + $0x4] sm:$0xf]
        %v252 = vld [vmem:[%s249 + $0x8] sm:$0xf]
        %v253 = vld [vmem:[%s249 + $0xc] sm:$0xf]
        %v254 = vld [vmem:[%s249 + $0x10] sm:$0xf]
        %v255 = vld [vmem:[%s249 + $0x14] sm:$0xf]
        %v256 = vld [vmem:[%s249 + $0x18] sm:$0xf]
        %v257 = vld [vmem:[%s249 + $0x1c] sm:$0xf]
        %v258 = vld [vmem:[%s249 + $0x20] sm:$0xf]
        %v259 = vld [vmem:[%s249 + $0x24] sm:$0xf]
        %v260 = vld [vmem:[%s249 + $0x28] sm:$0xf]
        %v261 = vld [vmem:[%s249 + $0x2c] sm:$0xf]
        %v262 = vld [vmem:[%s249 + $0x30] sm:$0xf]
        %v263 = vld [vmem:[%s249 + $0x34] sm:$0xf]
        %v264 = vld [vmem:[%s249 + $0x38] sm:$0xf]
        %v265 = vld [vmem:[%s249 + $0x3c] sm:$0xf]
        %v282 = vunpack.c.l.b16 %v250
        %v283 = vunpack.c.l.b16 %v251
        %v284 = vunpack.c.l.b16 %v252
        %v285 = vunpack.c.l.b16 %v253
        %v286 = vunpack.c.l.b16 %v254
        %v287 = vunpack.c.l.b16 %v255
        %v288 = vunpack.c.l.b16 %v256
        %v289 = vunpack.c.l.b16 %v257
        %v290 = vunpack.c.l.b16 %v258
        %v291 = vunpack.c.l.b16 %v259
        %v292 = vunpack.c.l.b16 %v260
        %v293 = vunpack.c.l.b16 %v261
        %v294 = vunpack.c.l.b16 %v262
        %v295 = vunpack.c.l.b16 %v263
        %v296 = vunpack.c.l.b16 %v264
        %v297 = vunpack.c.l.b16 %v265
        %v298 = vpack.c.b16 %v283, %v282
        %v299 = vpack.c.b16 %v285, %v284
        %v300 = vpack.c.b16 %v287, %v286
        %v301 = vpack.c.b16 %v289, %v288
        %v302 = vpack.c.b16 %v291, %v290
        %v303 = vpack.c.b16 %v293, %v292
        %v304 = vpack.c.b16 %v295, %v294
        %v305 = vpack.c.b16 %v297, %v296
        %vm306 = vcmask 31744
        %v309 = vsel %vm306, %v298, 0
        %v311 = vsel %vm306, %v299, 0
        %v313 = vsel %vm306, %v300, 0
        %v315 = vsel %vm306, %v301, 0
        %v317 = vsel %vm306, %v302, 0
        %v319 = vsel %vm306, %v303, 0
        %v321 = vsel %vm306, %v304, 0
        %v323 = vsel %vm306, %v305, 0
        %v324 = vshrl.u32 %v309, 16
        %v326 = vrot.slane %v324, 7
        %v327 = vshll.u32 %v309, 16
        %v329 = vor.u32 %v326, %v327
        %v330 = vshrl.u32 %v311, 16
        %v332 = vrot.slane %v330, 7
        %v333 = vshll.u32 %v311, 16
        %v335 = vor.u32 %v332, %v333
        %v336 = vshrl.u32 %v313, 16
        %v338 = vrot.slane %v336, 7
        %v339 = vshll.u32 %v313, 16
        %v341 = vor.u32 %v338, %v339
        %v342 = vshrl.u32 %v315, 16
        %v344 = vrot.slane %v342, 7
        %v345 = vshll.u32 %v315, 16
        %v347 = vor.u32 %v344, %v345
        %v348 = vshrl.u32 %v317, 16
        %v350 = vrot.slane %v348, 7
        %v351 = vshll.u32 %v317, 16
        %v353 = vor.u32 %v350, %v351
        %v354 = vshrl.u32 %v319, 16
        %v356 = vrot.slane %v354, 7
        %v357 = vshll.u32 %v319, 16
        %v359 = vor.u32 %v356, %v357
        %v360 = vshrl.u32 %v321, 16
        %v362 = vrot.slane %v360, 7
        %v363 = vshll.u32 %v321, 16
        %v365 = vor.u32 %v362, %v363
        %v366 = vshrl.u32 %v323, 16
        %v368 = vrot.slane %v366, 7
        %v369 = vshll.u32 %v323, 16
        %v371 = vor.u32 %v368, %v369
        %vm388 = vcmask 1040384
        %vm389 = vsmask.f32 256
        %vm390 = vmand %vm388, %vm389
        %v391 = vsel %vm390, 0, %v329
        %v392 = vsel %vm390, 0, %v335
        %v393 = vsel %vm390, 0, %v341
        %v394 = vsel %vm390, 0, %v347
        %v395 = vsel %vm390, 0, %v353
        %v396 = vsel %vm390, 0, %v359
        %v397 = vsel %vm390, 0, %v365
        %v398 = vsel %vm390, 0, %v371
        %v399 = vsel %vm390, %v326, 0
        %v400 = vsel %vm390, %v332, 0
        %v401 = vsel %vm390, %v338, 0
        %v402 = vsel %vm390, %v344, 0
        %v403 = vsel %vm390, %v350, 0
        %v404 = vsel %vm390, %v356, 0
        %v405 = vsel %vm390, %v362, 0
        %v406 = vsel %vm390, %v368, 0
        %s407 = sadd.s32 %s246, 1
        %v424 = vunpack.c.l.b16 %v391
        %v425 = vunpack.c.h.b16 %v391
        %v426 = vunpack.c.l.b16 %v399
        %v427 = vunpack.c.l.b16 %v392
        %v428 = vunpack.c.h.b16 %v392
        %v429 = vunpack.c.l.b16 %v400
        %v430 = vunpack.c.l.b16 %v393
        %v431 = vunpack.c.h.b16 %v393
        %v432 = vunpack.c.l.b16 %v401
        %v433 = vunpack.c.l.b16 %v394
        %v434 = vunpack.c.h.b16 %v394
        %v435 = vunpack.c.l.b16 %v402
        %v436 = vunpack.c.l.b16 %v395
        %v437 = vunpack.c.h.b16 %v395
        %v438 = vunpack.c.l.b16 %v403
        %v439 = vunpack.c.l.b16 %v396
        %v440 = vunpack.c.h.b16 %v396
        %v441 = vunpack.c.l.b16 %v404
        %v442 = vunpack.c.l.b16 %v397
        %v443 = vunpack.c.h.b16 %v397
        %v444 = vunpack.c.l.b16 %v405
        %v445 = vunpack.c.l.b16 %v398
        %v446 = vunpack.c.h.b16 %v398
        %v447 = vunpack.c.l.b16 %v406
        %v448 = vpack.c.b16 %v424, %v424
        %v449 = vpack.c.b16 %v425, %v425
        %v450 = vpack.c.b16 %v426, %v426
        %v451 = vpack.c.b16 %v427, %v427
        %v452 = vpack.c.b16 %v428, %v428
        %v453 = vpack.c.b16 %v429, %v429
        %v454 = vpack.c.b16 %v430, %v430
        %v455 = vpack.c.b16 %v431, %v431
        %v456 = vpack.c.b16 %v432, %v432
        %v457 = vpack.c.b16 %v433, %v433
        %v458 = vpack.c.b16 %v434, %v434
        %v459 = vpack.c.b16 %v435, %v435
        %v460 = vpack.c.b16 %v436, %v436
        %v461 = vpack.c.b16 %v437, %v437
        %v462 = vpack.c.b16 %v438, %v438
        %v463 = vpack.c.b16 %v439, %v439
        %v464 = vpack.c.b16 %v440, %v440
        %v465 = vpack.c.b16 %v441, %v441
        %v466 = vpack.c.b16 %v442, %v442
        %v467 = vpack.c.b16 %v443, %v443
        %v468 = vpack.c.b16 %v444, %v444
        %v469 = vpack.c.b16 %v445, %v445
        %v470 = vpack.c.b16 %v446, %v446
        %v471 = vpack.c.b16 %v447, %v447
        %s496 = smul.u32 %s407, 3
        %s497 = smul.addr %s496, 4
        %s498 = scalar_lea.vmem [#allocation2], %s497
        %499 = vst [vmem:[%s498] sm:$0xf] %v448
        %500 = vst [vmem:[%s498 + $0x4] sm:$0xf] %v449
        %501 = vst [vmem:[%s498 + $0x8] sm:$0xf] %v450
        %502 = vst [vmem:[%s498 + $0xc] sm:$0xf] %v451
        %503 = vst [vmem:[%s498 + $0x10] sm:$0xf] %v452
        %504 = vst [vmem:[%s498 + $0x14] sm:$0xf] %v453
        %505 = vst [vmem:[%s498 + $0x18] sm:$0xf] %v454
        %506 = vst [vmem:[%s498 + $0x1c] sm:$0xf] %v455
        %507 = vst [vmem:[%s498 + $0x20] sm:$0xf] %v456
        %508 = vst [vmem:[%s498 + $0x24] sm:$0xf] %v457
        %509 = vst [vmem:[%s498 + $0x28] sm:$0xf] %v458
        %510 = vst [vmem:[%s498 + $0x2c] sm:$0xf] %v459
        %511 = vst [vmem:[%s498 + $0x30] sm:$0xf] %v460
        %512 = vst [vmem:[%s498 + $0x34] sm:$0xf] %v461
        %513 = vst [vmem:[%s498 + $0x38] sm:$0xf] %v462
        %514 = vst [vmem:[%s498 + $0x3c] sm:$0xf] %v463
        %515 = vst [vmem:[%s498 + $0x40] sm:$0xf] %v464
        %516 = vst [vmem:[%s498 + $0x44] sm:$0xf] %v465
        %517 = vst [vmem:[%s498 + $0x48] sm:$0xf] %v466
        %518 = vst [vmem:[%s498 + $0x4c] sm:$0xf] %v467
        %519 = vst [vmem:[%s498 + $0x50] sm:$0xf] %v468
        %520 = vst [vmem:[%s498 + $0x54] sm:$0xf] %v469
        %521 = vst [vmem:[%s498 + $0x58] sm:$0xf] %v470
        %522 = vst [vmem:[%s498 + $0x5c] sm:$0xf] %v471
      $region45: #{basic_block_forward.1} parent=39 // loop_footer
        %s245 = sadd.s32 1, %s241
      $region46: #{basic_block_forward.1} parent=39 // loop_footer_branch
        %240 = sbr.rel target = $region42
      $region47: #{basic_block_forward.1} parent=39 // loop_exit
        _
      loop: start=0, step=1, limit=2
      $region48: #{basic_block_forward.1} parent=39 // loop_pre_header
        _
      $region49: #{basic_block_forward.1} parent=39 // loop_header
        %s524 = sphi 0, %s528
        %p525 = scmp.ge.s32.totalorder %s524, 2
      $region50: #{basic_block_forward.1} parent=39 // loop_header_branch
        %527 = sbr.rel (%p525) target = $region54
      $region51: #{basic_block_forward.1} parent=39 // loop_body
        %s529 = smul.u32 %s524, 8
        %v530 = vld [vmem:[%s2] sm:$0x1]
        %s531 = smul.u32 %s529, 3
        %s532 = smul.addr %s531, 4
        %s533 = scalar_lea.vmem [#allocation2], %s532
        %v534 = vld [vmem:[%s533] sm:$0xf]
        %v535 = vld [vmem:[%s533 + $0x4] sm:$0xf]
        %v536 = vld [vmem:[%s533 + $0x8] sm:$0xf]
        %v537 = vld [vmem:[%s533 + $0xc] sm:$0xf]
        %v538 = vld [vmem:[%s533 + $0x10] sm:$0xf]
        %v539 = vld [vmem:[%s533 + $0x14] sm:$0xf]
        %v540 = vld [vmem:[%s533 + $0x18] sm:$0xf]
        %v541 = vld [vmem:[%s533 + $0x1c] sm:$0xf]
        %v542 = vld [vmem:[%s533 + $0x20] sm:$0xf]
        %v543 = vld [vmem:[%s533 + $0x24] sm:$0xf]
        %v544 = vld [vmem:[%s533 + $0x28] sm:$0xf]
        %v545 = vld [vmem:[%s533 + $0x2c] sm:$0xf]
        %v546 = vld [vmem:[%s533 + $0x30] sm:$0xf]
        %v547 = vld [vmem:[%s533 + $0x34] sm:$0xf]
        %v548 = vld [vmem:[%s533 + $0x38] sm:$0xf]
        %v549 = vld [vmem:[%s533 + $0x3c] sm:$0xf]
        %v550 = vld [vmem:[%s533 + $0x40] sm:$0xf]
        %v551 = vld [vmem:[%s533 + $0x44] sm:$0xf]
        %v552 = vld [vmem:[%s533 + $0x48] sm:$0xf]
        %v553 = vld [vmem:[%s533 + $0x4c] sm:$0xf]
        %v554 = vld [vmem:[%s533 + $0x50] sm:$0xf]
        %v555 = vld [vmem:[%s533 + $0x54] sm:$0xf]
        %v556 = vld [vmem:[%s533 + $0x58] sm:$0xf]
        %v557 = vld [vmem:[%s533 + $0x5c] sm:$0xf]
        %s558 = sadd.s32 %s529, 1
        %s559 = smul.u32 %s558, 3
        %s560 = smul.addr %s559, 4
        %s561 = scalar_lea.vmem [#allocation2], %s560
        %v562 = vld [vmem:[%s561] sm:$0xf]
        %v563 = vld [vmem:[%s561 + $0x4] sm:$0xf]
        %v564 = vld [vmem:[%s561 + $0x8] sm:$0xf]
        %v565 = vld [vmem:[%s561 + $0xc] sm:$0xf]
        %v566 = vld [vmem:[%s561 + $0x10] sm:$0xf]
        %v567 = vld [vmem:[%s561 + $0x14] sm:$0xf]
        %v568 = vld [vmem:[%s561 + $0x18] sm:$0xf]
        %v569 = vld [vmem:[%s561 + $0x1c] sm:$0xf]
        %v570 = vld [vmem:[%s561 + $0x20] sm:$0xf]
        %v571 = vld [vmem:[%s561 + $0x24] sm:$0xf]
        %v572 = vld [vmem:[%s561 + $0x28] sm:$0xf]
        %v573 = vld [vmem:[%s561 + $0x2c] sm:$0xf]
        %v574 = vld [vmem:[%s561 + $0x30] sm:$0xf]
        %v575 = vld [vmem:[%s561 + $0x34] sm:$0xf]
        %v576 = vld [vmem:[%s561 + $0x38] sm:$0xf]
        %v577 = vld [vmem:[%s561 + $0x3c] sm:$0xf]
        %v578 = vld [vmem:[%s561 + $0x40] sm:$0xf]
        %v579 = vld [vmem:[%s561 + $0x44] sm:$0xf]
        %v580 = vld [vmem:[%s561 + $0x48] sm:$0xf]
        %v581 = vld [vmem:[%s561 + $0x4c] sm:$0xf]
        %v582 = vld [vmem:[%s561 + $0x50] sm:$0xf]
        %v583 = vld [vmem:[%s561 + $0x54] sm:$0xf]
        %v584 = vld [vmem:[%s561 + $0x58] sm:$0xf]
        %v585 = vld [vmem:[%s561 + $0x5c] sm:$0xf]
        %s586 = sadd.s32 %s529, 2
        %s587 = smul.u32 %s586, 3
        %s588 = smul.addr %s587, 4
        %s589 = scalar_lea.vmem [#allocation2], %s588
        %v590 = vld [vmem:[%s589] sm:$0xf]
        %v591 = vld [vmem:[%s589 + $0x4] sm:$0xf]
        %v592 = vld [vmem:[%s589 + $0x8] sm:$0xf]
        %v593 = vld [vmem:[%s589 + $0xc] sm:$0xf]
        %v594 = vld [vmem:[%s589 + $0x10] sm:$0xf]
        %v595 = vld [vmem:[%s589 + $0x14] sm:$0xf]
        %v596 = vld [vmem:[%s589 + $0x18] sm:$0xf]
        %v597 = vld [vmem:[%s589 + $0x1c] sm:$0xf]
        %v598 = vld [vmem:[%s589 + $0x20] sm:$0xf]
        %v599 = vld [vmem:[%s589 + $0x24] sm:$0xf]
        %v600 = vld [vmem:[%s589 + $0x28] sm:$0xf]
        %v601 = vld [vmem:[%s589 + $0x2c] sm:$0xf]
        %v602 = vld [vmem:[%s589 + $0x30] sm:$0xf]
        %v603 = vld [vmem:[%s589 + $0x34] sm:$0xf]
        %v604 = vld [vmem:[%s589 + $0x38] sm:$0xf]
        %v605 = vld [vmem:[%s589 + $0x3c] sm:$0xf]
        %v606 = vld [vmem:[%s589 + $0x40] sm:$0xf]
        %v607 = vld [vmem:[%s589 + $0x44] sm:$0xf]
        %v608 = vld [vmem:[%s589 + $0x48] sm:$0xf]
        %v609 = vld [vmem:[%s589 + $0x4c] sm:$0xf]
        %v610 = vld [vmem:[%s589 + $0x50] sm:$0xf]
        %v611 = vld [vmem:[%s589 + $0x54] sm:$0xf]
        %v612 = vld [vmem:[%s589 + $0x58] sm:$0xf]
        %v613 = vld [vmem:[%s589 + $0x5c] sm:$0xf]
        %v638 = vunpack.c.l.b16 %v534
        %v639 = vunpack.c.l.b16 %v535
        %v640 = vunpack.c.l.b16 %v536
        %v641 = vunpack.c.l.b16 %v537
        %v642 = vunpack.c.l.b16 %v538
        %v643 = vunpack.c.l.b16 %v539
        %v644 = vunpack.c.l.b16 %v540
        %v645 = vunpack.c.l.b16 %v541
        %v646 = vunpack.c.l.b16 %v542
        %v647 = vunpack.c.l.b16 %v543
        %v648 = vunpack.c.l.b16 %v544
        %v649 = vunpack.c.l.b16 %v545
        %v650 = vunpack.c.l.b16 %v546
        %v651 = vunpack.c.l.b16 %v547
        %v652 = vunpack.c.l.b16 %v548
        %v653 = vunpack.c.l.b16 %v549
        %v654 = vunpack.c.l.b16 %v550
        %v655 = vunpack.c.l.b16 %v551
        %v656 = vunpack.c.l.b16 %v552
        %v657 = vunpack.c.l.b16 %v553
        %v658 = vunpack.c.l.b16 %v554
        %v659 = vunpack.c.l.b16 %v555
        %v660 = vunpack.c.l.b16 %v556
        %v661 = vunpack.c.l.b16 %v557
        %v686 = vunpack.c.l.b16 %v562
        %v687 = vunpack.c.l.b16 %v563
        %v688 = vunpack.c.l.b16 %v564
        %v689 = vunpack.c.l.b16 %v565
        %v690 = vunpack.c.l.b16 %v566
        %v691 = vunpack.c.l.b16 %v567
        %v692 = vunpack.c.l.b16 %v568
        %v693 = vunpack.c.l.b16 %v569
        %v694 = vunpack.c.l.b16 %v570
        %v695 = vunpack.c.l.b16 %v571
        %v696 = vunpack.c.l.b16 %v572
        %v697 = vunpack.c.l.b16 %v573
        %v698 = vunpack.c.l.b16 %v574
        %v699 = vunpack.c.l.b16 %v575
        %v700 = vunpack.c.l.b16 %v576
        %v701 = vunpack.c.l.b16 %v577
        %v702 = vunpack.c.l.b16 %v578
        %v703 = vunpack.c.l.b16 %v579
        %v704 = vunpack.c.l.b16 %v580
        %v705 = vunpack.c.l.b16 %v581
        %v706 = vunpack.c.l.b16 %v582
        %v707 = vunpack.c.l.b16 %v583
        %v708 = vunpack.c.l.b16 %v584
        %v709 = vunpack.c.l.b16 %v585
        %v734 = vunpack.c.l.b16 %v590
        %v735 = vunpack.c.l.b16 %v591
        %v736 = vunpack.c.l.b16 %v592
        %v737 = vunpack.c.l.b16 %v593
        %v738 = vunpack.c.l.b16 %v594
        %v739 = vunpack.c.l.b16 %v595
        %v740 = vunpack.c.l.b16 %v596
        %v741 = vunpack.c.l.b16 %v597
        %v742 = vunpack.c.l.b16 %v598
        %v743 = vunpack.c.l.b16 %v599
        %v744 = vunpack.c.l.b16 %v600
        %v745 = vunpack.c.l.b16 %v601
        %v746 = vunpack.c.l.b16 %v602
        %v747 = vunpack.c.l.b16 %v603
        %v748 = vunpack.c.l.b16 %v604
        %v749 = vunpack.c.l.b16 %v605
        %v750 = vunpack.c.l.b16 %v606
        %v751 = vunpack.c.l.b16 %v607
        %v752 = vunpack.c.l.b16 %v608
        %v753 = vunpack.c.l.b16 %v609
        %v754 = vunpack.c.l.b16 %v610
        %v755 = vunpack.c.l.b16 %v611
        %v756 = vunpack.c.l.b16 %v612
        %v757 = vunpack.c.l.b16 %v613
        %v758 = vld [vmem:[%s1] sm:$0xff]
        %v759 = vld [vmem:[%s1 + $0x8] sm:$0xf]
        %v760 = vld [vmem:[%s1 + $0xc] sm:$0xff]
        %v761 = vld [vmem:[%s1 + $0x14] sm:$0xf]
        %v762 = vld [vmem:[%s1 + $0x18] sm:$0xff]
        %v763 = vld [vmem:[%s1 + $0x20] sm:$0xf]
        %v764 = vld [vmem:[%s1 + $0x24] sm:$0xff]
        %v765 = vld [vmem:[%s1 + $0x2c] sm:$0xf]
        %v766 = vld [vmem:[%s1 + $0x30] sm:$0xff]
        %v767 = vld [vmem:[%s1 + $0x38] sm:$0xf]
        %v768 = vld [vmem:[%s1 + $0x3c] sm:$0xff]
        %v769 = vld [vmem:[%s1 + $0x44] sm:$0xf]
        %v770 = vld [vmem:[%s1 + $0x48] sm:$0xff]
        %v771 = vld [vmem:[%s1 + $0x50] sm:$0xf]
        %v772 = vld [vmem:[%s1 + $0x54] sm:$0xff]
        %v773 = vld [vmem:[%s1 + $0x5c] sm:$0xf]
        %v774 = vld [vmem:[%s1 + $0x60] sm:$0xff]
        %v775 = vld [vmem:[%s1 + $0x68] sm:$0xf]
        %v776 = vld [vmem:[%s1 + $0x6c] sm:$0xff]
        %v777 = vld [vmem:[%s1 + $0x74] sm:$0xf]
        %v778 = vld [vmem:[%s1 + $0x78] sm:$0xff]
        %v779 = vld [vmem:[%s1 + $0x80] sm:$0xf]
        %v780 = vld [vmem:[%s1 + $0x84] sm:$0xff]
        %v781 = vld [vmem:[%s1 + $0x8c] sm:$0xf]
        %v782 = vld [vmem:[%s1 + $0x90] sm:$0xff]
        %v783 = vld [vmem:[%s1 + $0x98] sm:$0xf]
        %v784 = vld [vmem:[%s1 + $0x9c] sm:$0xff]
        %v785 = vld [vmem:[%s1 + $0xa4] sm:$0xf]
        %v786 = vld [vmem:[%s1 + $0xa8] sm:$0xff]
        %v787 = vld [vmem:[%s1 + $0xb0] sm:$0xf]
        %v788 = vld [vmem:[%s1 + $0xb4] sm:$0xff]
        %v789 = vld [vmem:[%s1 + $0xbc] sm:$0xf]
        %v790 = vld [vmem:[%s1 + $0xc0] sm:$0xff]
        %v791 = vld [vmem:[%s1 + $0xc8] sm:$0xf]
        %v792 = vld [vmem:[%s1 + $0xcc] sm:$0xff]
        %v793 = vld [vmem:[%s1 + $0xd4] sm:$0xf]
        %v794 = vld [vmem:[%s1 + $0xd8] sm:$0xff]
        %v795 = vld [vmem:[%s1 + $0xe0] sm:$0xf]
        %v796 = vld [vmem:[%s1 + $0xe4] sm:$0xff]
        %v797 = vld [vmem:[%s1 + $0xec] sm:$0xf]
        %v798 = vld [vmem:[%s1 + $0xf0] sm:$0xff]
        %v799 = vld [vmem:[%s1 + $0xf8] sm:$0xf]
        %v800 = vld [vmem:[%s1 + $0xfc] sm:$0xff]
        %v801 = vld [vmem:[%s1 + $0x104] sm:$0xf]
        %v802 = vld [vmem:[%s1 + $0x108] sm:$0xff]
        %v803 = vld [vmem:[%s1 + $0x110] sm:$0xf]
        %v804 = vld [vmem:[%s1 + $0x114] sm:$0xff]
        %v805 = vld [vmem:[%s1 + $0x11c] sm:$0xf]
        %v806 = vld [vmem:[%s1 + $0x120] sm:$0xff]
        %v807 = vld [vmem:[%s1 + $0x128] sm:$0xf]
        %v808 = vld [vmem:[%s1 + $0x12c] sm:$0xff]
        %v809 = vld [vmem:[%s1 + $0x134] sm:$0xf]
        %v810 = vld [vmem:[%s1 + $0x138] sm:$0xff]
        %v811 = vld [vmem:[%s1 + $0x140] sm:$0xf]
        %v812 = vld [vmem:[%s1 + $0x144] sm:$0xff]
        %v813 = vld [vmem:[%s1 + $0x14c] sm:$0xf]
        %v814 = vld [vmem:[%s1 + $0x150] sm:$0xff]
        %v815 = vld [vmem:[%s1 + $0x158] sm:$0xf]
        %v816 = vld [vmem:[%s1 + $0x15c] sm:$0xff]
        %v817 = vld [vmem:[%s1 + $0x164] sm:$0xf]
        %v818 = vld [vmem:[%s1 + $0x168] sm:$0xff]
        %v819 = vld [vmem:[%s1 + $0x170] sm:$0xf]
        %v820 = vld [vmem:[%s1 + $0x174] sm:$0xff]
        %v821 = vld [vmem:[%s1 + $0x17c] sm:$0xf]
        %v822 = vld [vmem:[%s1 + $0x180] sm:$0xff]
        %v823 = vld [vmem:[%s1 + $0x188] sm:$0xf]
        %v824 = vld [vmem:[%s1 + $0x18c] sm:$0xff]
        %v825 = vld [vmem:[%s1 + $0x194] sm:$0xf]
        %v826 = vld [vmem:[%s1 + $0x198] sm:$0xff]
        %v827 = vld [vmem:[%s1 + $0x1a0] sm:$0xf]
        %v828 = vld [vmem:[%s1 + $0x1a4] sm:$0xff]
        %v829 = vld [vmem:[%s1 + $0x1ac] sm:$0xf]
        %v830 = vld [vmem:[%s1 + $0x1b0] sm:$0xff]
        %v831 = vld [vmem:[%s1 + $0x1b8] sm:$0xf]
        %v832 = vld [vmem:[%s1 + $0x1bc] sm:$0xff]
        %v833 = vld [vmem:[%s1 + $0x1c4] sm:$0xf]
        %v834 = vld [vmem:[%s1 + $0x1c8] sm:$0xff]
        %v835 = vld [vmem:[%s1 + $0x1d0] sm:$0xf]
        %v836 = vld [vmem:[%s1 + $0x1d4] sm:$0xff]
        %v837 = vld [vmem:[%s1 + $0x1dc] sm:$0xf]
        %v838 = vld [vmem:[%s1 + $0x1e0] sm:$0xff]
        %v839 = vld [vmem:[%s1 + $0x1e8] sm:$0xf]
        %v840 = vld [vmem:[%s1 + $0x1ec] sm:$0xff]
        %v841 = vld [vmem:[%s1 + $0x1f4] sm:$0xf]
        %v842 = vld [vmem:[%s1 + $0x1f8] sm:$0xff]
        %v843 = vld [vmem:[%s1 + $0x200] sm:$0xf]
        %v844 = vld [vmem:[%s1 + $0x204] sm:$0xff]
        %v845 = vld [vmem:[%s1 + $0x20c] sm:$0xf]
        %v846 = vld [vmem:[%s1 + $0x210] sm:$0xff]
        %v847 = vld [vmem:[%s1 + $0x218] sm:$0xf]
        %v848 = vld [vmem:[%s1 + $0x21c] sm:$0xff]
        %v849 = vld [vmem:[%s1 + $0x224] sm:$0xf]
        %v850 = vld [vmem:[%s1 + $0x228] sm:$0xff]
        %v851 = vld [vmem:[%s1 + $0x230] sm:$0xf]
        %v852 = vld [vmem:[%s1 + $0x234] sm:$0xff]
        %v853 = vld [vmem:[%s1 + $0x23c] sm:$0xf]
        %v854 = vpack.c.b16 %v639, %v638
        %v855 = vpack.c.b16 %v687, %v686
        %v856 = vpack.c.b16 %v735, %v734
        %v857 = vpack.c.b16 %v641, %v640
        %v858 = vpack.c.b16 %v689, %v688
        %v859 = vpack.c.b16 %v737, %v736
        %v860 = vpack.c.b16 %v643, %v642
        %v861 = vpack.c.b16 %v691, %v690
        %v862 = vpack.c.b16 %v739, %v738
        %v863 = vpack.c.b16 %v645, %v644
        %v864 = vpack.c.b16 %v693, %v692
        %v865 = vpack.c.b16 %v741, %v740
        %v866 = vpack.c.b16 %v647, %v646
        %v867 = vpack.c.b16 %v695, %v694
        %v868 = vpack.c.b16 %v743, %v742
        %v869 = vpack.c.b16 %v649, %v648
        %v870 = vpack.c.b16 %v697, %v696
        %v871 = vpack.c.b16 %v745, %v744
        %v872 = vpack.c.b16 %v651, %v650
        %v873 = vpack.c.b16 %v699, %v698
        %v874 = vpack.c.b16 %v747, %v746
        %v875 = vpack.c.b16 %v653, %v652
        %v876 = vpack.c.b16 %v701, %v700
        %v877 = vpack.c.b16 %v749, %v748
        %v878 = vpack.c.b16 %v655, %v654
        %v879 = vpack.c.b16 %v703, %v702
        %v880 = vpack.c.b16 %v751, %v750
        %v881 = vpack.c.b16 %v657, %v656
        %v882 = vpack.c.b16 %v705, %v704
        %v883 = vpack.c.b16 %v753, %v752
        %v884 = vpack.c.b16 %v659, %v658
        %v885 = vpack.c.b16 %v707, %v706
        %v886 = vpack.c.b16 %v755, %v754
        %v887 = vpack.c.b16 %v661, %v660
        %v888 = vpack.c.b16 %v709, %v708
        %v889 = vpack.c.b16 %v757, %v756
        %v1022 = vunpack.c.l.b16 %v758
        %v1023 = vunpack.c.h.b16 %v758
        %v1024 = vunpack.c.l.b16 %v759
        %v1025 = vunpack.c.l.b16 %v760
        %v1026 = vunpack.c.h.b16 %v760
        %v1027 = vunpack.c.l.b16 %v761
        %v1028 = vunpack.c.l.b16 %v762
        %v1029 = vunpack.c.h.b16 %v762
        %v1030 = vunpack.c.l.b16 %v763
        %v1031 = vunpack.c.l.b16 %v764
        %v1032 = vunpack.c.h.b16 %v764
        %v1033 = vunpack.c.l.b16 %v765
        %v1034 = vunpack.c.l.b16 %v766
        %v1035 = vunpack.c.h.b16 %v766
        %v1036 = vunpack.c.l.b16 %v767
        %v1037 = vunpack.c.l.b16 %v768
        %v1038 = vunpack.c.h.b16 %v768
        %v1039 = vunpack.c.l.b16 %v769
        %v1040 = vunpack.c.l.b16 %v770
        %v1041 = vunpack.c.h.b16 %v770
        %v1042 = vunpack.c.l.b16 %v771
        %v1043 = vunpack.c.l.b16 %v772
        %v1044 = vunpack.c.h.b16 %v772
        %v1045 = vunpack.c.l.b16 %v773
        %v1046 = vunpack.c.l.b16 %v774
        %v1047 = vunpack.c.h.b16 %v774
        %v1048 = vunpack.c.l.b16 %v775
        %v1049 = vunpack.c.l.b16 %v776
        %v1050 = vunpack.c.h.b16 %v776
        %v1051 = vunpack.c.l.b16 %v777
        %v1052 = vunpack.c.l.b16 %v778
        %v1053 = vunpack.c.h.b16 %v778
        %v1054 = vunpack.c.l.b16 %v779
        %v1055 = vunpack.c.l.b16 %v780
        %v1056 = vunpack.c.h.b16 %v780
        %v1057 = vunpack.c.l.b16 %v781
        %v1058 = vunpack.c.l.b16 %v782
        %v1059 = vunpack.c.h.b16 %v782
        %v1060 = vunpack.c.l.b16 %v783
        %v1061 = vunpack.c.l.b16 %v784
        %v1062 = vunpack.c.h.b16 %v784
        %v1063 = vunpack.c.l.b16 %v785
        %v1064 = vunpack.c.l.b16 %v786
        %v1065 = vunpack.c.h.b16 %v786
        %v1066 = vunpack.c.l.b16 %v787
        %v1067 = vunpack.c.l.b16 %v788
        %v1068 = vunpack.c.h.b16 %v788
        %v1069 = vunpack.c.l.b16 %v789
        %v1070 = vunpack.c.l.b16 %v790
        %v1071 = vunpack.c.h.b16 %v790
        %v1072 = vunpack.c.l.b16 %v791
        %v1073 = vunpack.c.l.b16 %v792
        %v1074 = vunpack.c.h.b16 %v792
        %v1075 = vunpack.c.l.b16 %v793
        %v1076 = vunpack.c.l.b16 %v794
        %v1077 = vunpack.c.h.b16 %v794
        %v1078 = vunpack.c.l.b16 %v795
        %v1079 = vunpack.c.l.b16 %v796
        %v1080 = vunpack.c.h.b16 %v796
        %v1081 = vunpack.c.l.b16 %v797
        %v1082 = vunpack.c.l.b16 %v798
        %v1083 = vunpack.c.h.b16 %v798
        %v1084 = vunpack.c.l.b16 %v799
        %v1085 = vunpack.c.l.b16 %v800
        %v1086 = vunpack.c.h.b16 %v800
        %v1087 = vunpack.c.l.b16 %v801
        %v1088 = vunpack.c.l.b16 %v802
        %v1089 = vunpack.c.h.b16 %v802
        %v1090 = vunpack.c.l.b16 %v803
        %v1091 = vunpack.c.l.b16 %v804
        %v1092 = vunpack.c.h.b16 %v804
        %v1093 = vunpack.c.l.b16 %v805
        %v1094 = vunpack.c.l.b16 %v806
        %v1095 = vunpack.c.h.b16 %v806
        %v1096 = vunpack.c.l.b16 %v807
        %v1097 = vunpack.c.l.b16 %v808
        %v1098 = vunpack.c.h.b16 %v808
        %v1099 = vunpack.c.l.b16 %v809
        %v1100 = vunpack.c.l.b16 %v810
        %v1101 = vunpack.c.h.b16 %v810
        %v1102 = vunpack.c.l.b16 %v811
        %v1103 = vunpack.c.l.b16 %v812
        %v1104 = vunpack.c.h.b16 %v812
        %v1105 = vunpack.c.l.b16 %v813
        %v1106 = vunpack.c.l.b16 %v814
        %v1107 = vunpack.c.h.b16 %v814
        %v1108 = vunpack.c.l.b16 %v815
        %v1109 = vunpack.c.l.b16 %v816
        %v1110 = vunpack.c.h.b16 %v816
        %v1111 = vunpack.c.l.b16 %v817
        %v1112 = vunpack.c.l.b16 %v818
        %v1113 = vunpack.c.h.b16 %v818
        %v1114 = vunpack.c.l.b16 %v819
        %v1115 = vunpack.c.l.b16 %v820
        %v1116 = vunpack.c.h.b16 %v820
        %v1117 = vunpack.c.l.b16 %v821
        %v1118 = vunpack.c.l.b16 %v822
        %v1119 = vunpack.c.h.b16 %v822
        %v1120 = vunpack.c.l.b16 %v823
        %v1121 = vunpack.c.l.b16 %v824
        %v1122 = vunpack.c.h.b16 %v824
        %v1123 = vunpack.c.l.b16 %v825
        %v1124 = vunpack.c.l.b16 %v826
        %v1125 = vunpack.c.h.b16 %v826
        %v1126 = vunpack.c.l.b16 %v827
        %v1127 = vunpack.c.l.b16 %v828
        %v1128 = vunpack.c.h.b16 %v828
        %v1129 = vunpack.c.l.b16 %v829
        %v1130 = vunpack.c.l.b16 %v830
        %v1131 = vunpack.c.h.b16 %v830
        %v1132 = vunpack.c.l.b16 %v831
        %v1133 = vunpack.c.l.b16 %v832
        %v1134 = vunpack.c.h.b16 %v832
        %v1135 = vunpack.c.l.b16 %v833
        %v1136 = vunpack.c.l.b16 %v834
        %v1137 = vunpack.c.h.b16 %v834
        %v1138 = vunpack.c.l.b16 %v835
        %v1139 = vunpack.c.l.b16 %v836
        %v1140 = vunpack.c.h.b16 %v836
        %v1141 = vunpack.c.l.b16 %v837
        %v1142 = vunpack.c.l.b16 %v838
        %v1143 = vunpack.c.h.b16 %v838
        %v1144 = vunpack.c.l.b16 %v839
        %v1145 = vunpack.c.l.b16 %v840
        %v1146 = vunpack.c.h.b16 %v840
        %v1147 = vunpack.c.l.b16 %v841
        %v1148 = vunpack.c.l.b16 %v842
        %v1149 = vunpack.c.h.b16 %v842
        %v1150 = vunpack.c.l.b16 %v843
        %v1151 = vunpack.c.l.b16 %v844
        %v1152 = vunpack.c.h.b16 %v844
        %v1153 = vunpack.c.l.b16 %v845
        %v1154 = vunpack.c.l.b16 %v846
        %v1155 = vunpack.c.h.b16 %v846
        %v1156 = vunpack.c.l.b16 %v847
        %v1157 = vunpack.c.l.b16 %v848
        %v1158 = vunpack.c.h.b16 %v848
        %v1159 = vunpack.c.l.b16 %v849
        %v1160 = vunpack.c.l.b16 %v850
        %v1161 = vunpack.c.h.b16 %v850
        %v1162 = vunpack.c.l.b16 %v851
        %v1163 = vunpack.c.l.b16 %v852
        %v1164 = vunpack.c.h.b16 %v852
        %v1165 = vunpack.c.l.b16 %v853
        %v1166 = vpack.c.b16 %v1025, %v1022
        %v1167 = vpack.c.b16 %v1026, %v1023
        %v1168 = vpack.c.b16 %v1027, %v1024
        %v1169 = vpack.c.b16 %v1031, %v1028
        %v1170 = vpack.c.b16 %v1032, %v1029
        %v1171 = vpack.c.b16 %v1033, %v1030
        %v1172 = vpack.c.b16 %v1037, %v1034
        %v1173 = vpack.c.b16 %v1038, %v1035
        %v1174 = vpack.c.b16 %v1039, %v1036
        %v1175 = vpack.c.b16 %v1043, %v1040
        %v1176 = vpack.c.b16 %v1044, %v1041
        %v1177 = vpack.c.b16 %v1045, %v1042
        %v1178 = vpack.c.b16 %v1049, %v1046
        %v1179 = vpack.c.b16 %v1050, %v1047
        %v1180 = vpack.c.b16 %v1051, %v1048
        %v1181 = vpack.c.b16 %v1055, %v1052
        %v1182 = vpack.c.b16 %v1056, %v1053
        %v1183 = vpack.c.b16 %v1057, %v1054
        %v1184 = vpack.c.b16 %v1061, %v1058
        %v1185 = vpack.c.b16 %v1062, %v1059
        %v1186 = vpack.c.b16 %v1063, %v1060
        %v1187 = vpack.c.b16 %v1067, %v1064
        %v1188 = vpack.c.b16 %v1068, %v1065
        %v1189 = vpack.c.b16 %v1069, %v1066
        %v1190 = vpack.c.b16 %v1073, %v1070
        %v1191 = vpack.c.b16 %v1074, %v1071
        %v1192 = vpack.c.b16 %v1075, %v1072
        %v1193 = vpack.c.b16 %v1079, %v1076
        %v1194 = vpack.c.b16 %v1080, %v1077
        %v1195 = vpack.c.b16 %v1081, %v1078
        %v1196 = vpack.c.b16 %v1085, %v1082
        %v1197 = vpack.c.b16 %v1086, %v1083
        %v1198 = vpack.c.b16 %v1087, %v1084
        %v1199 = vpack.c.b16 %v1091, %v1088
        %v1200 = vpack.c.b16 %v1092, %v1089
        %v1201 = vpack.c.b16 %v1093, %v1090
        %v1202 = vpack.c.b16 %v1097, %v1094
        %v1203 = vpack.c.b16 %v1098, %v1095
        %v1204 = vpack.c.b16 %v1099, %v1096
        %v1205 = vpack.c.b16 %v1103, %v1100
        %v1206 = vpack.c.b16 %v1104, %v1101
        %v1207 = vpack.c.b16 %v1105, %v1102
        %v1208 = vpack.c.b16 %v1109, %v1106
        %v1209 = vpack.c.b16 %v1110, %v1107
        %v1210 = vpack.c.b16 %v1111, %v1108
        %v1211 = vpack.c.b16 %v1115, %v1112
        %v1212 = vpack.c.b16 %v1116, %v1113
        %v1213 = vpack.c.b16 %v1117, %v1114
        %v1214 = vpack.c.b16 %v1121, %v1118
        %v1215 = vpack.c.b16 %v1122, %v1119
        %v1216 = vpack.c.b16 %v1123, %v1120
        %v1217 = vpack.c.b16 %v1127, %v1124
        %v1218 = vpack.c.b16 %v1128, %v1125
        %v1219 = vpack.c.b16 %v1129, %v1126
        %v1220 = vpack.c.b16 %v1133, %v1130
        %v1221 = vpack.c.b16 %v1134, %v1131
        %v1222 = vpack.c.b16 %v1135, %v1132
        %v1223 = vpack.c.b16 %v1139, %v1136
        %v1224 = vpack.c.b16 %v1140, %v1137
        %v1225 = vpack.c.b16 %v1141, %v1138
        %v1226 = vpack.c.b16 %v1145, %v1142
        %v1227 = vpack.c.b16 %v1146, %v1143
        %v1228 = vpack.c.b16 %v1147, %v1144
        %v1229 = vpack.c.b16 %v1151, %v1148
        %v1230 = vpack.c.b16 %v1152, %v1149
        %v1231 = vpack.c.b16 %v1153, %v1150
        %v1232 = vpack.c.b16 %v1157, %v1154
        %v1233 = vpack.c.b16 %v1158, %v1155
        %v1234 = vpack.c.b16 %v1159, %v1156
        %v1235 = vpack.c.b16 %v1163, %v1160
        %v1236 = vpack.c.b16 %v1164, %v1161
        %v1237 = vpack.c.b16 %v1165, %v1162
        %1310 = vmatpush.bf16.msra.mxu0 %v1187
        %1311 = vmatpush.bf16.msra.mxu0 %v1184
        %1312 = vmatpush.bf16.msra.mxu0 %v1181
        %1313 = vmatpush.bf16.msra.mxu0 %v1178
        %1314 = vmatpush.bf16.msra.mxu0 %v1175
        %1315 = vmatpush.bf16.msra.mxu0 %v1172
        %1316 = vmatpush.bf16.msra.mxu0 %v1169
        %1317 = vmatpush.bf16.msra.mxu0 %v1166
        %1318 = vmatmul.bf16.gmra.mxu0 %v854
        %v1319 = vpop.f32.mrf.mxu0
        %v1320 = vadd.f32 0.0, %v1319
        %v1321 = vpop.f32.mrf.mxu0
        %v1322 = vadd.f32 0.0, %v1321
        %1323 = vmatmul.bf16.gmra.mxu0 %v857
        %v1324 = vpop.f32.mrf.mxu0
        %v1325 = vpop.f32.mrf.mxu0
        %v1326 = vadd.f32 0.0, %v1325
        %1327 = vmatmul.bf16.gmra.mxu0 %v860
        %v1328 = vpop.f32.mrf.mxu0
        %v1329 = vadd.f32 0.0, %v1328
        %v1330 = vpop.f32.mrf.mxu0
        %1331 = vmatmul.bf16.gmra.mxu0 %v863
        %v1332 = vpop.f32.mrf.mxu0
        %v1333 = vadd.f32 0.0, %v1332
        %v1334 = vpop.f32.mrf.mxu0
        %v1335 = vadd.f32 0.0, %v1334
        %1336 = vmatmul.bf16.gmra.mxu0 %v866
        %v1337 = vpop.f32.mrf.mxu0
        %v1338 = vpop.f32.mrf.mxu0
        %v1339 = vadd.f32 0.0, %v1338
        %1340 = vmatmul.bf16.gmra.mxu0 %v869
        %v1341 = vpop.f32.mrf.mxu0
        %v1342 = vadd.f32 0.0, %v1341
        %v1343 = vpop.f32.mrf.mxu0
        %1344 = vmatmul.bf16.gmra.mxu0 %v872
        %v1345 = vpop.f32.mrf.mxu0
        %v1346 = vadd.f32 0.0, %v1345
        %v1347 = vpop.f32.mrf.mxu0
        %v1348 = vadd.f32 0.0, %v1347
        %1349 = vmatmul.bf16.gmra.mxu0 %v875
        %v1350 = vpop.f32.mrf.mxu0
        %v1351 = vpop.f32.mrf.mxu0
        %v1352 = vadd.f32 0.0, %v1351
        %1353 = vmatmul.bf16.gmra.mxu0 %v878
        %v1354 = vpop.f32.mrf.mxu0
        %v1355 = vadd.f32 0.0, %v1354
        %v1356 = vpop.f32.mrf.mxu0
        %1357 = vmatmul.bf16.gmra.mxu0 %v881
        %v1358 = vpop.f32.mrf.mxu0
        %v1359 = vadd.f32 0.0, %v1358
        %v1360 = vpop.f32.mrf.mxu0
        %v1361 = vadd.f32 0.0, %v1360
        %1362 = vmatmul.bf16.gmra.mxu0 %v884
        %v1363 = vpop.f32.mrf.mxu0
        %v1364 = vpop.f32.mrf.mxu0
        %v1365 = vadd.f32 0.0, %v1364
        %1366 = vmatmul.bf16.gmra.mxu0 %v887
        %v1367 = vpop.f32.mrf.mxu0
        %v1368 = vadd.f32 0.0, %v1367
        %v1369 = vpop.f32.mrf.mxu0
        %1370 = vdwg.mxu0
        %1371 = vmatpush.bf16.msra.mxu0 %v1211
        %1372 = vmatpush.bf16.msra.mxu0 %v1208
        %1373 = vmatpush.bf16.msra.mxu0 %v1205
        %1374 = vmatpush.bf16.msra.mxu0 %v1202
        %1375 = vmatpush.bf16.msra.mxu0 %v1199
        %1376 = vmatpush.bf16.msra.mxu0 %v1196
        %1377 = vmatpush.bf16.msra.mxu0 %v1193
        %1378 = vmatpush.bf16.msra.mxu0 %v1190
        %1379 = vmatmul.bf16.gmra.mxu0 %v855
        %v1380 = vpop.f32.mrf.mxu0
        %v1381 = vadd.f32 %v1320, %v1380
        %v1382 = vpop.f32.mrf.mxu0
        %v1383 = vadd.f32 %v1322, %v1382
        %1384 = vmatmul.bf16.gmra.mxu0 %v858
        %v1385 = vpop.f32.mrf.mxu0
        %v1386 = vpop.f32.mrf.mxu0
        %v1387 = vadd.f32 %v1326, %v1386
        %1388 = vmatmul.bf16.gmra.mxu0 %v861
        %v1389 = vpop.f32.mrf.mxu0
        %v1390 = vadd.f32 %v1329, %v1389
        %v1391 = vpop.f32.mrf.mxu0
        %1392 = vmatmul.bf16.gmra.mxu0 %v864
        %v1393 = vpop.f32.mrf.mxu0
        %v1394 = vadd.f32 %v1333, %v1393
        %v1395 = vpop.f32.mrf.mxu0
        %v1396 = vadd.f32 %v1335, %v1395
        %1397 = vmatmul.bf16.gmra.mxu0 %v867
        %v1398 = vpop.f32.mrf.mxu0
        %v1399 = vpop.f32.mrf.mxu0
        %v1400 = vadd.f32 %v1339, %v1399
        %1401 = vmatmul.bf16.gmra.mxu0 %v870
        %v1402 = vpop.f32.mrf.mxu0
        %v1403 = vadd.f32 %v1342, %v1402
        %v1404 = vpop.f32.mrf.mxu0
        %1405 = vmatmul.bf16.gmra.mxu0 %v873
        %v1406 = vpop.f32.mrf.mxu0
        %v1407 = vadd.f32 %v1346, %v1406
        %v1408 = vpop.f32.mrf.mxu0
        %v1409 = vadd.f32 %v1348, %v1408
        %1410 = vmatmul.bf16.gmra.mxu0 %v876
        %v1411 = vpop.f32.mrf.mxu0
        %v1412 = vpop.f32.mrf.mxu0
        %v1413 = vadd.f32 %v1352, %v1412
        %1414 = vmatmul.bf16.gmra.mxu0 %v879
        %v1415 = vpop.f32.mrf.mxu0
        %v1416 = vadd.f32 %v1355, %v1415
        %v1417 = vpop.f32.mrf.mxu0
        %1418 = vmatmul.bf16.gmra.mxu0 %v882
        %v1419 = vpop.f32.mrf.mxu0
        %v1420 = vadd.f32 %v1359, %v1419
        %v1421 = vpop.f32.mrf.mxu0
        %v1422 = vadd.f32 %v1361, %v1421
        %1423 = vmatmul.bf16.gmra.mxu0 %v885
        %v1424 = vpop.f32.mrf.mxu0
        %v1425 = vpop.f32.mrf.mxu0
        %v1426 = vadd.f32 %v1365, %v1425
        %1427 = vmatmul.bf16.gmra.mxu0 %v888
        %v1428 = vpop.f32.mrf.mxu0
        %v1429 = vadd.f32 %v1368, %v1428
        %v1430 = vpop.f32.mrf.mxu0
        %1431 = vdwg.mxu0
        %1432 = vmatpush.bf16.msra.mxu0 %v1235
        %1433 = vmatpush.bf16.msra.mxu0 %v1232
        %1434 = vmatpush.bf16.msra.mxu0 %v1229
        %1435 = vmatpush.bf16.msra.mxu0 %v1226
        %1436 = vmatpush.bf16.msra.mxu0 %v1223
        %1437 = vmatpush.bf16.msra.mxu0 %v1220
        %1438 = vmatpush.bf16.msra.mxu0 %v1217
        %1439 = vmatpush.bf16.msra.mxu0 %v1214
        %1440 = vmatmul.bf16.gmra.mxu0 %v856
        %v1441 = vpop.f32.mrf.mxu0
        %v1442 = vadd.f32 %v1381, %v1441
        %v1443 = vpop.f32.mrf.mxu0
        %v1444 = vadd.f32 %v1383, %v1443
        %1445 = vmatmul.bf16.gmra.mxu0 %v859
        %v1446 = vpop.f32.mrf.mxu0
        %v1447 = vpop.f32.mrf.mxu0
        %v1448 = vadd.f32 %v1387, %v1447
        %1449 = vmatmul.bf16.gmra.mxu0 %v862
        %v1450 = vpop.f32.mrf.mxu0
        %v1451 = vadd.f32 %v1390, %v1450
        %v1452 = vpop.f32.mrf.mxu0
        %1453 = vmatmul.bf16.gmra.mxu0 %v865
        %v1454 = vpop.f32.mrf.mxu0
        %v1455 = vadd.f32 %v1394, %v1454
        %v1456 = vpop.f32.mrf.mxu0
        %v1457 = vadd.f32 %v1396, %v1456
        %1458 = vmatmul.bf16.gmra.mxu0 %v868
        %v1459 = vpop.f32.mrf.mxu0
        %v1460 = vpop.f32.mrf.mxu0
        %v1461 = vadd.f32 %v1400, %v1460
        %1462 = vmatmul.bf16.gmra.mxu0 %v871
        %v1463 = vpop.f32.mrf.mxu0
        %v1464 = vadd.f32 %v1403, %v1463
        %v1465 = vpop.f32.mrf.mxu0
        %1466 = vmatmul.bf16.gmra.mxu0 %v874
        %v1467 = vpop.f32.mrf.mxu0
        %v1468 = vadd.f32 %v1407, %v1467
        %v1469 = vpop.f32.mrf.mxu0
        %v1470 = vadd.f32 %v1409, %v1469
        %1471 = vmatmul.bf16.gmra.mxu0 %v877
        %v1472 = vpop.f32.mrf.mxu0
        %v1473 = vpop.f32.mrf.mxu0
        %v1474 = vadd.f32 %v1413, %v1473
        %1475 = vmatmul.bf16.gmra.mxu0 %v880
        %v1476 = vpop.f32.mrf.mxu0
        %v1477 = vadd.f32 %v1416, %v1476
        %v1478 = vpop.f32.mrf.mxu0
        %1479 = vmatmul.bf16.gmra.mxu0 %v883
        %v1480 = vpop.f32.mrf.mxu0
        %v1481 = vadd.f32 %v1420, %v1480
        %v1482 = vpop.f32.mrf.mxu0
        %v1483 = vadd.f32 %v1422, %v1482
        %1484 = vmatmul.bf16.gmra.mxu0 %v886
        %v1485 = vpop.f32.mrf.mxu0
        %v1486 = vpop.f32.mrf.mxu0
        %v1487 = vadd.f32 %v1426, %v1486
        %1488 = vmatmul.bf16.gmra.mxu0 %v889
        %v1489 = vpop.f32.mrf.mxu0
        %v1490 = vadd.f32 %v1429, %v1489
        %v1491 = vpop.f32.mrf.mxu0
        %1492 = vdwg.mxu0
        %1493 = vmatpush.bf16.msra.mxu0 %v1188
        %1494 = vmatpush.bf16.msra.mxu0 %v1185
        %1495 = vmatpush.bf16.msra.mxu0 %v1182
        %1496 = vmatpush.bf16.msra.mxu0 %v1179
        %1497 = vmatpush.bf16.msra.mxu0 %v1176
        %1498 = vmatpush.bf16.msra.mxu0 %v1173
        %1499 = vmatpush.bf16.msra.mxu0 %v1170
        %1500 = vmatpush.bf16.msra.mxu0 %v1167
        %1501 = vmatmul.bf16.gmra.mxu0 %v854
        %v1502 = vpop.f32.mrf.mxu0
        %v1503 = vadd.f32 0.0, %v1502
        %v1504 = vpop.f32.mrf.mxu0
        %v1505 = vadd.f32 0.0, %v1504
        %1506 = vmatmul.bf16.gmra.mxu0 %v857
        %v1507 = vpop.f32.mrf.mxu0
        %v1508 = vadd.f32 0.0, %v1507
        %v1509 = vpop.f32.mrf.mxu0
        %v1510 = vadd.f32 0.0, %v1509
        %1511 = vmatmul.bf16.gmra.mxu0 %v860
        %v1512 = vpop.f32.mrf.mxu0
        %v1513 = vadd.f32 0.0, %v1512
        %v1514 = vpop.f32.mrf.mxu0
        %v1515 = vadd.f32 0.0, %v1514
        %1516 = vmatmul.bf16.gmra.mxu0 %v863
        %v1517 = vpop.f32.mrf.mxu0
        %v1518 = vadd.f32 0.0, %v1517
        %v1519 = vpop.f32.mrf.mxu0
        %v1520 = vadd.f32 0.0, %v1519
        %1521 = vmatmul.bf16.gmra.mxu0 %v866
        %v1522 = vpop.f32.mrf.mxu0
        %v1523 = vadd.f32 0.0, %v1522
        %v1524 = vpop.f32.mrf.mxu0
        %v1525 = vadd.f32 0.0, %v1524
        %1526 = vmatmul.bf16.gmra.mxu0 %v869
        %v1527 = vpop.f32.mrf.mxu0
        %v1528 = vadd.f32 0.0, %v1527
        %v1529 = vpop.f32.mrf.mxu0
        %v1530 = vadd.f32 0.0, %v1529
        %1531 = vmatmul.bf16.gmra.mxu0 %v872
        %v1532 = vpop.f32.mrf.mxu0
        %v1533 = vadd.f32 0.0, %v1532
        %v1534 = vpop.f32.mrf.mxu0
        %v1535 = vadd.f32 0.0, %v1534
        %1536 = vmatmul.bf16.gmra.mxu0 %v875
        %v1537 = vpop.f32.mrf.mxu0
        %v1538 = vadd.f32 0.0, %v1537
        %v1539 = vpop.f32.mrf.mxu0
        %v1540 = vadd.f32 0.0, %v1539
        %1541 = vmatmul.bf16.gmra.mxu0 %v878
        %v1542 = vpop.f32.mrf.mxu0
        %v1543 = vadd.f32 0.0, %v1542
        %v1544 = vpop.f32.mrf.mxu0
        %v1545 = vadd.f32 0.0, %v1544
        %1546 = vmatmul.bf16.gmra.mxu0 %v881
        %v1547 = vpop.f32.mrf.mxu0
        %v1548 = vadd.f32 0.0, %v1547
        %v1549 = vpop.f32.mrf.mxu0
        %v1550 = vadd.f32 0.0, %v1549
        %1551 = vmatmul.bf16.gmra.mxu0 %v884
        %v1552 = vpop.f32.mrf.mxu0
        %v1553 = vadd.f32 0.0, %v1552
        %v1554 = vpop.f32.mrf.mxu0
        %v1555 = vadd.f32 0.0, %v1554
        %1556 = vmatmul.bf16.gmra.mxu0 %v887
        %v1557 = vpop.f32.mrf.mxu0
        %v1558 = vadd.f32 0.0, %v1557
        %v1559 = vpop.f32.mrf.mxu0
        %v1560 = vadd.f32 0.0, %v1559
        %1561 = vdwg.mxu0
        %1562 = vmatpush.bf16.msra.mxu0 %v1212
        %1563 = vmatpush.bf16.msra.mxu0 %v1209
        %1564 = vmatpush.bf16.msra.mxu0 %v1206
        %1565 = vmatpush.bf16.msra.mxu0 %v1203
        %1566 = vmatpush.bf16.msra.mxu0 %v1200
        %1567 = vmatpush.bf16.msra.mxu0 %v1197
        %1568 = vmatpush.bf16.msra.mxu0 %v1194
        %1569 = vmatpush.bf16.msra.mxu0 %v1191
        %1570 = vmatmul.bf16.gmra.mxu0 %v855
        %v1571 = vpop.f32.mrf.mxu0
        %v1572 = vadd.f32 %v1503, %v1571
        %v1573 = vpop.f32.mrf.mxu0
        %v1574 = vadd.f32 %v1505, %v1573
        %1575 = vmatmul.bf16.gmra.mxu0 %v858
        %v1576 = vpop.f32.mrf.mxu0
        %v1577 = vadd.f32 %v1508, %v1576
        %v1578 = vpop.f32.mrf.mxu0
        %v1579 = vadd.f32 %v1510, %v1578
        %1580 = vmatmul.bf16.gmra.mxu0 %v861
        %v1581 = vpop.f32.mrf.mxu0
        %v1582 = vadd.f32 %v1513, %v1581
        %v1583 = vpop.f32.mrf.mxu0
        %v1584 = vadd.f32 %v1515, %v1583
        %1585 = vmatmul.bf16.gmra.mxu0 %v864
        %v1586 = vpop.f32.mrf.mxu0
        %v1587 = vadd.f32 %v1518, %v1586
        %v1588 = vpop.f32.mrf.mxu0
        %v1589 = vadd.f32 %v1520, %v1588
        %1590 = vmatmul.bf16.gmra.mxu0 %v867
        %v1591 = vpop.f32.mrf.mxu0
        %v1592 = vadd.f32 %v1523, %v1591
        %v1593 = vpop.f32.mrf.mxu0
        %v1594 = vadd.f32 %v1525, %v1593
        %1595 = vmatmul.bf16.gmra.mxu0 %v870
        %v1596 = vpop.f32.mrf.mxu0
        %v1597 = vadd.f32 %v1528, %v1596
        %v1598 = vpop.f32.mrf.mxu0
        %v1599 = vadd.f32 %v1530, %v1598
        %1600 = vmatmul.bf16.gmra.mxu0 %v873
        %v1601 = vpop.f32.mrf.mxu0
        %v1602 = vadd.f32 %v1533, %v1601
        %v1603 = vpop.f32.mrf.mxu0
        %v1604 = vadd.f32 %v1535, %v1603
        %1605 = vmatmul.bf16.gmra.mxu0 %v876
        %v1606 = vpop.f32.mrf.mxu0
        %v1607 = vadd.f32 %v1538, %v1606
        %v1608 = vpop.f32.mrf.mxu0
        %v1609 = vadd.f32 %v1540, %v1608
        %1610 = vmatmul.bf16.gmra.mxu0 %v879
        %v1611 = vpop.f32.mrf.mxu0
        %v1612 = vadd.f32 %v1543, %v1611
        %v1613 = vpop.f32.mrf.mxu0
        %v1614 = vadd.f32 %v1545, %v1613
        %1615 = vmatmul.bf16.gmra.mxu0 %v882
        %v1616 = vpop.f32.mrf.mxu0
        %v1617 = vadd.f32 %v1548, %v1616
        %v1618 = vpop.f32.mrf.mxu0
        %v1619 = vadd.f32 %v1550, %v1618
        %1620 = vmatmul.bf16.gmra.mxu0 %v885
        %v1621 = vpop.f32.mrf.mxu0
        %v1622 = vadd.f32 %v1553, %v1621
        %v1623 = vpop.f32.mrf.mxu0
        %v1624 = vadd.f32 %v1555, %v1623
        %1625 = vmatmul.bf16.gmra.mxu0 %v888
        %v1626 = vpop.f32.mrf.mxu0
        %v1627 = vadd.f32 %v1558, %v1626
        %v1628 = vpop.f32.mrf.mxu0
        %v1629 = vadd.f32 %v1560, %v1628
        %1630 = vdwg.mxu0
        %1631 = vmatpush.bf16.msra.mxu0 %v1236
        %1632 = vmatpush.bf16.msra.mxu0 %v1233
        %1633 = vmatpush.bf16.msra.mxu0 %v1230
        %1634 = vmatpush.bf16.msra.mxu0 %v1227
        %1635 = vmatpush.bf16.msra.mxu0 %v1224
        %1636 = vmatpush.bf16.msra.mxu0 %v1221
        %1637 = vmatpush.bf16.msra.mxu0 %v1218
        %1638 = vmatpush.bf16.msra.mxu0 %v1215
        %1639 = vmatmul.bf16.gmra.mxu0 %v856
        %v1640 = vpop.f32.mrf.mxu0
        %v1641 = vadd.f32 %v1572, %v1640
        %v1642 = vpop.f32.mrf.mxu0
        %v1643 = vadd.f32 %v1574, %v1642
        %1644 = vmatmul.bf16.gmra.mxu0 %v859
        %v1645 = vpop.f32.mrf.mxu0
        %v1646 = vadd.f32 %v1577, %v1645
        %v1647 = vpop.f32.mrf.mxu0
        %v1648 = vadd.f32 %v1579, %v1647
        %1649 = vmatmul.bf16.gmra.mxu0 %v862
        %v1650 = vpop.f32.mrf.mxu0
        %v1651 = vadd.f32 %v1582, %v1650
        %v1652 = vpop.f32.mrf.mxu0
        %v1653 = vadd.f32 %v1584, %v1652
        %1654 = vmatmul.bf16.gmra.mxu0 %v865
        %v1655 = vpop.f32.mrf.mxu0
        %v1656 = vadd.f32 %v1587, %v1655
        %v1657 = vpop.f32.mrf.mxu0
        %v1658 = vadd.f32 %v1589, %v1657
        %1659 = vmatmul.bf16.gmra.mxu0 %v868
        %v1660 = vpop.f32.mrf.mxu0
        %v1661 = vadd.f32 %v1592, %v1660
        %v1662 = vpop.f32.mrf.mxu0
        %v1663 = vadd.f32 %v1594, %v1662
        %1664 = vmatmul.bf16.gmra.mxu0 %v871
        %v1665 = vpop.f32.mrf.mxu0
        %v1666 = vadd.f32 %v1597, %v1665
        %v1667 = vpop.f32.mrf.mxu0
        %v1668 = vadd.f32 %v1599, %v1667
        %1669 = vmatmul.bf16.gmra.mxu0 %v874
        %v1670 = vpop.f32.mrf.mxu0
        %v1671 = vadd.f32 %v1602, %v1670
        %v1672 = vpop.f32.mrf.mxu0
        %v1673 = vadd.f32 %v1604, %v1672
        %1674 = vmatmul.bf16.gmra.mxu0 %v877
        %v1675 = vpop.f32.mrf.mxu0
        %v1676 = vadd.f32 %v1607, %v1675
        %v1677 = vpop.f32.mrf.mxu0
        %v1678 = vadd.f32 %v1609, %v1677
        %1679 = vmatmul.bf16.gmra.mxu0 %v880
        %v1680 = vpop.f32.mrf.mxu0
        %v1681 = vadd.f32 %v1612, %v1680
        %v1682 = vpop.f32.mrf.mxu0
        %v1683 = vadd.f32 %v1614, %v1682
        %1684 = vmatmul.bf16.gmra.mxu0 %v883
        %v1685 = vpop.f32.mrf.mxu0
        %v1686 = vadd.f32 %v1617, %v1685
        %v1687 = vpop.f32.mrf.mxu0
        %v1688 = vadd.f32 %v1619, %v1687
        %1689 = vmatmul.bf16.gmra.mxu0 %v886
        %v1690 = vpop.f32.mrf.mxu0
        %v1691 = vadd.f32 %v1622, %v1690
        %v1692 = vpop.f32.mrf.mxu0
        %v1693 = vadd.f32 %v1624, %v1692
        %1694 = vmatmul.bf16.gmra.mxu0 %v889
        %v1695 = vpop.f32.mrf.mxu0
        %v1696 = vadd.f32 %v1627, %v1695
        %v1697 = vpop.f32.mrf.mxu0
        %v1698 = vadd.f32 %v1629, %v1697
        %1699 = vdwg.mxu0
        %1700 = vmatpush.bf16.msra.mxu0 %v1189
        %1701 = vmatpush.bf16.msra.mxu0 %v1186
        %1702 = vmatpush.bf16.msra.mxu0 %v1183
        %1703 = vmatpush.bf16.msra.mxu0 %v1180
        %1704 = vmatpush.bf16.msra.mxu0 %v1177
        %1705 = vmatpush.bf16.msra.mxu0 %v1174
        %1706 = vmatpush.bf16.msra.mxu0 %v1171
        %1707 = vmatpush.bf16.msra.mxu0 %v1168
        %1708 = vmatmul.bf16.gmra.mxu0 %v854
        %v1709 = vpop.f32.mrf.mxu0
        %v1710 = vadd.f32 0.0, %v1709
        %v1711 = vpop.f32.mrf.mxu0
        %v1712 = vadd.f32 0.0, %v1711
        %1713 = vmatmul.bf16.gmra.mxu0 %v857
        %v1714 = vpop.f32.mrf.mxu0
        %v1715 = vadd.f32 0.0, %v1714
        %v1716 = vpop.f32.mrf.mxu0
        %v1717 = vadd.f32 0.0, %v1716
        %1718 = vmatmul.bf16.gmra.mxu0 %v860
        %v1719 = vpop.f32.mrf.mxu0
        %v1720 = vadd.f32 0.0, %v1719
        %v1721 = vpop.f32.mrf.mxu0
        %v1722 = vadd.f32 0.0, %v1721
        %1723 = vmatmul.bf16.gmra.mxu0 %v863
        %v1724 = vpop.f32.mrf.mxu0
        %v1725 = vadd.f32 0.0, %v1724
        %v1726 = vpop.f32.mrf.mxu0
        %v1727 = vadd.f32 0.0, %v1726
        %1728 = vmatmul.bf16.gmra.mxu0 %v866
        %v1729 = vpop.f32.mrf.mxu0
        %v1730 = vadd.f32 0.0, %v1729
        %v1731 = vpop.f32.mrf.mxu0
        %v1732 = vadd.f32 0.0, %v1731
        %1733 = vmatmul.bf16.gmra.mxu0 %v869
        %v1734 = vpop.f32.mrf.mxu0
        %v1735 = vadd.f32 0.0, %v1734
        %v1736 = vpop.f32.mrf.mxu0
        %v1737 = vadd.f32 0.0, %v1736
        %1738 = vmatmul.bf16.gmra.mxu0 %v872
        %v1739 = vpop.f32.mrf.mxu0
        %v1740 = vadd.f32 0.0, %v1739
        %v1741 = vpop.f32.mrf.mxu0
        %v1742 = vadd.f32 0.0, %v1741
        %1743 = vmatmul.bf16.gmra.mxu0 %v875
        %v1744 = vpop.f32.mrf.mxu0
        %v1745 = vadd.f32 0.0, %v1744
        %v1746 = vpop.f32.mrf.mxu0
        %v1747 = vadd.f32 0.0, %v1746
        %1748 = vmatmul.bf16.gmra.mxu0 %v878
        %v1749 = vpop.f32.mrf.mxu0
        %v1750 = vadd.f32 0.0, %v1749
        %v1751 = vpop.f32.mrf.mxu0
        %v1752 = vadd.f32 0.0, %v1751
        %1753 = vmatmul.bf16.gmra.mxu0 %v881
        %v1754 = vpop.f32.mrf.mxu0
        %v1755 = vadd.f32 0.0, %v1754
        %v1756 = vpop.f32.mrf.mxu0
        %v1757 = vadd.f32 0.0, %v1756
        %1758 = vmatmul.bf16.gmra.mxu0 %v884
        %v1759 = vpop.f32.mrf.mxu0
        %v1760 = vadd.f32 0.0, %v1759
        %v1761 = vpop.f32.mrf.mxu0
        %v1762 = vadd.f32 0.0, %v1761
        %1763 = vmatmul.bf16.gmra.mxu0 %v887
        %v1764 = vpop.f32.mrf.mxu0
        %v1765 = vadd.f32 0.0, %v1764
        %v1766 = vpop.f32.mrf.mxu0
        %v1767 = vadd.f32 0.0, %v1766
        %1768 = vdwg.mxu0
        %1769 = vmatpush.bf16.msra.mxu0 %v1213
        %1770 = vmatpush.bf16.msra.mxu0 %v1210
        %1771 = vmatpush.bf16.msra.mxu0 %v1207
        %1772 = vmatpush.bf16.msra.mxu0 %v1204
        %1773 = vmatpush.bf16.msra.mxu0 %v1201
        %1774 = vmatpush.bf16.msra.mxu0 %v1198
        %1775 = vmatpush.bf16.msra.mxu0 %v1195
        %1776 = vmatpush.bf16.msra.mxu0 %v1192
        %1777 = vmatmul.bf16.gmra.mxu0 %v855
        %v1778 = vpop.f32.mrf.mxu0
        %v1779 = vadd.f32 %v1710, %v1778
        %v1780 = vpop.f32.mrf.mxu0
        %v1781 = vadd.f32 %v1712, %v1780
        %1782 = vmatmul.bf16.gmra.mxu0 %v858
        %v1783 = vpop.f32.mrf.mxu0
        %v1784 = vadd.f32 %v1715, %v1783
        %v1785 = vpop.f32.mrf.mxu0
        %v1786 = vadd.f32 %v1717, %v1785
        %1787 = vmatmul.bf16.gmra.mxu0 %v861
        %v1788 = vpop.f32.mrf.mxu0
        %v1789 = vadd.f32 %v1720, %v1788
        %v1790 = vpop.f32.mrf.mxu0
        %v1791 = vadd.f32 %v1722, %v1790
        %1792 = vmatmul.bf16.gmra.mxu0 %v864
        %v1793 = vpop.f32.mrf.mxu0
        %v1794 = vadd.f32 %v1725, %v1793
        %v1795 = vpop.f32.mrf.mxu0
        %v1796 = vadd.f32 %v1727, %v1795
        %1797 = vmatmul.bf16.gmra.mxu0 %v867
        %v1798 = vpop.f32.mrf.mxu0
        %v1799 = vadd.f32 %v1730, %v1798
        %v1800 = vpop.f32.mrf.mxu0
        %v1801 = vadd.f32 %v1732, %v1800
        %1802 = vmatmul.bf16.gmra.mxu0 %v870
        %v1803 = vpop.f32.mrf.mxu0
        %v1804 = vadd.f32 %v1735, %v1803
        %v1805 = vpop.f32.mrf.mxu0
        %v1806 = vadd.f32 %v1737, %v1805
        %1807 = vmatmul.bf16.gmra.mxu0 %v873
        %v1808 = vpop.f32.mrf.mxu0
        %v1809 = vadd.f32 %v1740, %v1808
        %v1810 = vpop.f32.mrf.mxu0
        %v1811 = vadd.f32 %v1742, %v1810
        %1812 = vmatmul.bf16.gmra.mxu0 %v876
        %v1813 = vpop.f32.mrf.mxu0
        %v1814 = vadd.f32 %v1745, %v1813
        %v1815 = vpop.f32.mrf.mxu0
        %v1816 = vadd.f32 %v1747, %v1815
        %1817 = vmatmul.bf16.gmra.mxu0 %v879
        %v1818 = vpop.f32.mrf.mxu0
        %v1819 = vadd.f32 %v1750, %v1818
        %v1820 = vpop.f32.mrf.mxu0
        %v1821 = vadd.f32 %v1752, %v1820
        %1822 = vmatmul.bf16.gmra.mxu0 %v882
        %v1823 = vpop.f32.mrf.mxu0
        %v1824 = vadd.f32 %v1755, %v1823
        %v1825 = vpop.f32.mrf.mxu0
        %v1826 = vadd.f32 %v1757, %v1825
        %1827 = vmatmul.bf16.gmra.mxu0 %v885
        %v1828 = vpop.f32.mrf.mxu0
        %v1829 = vadd.f32 %v1760, %v1828
        %v1830 = vpop.f32.mrf.mxu0
        %v1831 = vadd.f32 %v1762, %v1830
        %1832 = vmatmul.bf16.gmra.mxu0 %v888
        %v1833 = vpop.f32.mrf.mxu0
        %v1834 = vadd.f32 %v1765, %v1833
        %v1835 = vpop.f32.mrf.mxu0
        %v1836 = vadd.f32 %v1767, %v1835
        %1837 = vdwg.mxu0
        %1838 = vmatpush.bf16.msra.mxu0 %v1237
        %1839 = vmatpush.bf16.msra.mxu0 %v1234
        %1840 = vmatpush.bf16.msra.mxu0 %v1231
        %1841 = vmatpush.bf16.msra.mxu0 %v1228
        %1842 = vmatpush.bf16.msra.mxu0 %v1225
        %1843 = vmatpush.bf16.msra.mxu0 %v1222
        %1844 = vmatpush.bf16.msra.mxu0 %v1219
        %1845 = vmatpush.bf16.msra.mxu0 %v1216
        %1846 = vmatmul.bf16.gmra.mxu0 %v856
        %v1847 = vpop.f32.mrf.mxu0
        %v1848 = vadd.f32 %v1779, %v1847
        %v1849 = vpop.f32.mrf.mxu0
        %v1850 = vadd.f32 %v1781, %v1849
        %1851 = vmatmul.bf16.gmra.mxu0 %v859
        %v1852 = vpop.f32.mrf.mxu0
        %v1853 = vadd.f32 %v1784, %v1852
        %v1854 = vpop.f32.mrf.mxu0
        %v1855 = vadd.f32 %v1786, %v1854
        %1856 = vmatmul.bf16.gmra.mxu0 %v862
        %v1857 = vpop.f32.mrf.mxu0
        %v1858 = vadd.f32 %v1789, %v1857
        %v1859 = vpop.f32.mrf.mxu0
        %v1860 = vadd.f32 %v1791, %v1859
        %1861 = vmatmul.bf16.gmra.mxu0 %v865
        %v1862 = vpop.f32.mrf.mxu0
        %v1863 = vadd.f32 %v1794, %v1862
        %v1864 = vpop.f32.mrf.mxu0
        %v1865 = vadd.f32 %v1796, %v1864
        %1866 = vmatmul.bf16.gmra.mxu0 %v868
        %v1867 = vpop.f32.mrf.mxu0
        %v1868 = vadd.f32 %v1799, %v1867
        %v1869 = vpop.f32.mrf.mxu0
        %v1870 = vadd.f32 %v1801, %v1869
        %1871 = vmatmul.bf16.gmra.mxu0 %v871
        %v1872 = vpop.f32.mrf.mxu0
        %v1873 = vadd.f32 %v1804, %v1872
        %v1874 = vpop.f32.mrf.mxu0
        %v1875 = vadd.f32 %v1806, %v1874
        %1876 = vmatmul.bf16.gmra.mxu0 %v874
        %v1877 = vpop.f32.mrf.mxu0
        %v1878 = vadd.f32 %v1809, %v1877
        %v1879 = vpop.f32.mrf.mxu0
        %v1880 = vadd.f32 %v1811, %v1879
        %1881 = vmatmul.bf16.gmra.mxu0 %v877
        %v1882 = vpop.f32.mrf.mxu0
        %v1883 = vadd.f32 %v1814, %v1882
        %v1884 = vpop.f32.mrf.mxu0
        %v1885 = vadd.f32 %v1816, %v1884
        %1886 = vmatmul.bf16.gmra.mxu0 %v880
        %v1887 = vpop.f32.mrf.mxu0
        %v1888 = vadd.f32 %v1819, %v1887
        %v1889 = vpop.f32.mrf.mxu0
        %v1890 = vadd.f32 %v1821, %v1889
        %1891 = vmatmul.bf16.gmra.mxu0 %v883
        %v1892 = vpop.f32.mrf.mxu0
        %v1893 = vadd.f32 %v1824, %v1892
        %v1894 = vpop.f32.mrf.mxu0
        %v1895 = vadd.f32 %v1826, %v1894
        %1896 = vmatmul.bf16.gmra.mxu0 %v886
        %v1897 = vpop.f32.mrf.mxu0
        %v1898 = vadd.f32 %v1829, %v1897
        %v1899 = vpop.f32.mrf.mxu0
        %v1900 = vadd.f32 %v1831, %v1899
        %1901 = vmatmul.bf16.gmra.mxu0 %v889
        %v1902 = vpop.f32.mrf.mxu0
        %v1903 = vadd.f32 %v1834, %v1902
        %v1904 = vpop.f32.mrf.mxu0
        %v1905 = vadd.f32 %v1836, %v1904
        %1906 = vdwg.mxu0
        %vm1931 = vcmask 1046528
        %v1932 = vrot.slane %v1641, 1
        %v1933 = vrot.slane %v1643, 1
        %v1934 = vsel %vm1931, %v1932, %v1933
        %v1935 = vrot.slane %v1646, 1
        %v1936 = vsel %vm1931, %v1933, %v1935
        %v1937 = vrot.slane %v1648, 1
        %v1938 = vrot.slane %v1651, 1
        %v1939 = vsel %vm1931, %v1937, %v1938
        %v1940 = vrot.slane %v1653, 1
        %v1941 = vsel %vm1931, %v1938, %v1940
        %v1942 = vrot.slane %v1656, 1
        %v1943 = vrot.slane %v1658, 1
        %v1944 = vsel %vm1931, %v1942, %v1943
        %v1945 = vrot.slane %v1661, 1
        %v1946 = vsel %vm1931, %v1943, %v1945
        %v1947 = vrot.slane %v1663, 1
        %v1948 = vrot.slane %v1666, 1
        %v1949 = vsel %vm1931, %v1947, %v1948
        %v1950 = vrot.slane %v1668, 1
        %v1951 = vsel %vm1931, %v1948, %v1950
        %v1952 = vrot.slane %v1671, 1
        %v1953 = vrot.slane %v1673, 1
        %v1954 = vsel %vm1931, %v1952, %v1953
        %v1955 = vrot.slane %v1676, 1
        %v1956 = vsel %vm1931, %v1953, %v1955
        %v1957 = vrot.slane %v1678, 1
        %v1958 = vrot.slane %v1681, 1
        %v1959 = vsel %vm1931, %v1957, %v1958
        %v1960 = vrot.slane %v1683, 1
        %v1961 = vsel %vm1931, %v1958, %v1960
        %v1962 = vrot.slane %v1686, 1
        %v1963 = vrot.slane %v1688, 1
        %v1964 = vsel %vm1931, %v1962, %v1963
        %v1965 = vrot.slane %v1691, 1
        %v1966 = vsel %vm1931, %v1963, %v1965
        %v1967 = vrot.slane %v1693, 1
        %v1968 = vrot.slane %v1696, 1
        %v1969 = vsel %vm1931, %v1967, %v1968
        %v1970 = vrot.slane %v1698, 1
        %v1971 = vsel %vm1931, %v1968, %v1970
        %v1988 = vadd.f32 %v1442, %v1934
        %v1989 = vadd.f32 %v1444, %v1936
        %v1990 = vadd.f32 %v1448, %v1939
        %v1991 = vadd.f32 %v1451, %v1941
        %v1992 = vadd.f32 %v1455, %v1944
        %v1993 = vadd.f32 %v1457, %v1946
        %v1994 = vadd.f32 %v1461, %v1949
        %v1995 = vadd.f32 %v1464, %v1951
        %v1996 = vadd.f32 %v1468, %v1954
        %v1997 = vadd.f32 %v1470, %v1956
        %v1998 = vadd.f32 %v1474, %v1959
        %v1999 = vadd.f32 %v1477, %v1961
        %v2000 = vadd.f32 %v1481, %v1964
        %v2001 = vadd.f32 %v1483, %v1966
        %v2002 = vadd.f32 %v1487, %v1969
        %v2003 = vadd.f32 %v1490, %v1971
        %vm2028 = vcmask 1045504
        %v2029 = vrot.slane %v1848, 2
        %v2030 = vrot.slane %v1850, 2
        %v2031 = vsel %vm2028, %v2029, %v2030
        %v2032 = vrot.slane %v1853, 2
        %v2033 = vsel %vm2028, %v2030, %v2032
        %v2034 = vrot.slane %v1855, 2
        %v2035 = vrot.slane %v1858, 2
        %v2036 = vsel %vm2028, %v2034, %v2035
        %v2037 = vrot.slane %v1860, 2
        %v2038 = vsel %vm2028, %v2035, %v2037
        %v2039 = vrot.slane %v1863, 2
        %v2040 = vrot.slane %v1865, 2
        %v2041 = vsel %vm2028, %v2039, %v2040
        %v2042 = vrot.slane %v1868, 2
        %v2043 = vsel %vm2028, %v2040, %v2042
        %v2044 = vrot.slane %v1870, 2
        %v2045 = vrot.slane %v1873, 2
        %v2046 = vsel %vm2028, %v2044, %v2045
        %v2047 = vrot.slane %v1875, 2
        %v2048 = vsel %vm2028, %v2045, %v2047
        %v2049 = vrot.slane %v1878, 2
        %v2050 = vrot.slane %v1880, 2
        %v2051 = vsel %vm2028, %v2049, %v2050
        %v2052 = vrot.slane %v1883, 2
        %v2053 = vsel %vm2028, %v2050, %v2052
        %v2054 = vrot.slane %v1885, 2
        %v2055 = vrot.slane %v1888, 2
        %v2056 = vsel %vm2028, %v2054, %v2055
        %v2057 = vrot.slane %v1890, 2
        %v2058 = vsel %vm2028, %v2055, %v2057
        %v2059 = vrot.slane %v1893, 2
        %v2060 = vrot.slane %v1895, 2
        %v2061 = vsel %vm2028, %v2059, %v2060
        %v2062 = vrot.slane %v1898, 2
        %v2063 = vsel %vm2028, %v2060, %v2062
        %v2064 = vrot.slane %v1900, 2
        %v2065 = vrot.slane %v1903, 2
        %v2066 = vsel %vm2028, %v2064, %v2065
        %v2067 = vrot.slane %v1905, 2
        %v2068 = vsel %vm2028, %v2065, %v2067
        %v2085 = vadd.f32 %v1988, %v2031
        %v2086 = vadd.f32 %v1989, %v2033
        %v2087 = vadd.f32 %v1990, %v2036
        %v2088 = vadd.f32 %v1991, %v2038
        %v2089 = vadd.f32 %v1992, %v2041
        %v2090 = vadd.f32 %v1993, %v2043
        %v2091 = vadd.f32 %v1994, %v2046
        %v2092 = vadd.f32 %v1995, %v2048
        %v2093 = vadd.f32 %v1996, %v2051
        %v2094 = vadd.f32 %v1997, %v2053
        %v2095 = vadd.f32 %v1998, %v2056
        %v2096 = vadd.f32 %v1999, %v2058
        %v2097 = vadd.f32 %v2000, %v2061
        %v2098 = vadd.f32 %v2001, %v2063
        %v2099 = vadd.f32 %v2002, %v2066
        %v2100 = vadd.f32 %v2003, %v2068
        %v2102 = vperm.slane %v530, 0
        %v2104 = vadd.f32 %v2085, %v2102
        %v2105 = vadd.f32 %v2086, %v2102
        %v2106 = vadd.f32 %v2087, %v2102
        %v2107 = vadd.f32 %v2088, %v2102
        %v2108 = vadd.f32 %v2089, %v2102
        %v2109 = vadd.f32 %v2090, %v2102
        %v2110 = vadd.f32 %v2091, %v2102
        %v2111 = vadd.f32 %v2092, %v2102
        %v2112 = vadd.f32 %v2093, %v2102
        %v2113 = vadd.f32 %v2094, %v2102
        %v2114 = vadd.f32 %v2095, %v2102
        %v2115 = vadd.f32 %v2096, %v2102
        %v2116 = vadd.f32 %v2097, %v2102
        %v2117 = vadd.f32 %v2098, %v2102
        %v2118 = vadd.f32 %v2099, %v2102
        %v2119 = vadd.f32 %v2100, %v2102
        %v2120 = vmax.f32 %v2104, 0.0
        %v2121 = vmax.f32 %v2105, 0.0
        %v2122 = vmax.f32 %v2106, 0.0
        %v2123 = vmax.f32 %v2107, 0.0
        %v2124 = vmax.f32 %v2108, 0.0
        %v2125 = vmax.f32 %v2109, 0.0
        %v2126 = vmax.f32 %v2110, 0.0
        %v2127 = vmax.f32 %v2111, 0.0
        %v2128 = vmax.f32 %v2112, 0.0
        %v2129 = vmax.f32 %v2113, 0.0
        %v2130 = vmax.f32 %v2114, 0.0
        %v2131 = vmax.f32 %v2115, 0.0
        %v2132 = vmax.f32 %v2116, 0.0
        %v2133 = vmax.f32 %v2117, 0.0
        %v2134 = vmax.f32 %v2118, 0.0
        %v2135 = vmax.f32 %v2119, 0.0
        %v2136 = vpack.c.bf16 %v2120, %v2120
        %v2137 = vpack.c.bf16 %v2121, %v2121
        %v2138 = vpack.c.bf16 %v2122, %v2122
        %v2139 = vpack.c.bf16 %v2123, %v2123
        %v2140 = vpack.c.bf16 %v2124, %v2124
        %v2141 = vpack.c.bf16 %v2125, %v2125
        %v2142 = vpack.c.bf16 %v2126, %v2126
        %v2143 = vpack.c.bf16 %v2127, %v2127
        %v2144 = vpack.c.bf16 %v2128, %v2128
        %v2145 = vpack.c.bf16 %v2129, %v2129
        %v2146 = vpack.c.bf16 %v2130, %v2130
        %v2147 = vpack.c.bf16 %v2131, %v2131
        %v2148 = vpack.c.bf16 %v2132, %v2132
        %v2149 = vpack.c.bf16 %v2133, %v2133
        %v2150 = vpack.c.bf16 %v2134, %v2134
        %v2151 = vpack.c.bf16 %v2135, %v2135
        %v2168 = vunpack.c.l.b16 %v2136
        %v2169 = vunpack.c.l.b16 %v2137
        %v2170 = vunpack.c.l.b16 %v2138
        %v2171 = vunpack.c.l.b16 %v2139
        %v2172 = vunpack.c.l.b16 %v2140
        %v2173 = vunpack.c.l.b16 %v2141
        %v2174 = vunpack.c.l.b16 %v2142
        %v2175 = vunpack.c.l.b16 %v2143
        %v2176 = vunpack.c.l.b16 %v2144
        %v2177 = vunpack.c.l.b16 %v2145
        %v2178 = vunpack.c.l.b16 %v2146
        %v2179 = vunpack.c.l.b16 %v2147
        %v2180 = vunpack.c.l.b16 %v2148
        %v2181 = vunpack.c.l.b16 %v2149
        %v2182 = vunpack.c.l.b16 %v2150
        %v2183 = vunpack.c.l.b16 %v2151
        %v2184 = vpack.c.b16 %v2169, %v2168
        %v2185 = vpack.c.b16 %v2171, %v2170
        %v2186 = vpack.c.b16 %v2173, %v2172
        %v2187 = vpack.c.b16 %v2175, %v2174
        %v2188 = vpack.c.b16 %v2177, %v2176
        %v2189 = vpack.c.b16 %v2179, %v2178
        %v2190 = vpack.c.b16 %v2181, %v2180
        %v2191 = vpack.c.b16 %v2183, %v2182
        %v2193 = vshrl.u32 %v2184, 16
        %v2195 = vrot.slane %v2193, 7
        %v2196 = vshll.u32 %v2184, 16
        %v2198 = vor.u32 %v2195, %v2196
        %v2200 = vshrl.u32 %v2185, 16
        %v2202 = vrot.slane %v2200, 7
        %v2203 = vshll.u32 %v2185, 16
        %v2205 = vor.u32 %v2202, %v2203
        %v2207 = vshrl.u32 %v2186, 16
        %v2209 = vrot.slane %v2207, 7
        %v2210 = vshll.u32 %v2186, 16
        %v2212 = vor.u32 %v2209, %v2210
        %v2214 = vshrl.u32 %v2187, 16
        %v2216 = vrot.slane %v2214, 7
        %v2217 = vshll.u32 %v2187, 16
        %v2219 = vor.u32 %v2216, %v2217
        %v2221 = vshrl.u32 %v2188, 16
        %v2223 = vrot.slane %v2221, 7
        %v2224 = vshll.u32 %v2188, 16
        %v2226 = vor.u32 %v2223, %v2224
        %v2228 = vshrl.u32 %v2189, 16
        %v2230 = vrot.slane %v2228, 7
        %v2231 = vshll.u32 %v2189, 16
        %v2233 = vor.u32 %v2230, %v2231
        %v2235 = vshrl.u32 %v2190, 16
        %v2237 = vrot.slane %v2235, 7
        %v2238 = vshll.u32 %v2190, 16
        %v2240 = vor.u32 %v2237, %v2238
        %v2242 = vshrl.u32 %v2191, 16
        %v2244 = vrot.slane %v2242, 7
        %v2245 = vshll.u32 %v2191, 16
        %v2247 = vor.u32 %v2244, %v2245
        %vm2264 = vcmask 1040384
        %vm2265 = vsmask.f32 256
        %vm2266 = vmand %vm2264, %vm2265
        %v2267 = vsel %vm2266, 0, %v2198
        %v2268 = vsel %vm2266, 0, %v2205
        %v2269 = vsel %vm2266, 0, %v2212
        %v2270 = vsel %vm2266, 0, %v2219
        %v2271 = vsel %vm2266, 0, %v2226
        %v2272 = vsel %vm2266, 0, %v2233
        %v2273 = vsel %vm2266, 0, %v2240
        %v2274 = vsel %vm2266, 0, %v2247
        %v2275 = vsel %vm2266, %v2195, 0
        %v2276 = vsel %vm2266, %v2202, 0
        %v2277 = vsel %vm2266, %v2209, 0
        %v2278 = vsel %vm2266, %v2216, 0
        %v2279 = vsel %vm2266, %v2223, 0
        %v2280 = vsel %vm2266, %v2230, 0
        %v2281 = vsel %vm2266, %v2237, 0
        %v2282 = vsel %vm2266, %v2244, 0
        %v2299 = vunpack.c.l.b16 %v2267
        %v2300 = vunpack.c.h.b16 %v2267
        %v2301 = vunpack.c.l.b16 %v2275
        %v2302 = vunpack.c.l.b16 %v2268
        %v2303 = vunpack.c.h.b16 %v2268
        %v2304 = vunpack.c.l.b16 %v2276
        %v2305 = vunpack.c.l.b16 %v2269
        %v2306 = vunpack.c.h.b16 %v2269
        %v2307 = vunpack.c.l.b16 %v2277
        %v2308 = vunpack.c.l.b16 %v2270
        %v2309 = vunpack.c.h.b16 %v2270
        %v2310 = vunpack.c.l.b16 %v2278
        %v2311 = vunpack.c.l.b16 %v2271
        %v2312 = vunpack.c.h.b16 %v2271
        %v2313 = vunpack.c.l.b16 %v2279
        %v2314 = vunpack.c.l.b16 %v2272
        %v2315 = vunpack.c.h.b16 %v2272
        %v2316 = vunpack.c.l.b16 %v2280
        %v2317 = vunpack.c.l.b16 %v2273
        %v2318 = vunpack.c.h.b16 %v2273
        %v2319 = vunpack.c.l.b16 %v2281
        %v2320 = vunpack.c.l.b16 %v2274
        %v2321 = vunpack.c.h.b16 %v2274
        %v2322 = vunpack.c.l.b16 %v2282
        %v2323 = vpack.c.b16 %v2299, %v2299
        %v2324 = vpack.c.b16 %v2300, %v2300
        %v2325 = vpack.c.b16 %v2301, %v2301
        %v2326 = vpack.c.b16 %v2302, %v2302
        %v2327 = vpack.c.b16 %v2303, %v2303
        %v2328 = vpack.c.b16 %v2304, %v2304
        %v2329 = vpack.c.b16 %v2305, %v2305
        %v2330 = vpack.c.b16 %v2306, %v2306
        %v2331 = vpack.c.b16 %v2307, %v2307
        %v2332 = vpack.c.b16 %v2308, %v2308
        %v2333 = vpack.c.b16 %v2309, %v2309
        %v2334 = vpack.c.b16 %v2310, %v2310
        %v2335 = vpack.c.b16 %v2311, %v2311
        %v2336 = vpack.c.b16 %v2312, %v2312
        %v2337 = vpack.c.b16 %v2313, %v2313
        %v2338 = vpack.c.b16 %v2314, %v2314
        %v2339 = vpack.c.b16 %v2315, %v2315
        %v2340 = vpack.c.b16 %v2316, %v2316
        %v2341 = vpack.c.b16 %v2317, %v2317
        %v2342 = vpack.c.b16 %v2318, %v2318
        %v2343 = vpack.c.b16 %v2319, %v2319
        %v2344 = vpack.c.b16 %v2320, %v2320
        %v2345 = vpack.c.b16 %v2321, %v2321
        %v2346 = vpack.c.b16 %v2322, %v2322
        %s2371 = smul.addr %s559, 4
        %s2372 = scalar_lea.vmem [#allocation3], %s2371
        %2373 = vst [vmem:[%s2372] sm:$0xf] %v2323
        %2374 = vst [vmem:[%s2372 + $0x4] sm:$0xf] %v2324
        %2375 = vst [vmem:[%s2372 + $0x8] sm:$0xf] %v2325
        %2376 = vst [vmem:[%s2372 + $0xc] sm:$0xf] %v2326
        %2377 = vst [vmem:[%s2372 + $0x10] sm:$0xf] %v2327
        %2378 = vst [vmem:[%s2372 + $0x14] sm:$0xf] %v2328
        %2379 = vst [vmem:[%s2372 + $0x18] sm:$0xf] %v2329
        %2380 = vst [vmem:[%s2372 + $0x1c] sm:$0xf] %v2330
        %2381 = vst [vmem:[%s2372 + $0x20] sm:$0xf] %v2331
        %2382 = vst [vmem:[%s2372 + $0x24] sm:$0xf] %v2332
        %2383 = vst [vmem:[%s2372 + $0x28] sm:$0xf] %v2333
        %2384 = vst [vmem:[%s2372 + $0x2c] sm:$0xf] %v2334
        %2385 = vst [vmem:[%s2372 + $0x30] sm:$0xf] %v2335
        %2386 = vst [vmem:[%s2372 + $0x34] sm:$0xf] %v2336
        %2387 = vst [vmem:[%s2372 + $0x38] sm:$0xf] %v2337
        %2388 = vst [vmem:[%s2372 + $0x3c] sm:$0xf] %v2338
        %2389 = vst [vmem:[%s2372 + $0x40] sm:$0xf] %v2339
        %2390 = vst [vmem:[%s2372 + $0x44] sm:$0xf] %v2340
        %2391 = vst [vmem:[%s2372 + $0x48] sm:$0xf] %v2341
        %2392 = vst [vmem:[%s2372 + $0x4c] sm:$0xf] %v2342
        %2393 = vst [vmem:[%s2372 + $0x50] sm:$0xf] %v2343
        %2394 = vst [vmem:[%s2372 + $0x54] sm:$0xf] %v2344
        %2395 = vst [vmem:[%s2372 + $0x58] sm:$0xf] %v2345
        %2396 = vst [vmem:[%s2372 + $0x5c] sm:$0xf] %v2346
      $region52: #{basic_block_forward.1} parent=39 // loop_footer
        %s528 = sadd.s32 1, %s524
      $region53: #{basic_block_forward.1} parent=39 // loop_footer_branch
        %523 = sbr.rel target = $region49
      $region54: #{basic_block_forward.1} parent=39 // loop_exit
        _
      loop: start=0, step=1, limit=2
      $region55: #{basic_block_forward.1} parent=39 // loop_pre_header
        _
      $region56: #{basic_block_forward.1} parent=39 // loop_header
        %s2398 = sphi 0, %s2402
        %p2399 = scmp.ge.s32.totalorder %s2398, 2
      $region57: #{basic_block_forward.1} parent=39 // loop_header_branch
        %2401 = sbr.rel (%p2399) target = $region61
      $region58: #{basic_block_forward.1} parent=39 // loop_body
        %s2403 = smul.u32 %s2398, 8
        %v2404 = vld [vmem:[%s4] sm:$0x1]
        %s2405 = smul.u32 %s2403, 3
        %s2406 = smul.addr %s2405, 4
        %s2407 = scalar_lea.vmem [#allocation3], %s2406
        %v2408 = vld [vmem:[%s2407] sm:$0xf]
        %v2409 = vld [vmem:[%s2407 + $0x4] sm:$0xf]
        %v2410 = vld [vmem:[%s2407 + $0x8] sm:$0xf]
        %v2411 = vld [vmem:[%s2407 + $0xc] sm:$0xf]
        %v2412 = vld [vmem:[%s2407 + $0x10] sm:$0xf]
        %v2413 = vld [vmem:[%s2407 + $0x14] sm:$0xf]
        %v2414 = vld [vmem:[%s2407 + $0x18] sm:$0xf]
        %v2415 = vld [vmem:[%s2407 + $0x1c] sm:$0xf]
        %v2416 = vld [vmem:[%s2407 + $0x20] sm:$0xf]
        %v2417 = vld [vmem:[%s2407 + $0x24] sm:$0xf]
        %v2418 = vld [vmem:[%s2407 + $0x28] sm:$0xf]
        %v2419 = vld [vmem:[%s2407 + $0x2c] sm:$0xf]
        %v2420 = vld [vmem:[%s2407 + $0x30] sm:$0xf]
        %v2421 = vld [vmem:[%s2407 + $0x34] sm:$0xf]
        %v2422 = vld [vmem:[%s2407 + $0x38] sm:$0xf]
        %v2423 = vld [vmem:[%s2407 + $0x3c] sm:$0xf]
        %v2424 = vld [vmem:[%s2407 + $0x40] sm:$0xf]
        %v2425 = vld [vmem:[%s2407 + $0x44] sm:$0xf]
        %v2426 = vld [vmem:[%s2407 + $0x48] sm:$0xf]
        %v2427 = vld [vmem:[%s2407 + $0x4c] sm:$0xf]
        %v2428 = vld [vmem:[%s2407 + $0x50] sm:$0xf]
        %v2429 = vld [vmem:[%s2407 + $0x54] sm:$0xf]
        %v2430 = vld [vmem:[%s2407 + $0x58] sm:$0xf]
        %v2431 = vld [vmem:[%s2407 + $0x5c] sm:$0xf]
        %s2432 = sadd.s32 %s2403, 1
        %s2433 = smul.u32 %s2432, 3
        %s2434 = smul.addr %s2433, 4
        %s2435 = scalar_lea.vmem [#allocation3], %s2434
        %v2436 = vld [vmem:[%s2435] sm:$0xf]
        %v2437 = vld [vmem:[%s2435 + $0x4] sm:$0xf]
        %v2438 = vld [vmem:[%s2435 + $0x8] sm:$0xf]
        %v2439 = vld [vmem:[%s2435 + $0xc] sm:$0xf]
        %v2440 = vld [vmem:[%s2435 + $0x10] sm:$0xf]
        %v2441 = vld [vmem:[%s2435 + $0x14] sm:$0xf]
        %v2442 = vld [vmem:[%s2435 + $0x18] sm:$0xf]
        %v2443 = vld [vmem:[%s2435 + $0x1c] sm:$0xf]
        %v2444 = vld [vmem:[%s2435 + $0x20] sm:$0xf]
        %v2445 = vld [vmem:[%s2435 + $0x24] sm:$0xf]
        %v2446 = vld [vmem:[%s2435 + $0x28] sm:$0xf]
        %v2447 = vld [vmem:[%s2435 + $0x2c] sm:$0xf]
        %v2448 = vld [vmem:[%s2435 + $0x30] sm:$0xf]
        %v2449 = vld [vmem:[%s2435 + $0x34] sm:$0xf]
        %v2450 = vld [vmem:[%s2435 + $0x38] sm:$0xf]
        %v2451 = vld [vmem:[%s2435 + $0x3c] sm:$0xf]
        %v2452 = vld [vmem:[%s2435 + $0x40] sm:$0xf]
        %v2453 = vld [vmem:[%s2435 + $0x44] sm:$0xf]
        %v2454 = vld [vmem:[%s2435 + $0x48] sm:$0xf]
        %v2455 = vld [vmem:[%s2435 + $0x4c] sm:$0xf]
        %v2456 = vld [vmem:[%s2435 + $0x50] sm:$0xf]
        %v2457 = vld [vmem:[%s2435 + $0x54] sm:$0xf]
        %v2458 = vld [vmem:[%s2435 + $0x58] sm:$0xf]
        %v2459 = vld [vmem:[%s2435 + $0x5c] sm:$0xf]
        %s2460 = sadd.s32 %s2403, 2
        %s2461 = smul.u32 %s2460, 3
        %s2462 = smul.addr %s2461, 4
        %s2463 = scalar_lea.vmem [#allocation3], %s2462
        %v2464 = vld [vmem:[%s2463] sm:$0xf]
        %v2465 = vld [vmem:[%s2463 + $0x4] sm:$0xf]
        %v2466 = vld [vmem:[%s2463 + $0x8] sm:$0xf]
        %v2467 = vld [vmem:[%s2463 + $0xc] sm:$0xf]
        %v2468 = vld [vmem:[%s2463 + $0x10] sm:$0xf]
        %v2469 = vld [vmem:[%s2463 + $0x14] sm:$0xf]
        %v2470 = vld [vmem:[%s2463 + $0x18] sm:$0xf]
        %v2471 = vld [vmem:[%s2463 + $0x1c] sm:$0xf]
        %v2472 = vld [vmem:[%s2463 + $0x20] sm:$0xf]
        %v2473 = vld [vmem:[%s2463 + $0x24] sm:$0xf]
        %v2474 = vld [vmem:[%s2463 + $0x28] sm:$0xf]
        %v2475 = vld [vmem:[%s2463 + $0x2c] sm:$0xf]
        %v2476 = vld [vmem:[%s2463 + $0x30] sm:$0xf]
        %v2477 = vld [vmem:[%s2463 + $0x34] sm:$0xf]
        %v2478 = vld [vmem:[%s2463 + $0x38] sm:$0xf]
        %v2479 = vld [vmem:[%s2463 + $0x3c] sm:$0xf]
        %v2480 = vld [vmem:[%s2463 + $0x40] sm:$0xf]
        %v2481 = vld [vmem:[%s2463 + $0x44] sm:$0xf]
        %v2482 = vld [vmem:[%s2463 + $0x48] sm:$0xf]
        %v2483 = vld [vmem:[%s2463 + $0x4c] sm:$0xf]
        %v2484 = vld [vmem:[%s2463 + $0x50] sm:$0xf]
        %v2485 = vld [vmem:[%s2463 + $0x54] sm:$0xf]
        %v2486 = vld [vmem:[%s2463 + $0x58] sm:$0xf]
        %v2487 = vld [vmem:[%s2463 + $0x5c] sm:$0xf]
        %v2512 = vunpack.c.l.b16 %v2408
        %v2513 = vunpack.c.l.b16 %v2409
        %v2514 = vunpack.c.l.b16 %v2410
        %v2515 = vunpack.c.l.b16 %v2411
        %v2516 = vunpack.c.l.b16 %v2412
        %v2517 = vunpack.c.l.b16 %v2413
        %v2518 = vunpack.c.l.b16 %v2414
        %v2519 = vunpack.c.l.b16 %v2415
        %v2520 = vunpack.c.l.b16 %v2416
        %v2521 = vunpack.c.l.b16 %v2417
        %v2522 = vunpack.c.l.b16 %v2418
        %v2523 = vunpack.c.l.b16 %v2419
        %v2524 = vunpack.c.l.b16 %v2420
        %v2525 = vunpack.c.l.b16 %v2421
        %v2526 = vunpack.c.l.b16 %v2422
        %v2527 = vunpack.c.l.b16 %v2423
        %v2528 = vunpack.c.l.b16 %v2424
        %v2529 = vunpack.c.l.b16 %v2425
        %v2530 = vunpack.c.l.b16 %v2426
        %v2531 = vunpack.c.l.b16 %v2427
        %v2532 = vunpack.c.l.b16 %v2428
        %v2533 = vunpack.c.l.b16 %v2429
        %v2534 = vunpack.c.l.b16 %v2430
        %v2535 = vunpack.c.l.b16 %v2431
        %v2560 = vunpack.c.l.b16 %v2436
        %v2561 = vunpack.c.l.b16 %v2437
        %v2562 = vunpack.c.l.b16 %v2438
        %v2563 = vunpack.c.l.b16 %v2439
        %v2564 = vunpack.c.l.b16 %v2440
        %v2565 = vunpack.c.l.b16 %v2441
        %v2566 = vunpack.c.l.b16 %v2442
        %v2567 = vunpack.c.l.b16 %v2443
        %v2568 = vunpack.c.l.b16 %v2444
        %v2569 = vunpack.c.l.b16 %v2445
        %v2570 = vunpack.c.l.b16 %v2446
        %v2571 = vunpack.c.l.b16 %v2447
        %v2572 = vunpack.c.l.b16 %v2448
        %v2573 = vunpack.c.l.b16 %v2449
        %v2574 = vunpack.c.l.b16 %v2450
        %v2575 = vunpack.c.l.b16 %v2451
        %v2576 = vunpack.c.l.b16 %v2452
        %v2577 = vunpack.c.l.b16 %v2453
        %v2578 = vunpack.c.l.b16 %v2454
        %v2579 = vunpack.c.l.b16 %v2455
        %v2580 = vunpack.c.l.b16 %v2456
        %v2581 = vunpack.c.l.b16 %v2457
        %v2582 = vunpack.c.l.b16 %v2458
        %v2583 = vunpack.c.l.b16 %v2459
        %v2608 = vunpack.c.l.b16 %v2464
        %v2609 = vunpack.c.l.b16 %v2465
        %v2610 = vunpack.c.l.b16 %v2466
        %v2611 = vunpack.c.l.b16 %v2467
        %v2612 = vunpack.c.l.b16 %v2468
        %v2613 = vunpack.c.l.b16 %v2469
        %v2614 = vunpack.c.l.b16 %v2470
        %v2615 = vunpack.c.l.b16 %v2471
        %v2616 = vunpack.c.l.b16 %v2472
        %v2617 = vunpack.c.l.b16 %v2473
        %v2618 = vunpack.c.l.b16 %v2474
        %v2619 = vunpack.c.l.b16 %v2475
        %v2620 = vunpack.c.l.b16 %v2476
        %v2621 = vunpack.c.l.b16 %v2477
        %v2622 = vunpack.c.l.b16 %v2478
        %v2623 = vunpack.c.l.b16 %v2479
        %v2624 = vunpack.c.l.b16 %v2480
        %v2625 = vunpack.c.l.b16 %v2481
        %v2626 = vunpack.c.l.b16 %v2482
        %v2627 = vunpack.c.l.b16 %v2483
        %v2628 = vunpack.c.l.b16 %v2484
        %v2629 = vunpack.c.l.b16 %v2485
        %v2630 = vunpack.c.l.b16 %v2486
        %v2631 = vunpack.c.l.b16 %v2487
        %v2632 = vld [vmem:[%s3] sm:$0xff]
        %v2633 = vld [vmem:[%s3 + $0x8] sm:$0xf]
        %v2634 = vld [vmem:[%s3 + $0xc] sm:$0xff]
        %v2635 = vld [vmem:[%s3 + $0x14] sm:$0xf]
        %v2636 = vld [vmem:[%s3 + $0x18] sm:$0xff]
        %v2637 = vld [vmem:[%s3 + $0x20] sm:$0xf]
        %v2638 = vld [vmem:[%s3 + $0x24] sm:$0xff]
        %v2639 = vld [vmem:[%s3 + $0x2c] sm:$0xf]
        %v2640 = vld [vmem:[%s3 + $0x30] sm:$0xff]
        %v2641 = vld [vmem:[%s3 + $0x38] sm:$0xf]
        %v2642 = vld [vmem:[%s3 + $0x3c] sm:$0xff]
        %v2643 = vld [vmem:[%s3 + $0x44] sm:$0xf]
        %v2644 = vld [vmem:[%s3 + $0x48] sm:$0xff]
        %v2645 = vld [vmem:[%s3 + $0x50] sm:$0xf]
        %v2646 = vld [vmem:[%s3 + $0x54] sm:$0xff]
        %v2647 = vld [vmem:[%s3 + $0x5c] sm:$0xf]
        %v2648 = vld [vmem:[%s3 + $0x60] sm:$0xff]
        %v2649 = vld [vmem:[%s3 + $0x68] sm:$0xf]
        %v2650 = vld [vmem:[%s3 + $0x6c] sm:$0xff]
        %v2651 = vld [vmem:[%s3 + $0x74] sm:$0xf]
        %v2652 = vld [vmem:[%s3 + $0x78] sm:$0xff]
        %v2653 = vld [vmem:[%s3 + $0x80] sm:$0xf]
        %v2654 = vld [vmem:[%s3 + $0x84] sm:$0xff]
        %v2655 = vld [vmem:[%s3 + $0x8c] sm:$0xf]
        %v2656 = vld [vmem:[%s3 + $0x90] sm:$0xff]
        %v2657 = vld [vmem:[%s3 + $0x98] sm:$0xf]
        %v2658 = vld [vmem:[%s3 + $0x9c] sm:$0xff]
        %v2659 = vld [vmem:[%s3 + $0xa4] sm:$0xf]
        %v2660 = vld [vmem:[%s3 + $0xa8] sm:$0xff]
        %v2661 = vld [vmem:[%s3 + $0xb0] sm:$0xf]
        %v2662 = vld [vmem:[%s3 + $0xb4] sm:$0xff]
        %v2663 = vld [vmem:[%s3 + $0xbc] sm:$0xf]
        %v2664 = vld [vmem:[%s3 + $0xc0] sm:$0xff]
        %v2665 = vld [vmem:[%s3 + $0xc8] sm:$0xf]
        %v2666 = vld [vmem:[%s3 + $0xcc] sm:$0xff]
        %v2667 = vld [vmem:[%s3 + $0xd4] sm:$0xf]
        %v2668 = vld [vmem:[%s3 + $0xd8] sm:$0xff]
        %v2669 = vld [vmem:[%s3 + $0xe0] sm:$0xf]
        %v2670 = vld [vmem:[%s3 + $0xe4] sm:$0xff]
        %v2671 = vld [vmem:[%s3 + $0xec] sm:$0xf]
        %v2672 = vld [vmem:[%s3 + $0xf0] sm:$0xff]
        %v2673 = vld [vmem:[%s3 + $0xf8] sm:$0xf]
        %v2674 = vld [vmem:[%s3 + $0xfc] sm:$0xff]
        %v2675 = vld [vmem:[%s3 + $0x104] sm:$0xf]
        %v2676 = vld [vmem:[%s3 + $0x108] sm:$0xff]
        %v2677 = vld [vmem:[%s3 + $0x110] sm:$0xf]
        %v2678 = vld [vmem:[%s3 + $0x114] sm:$0xff]
        %v2679 = vld [vmem:[%s3 + $0x11c] sm:$0xf]
        %v2680 = vld [vmem:[%s3 + $0x120] sm:$0xff]
        %v2681 = vld [vmem:[%s3 + $0x128] sm:$0xf]
        %v2682 = vld [vmem:[%s3 + $0x12c] sm:$0xff]
        %v2683 = vld [vmem:[%s3 + $0x134] sm:$0xf]
        %v2684 = vld [vmem:[%s3 + $0x138] sm:$0xff]
        %v2685 = vld [vmem:[%s3 + $0x140] sm:$0xf]
        %v2686 = vld [vmem:[%s3 + $0x144] sm:$0xff]
        %v2687 = vld [vmem:[%s3 + $0x14c] sm:$0xf]
        %v2688 = vld [vmem:[%s3 + $0x150] sm:$0xff]
        %v2689 = vld [vmem:[%s3 + $0x158] sm:$0xf]
        %v2690 = vld [vmem:[%s3 + $0x15c] sm:$0xff]
        %v2691 = vld [vmem:[%s3 + $0x164] sm:$0xf]
        %v2692 = vld [vmem:[%s3 + $0x168] sm:$0xff]
        %v2693 = vld [vmem:[%s3 + $0x170] sm:$0xf]
        %v2694 = vld [vmem:[%s3 + $0x174] sm:$0xff]
        %v2695 = vld [vmem:[%s3 + $0x17c] sm:$0xf]
        %v2696 = vld [vmem:[%s3 + $0x180] sm:$0xff]
        %v2697 = vld [vmem:[%s3 + $0x188] sm:$0xf]
        %v2698 = vld [vmem:[%s3 + $0x18c] sm:$0xff]
        %v2699 = vld [vmem:[%s3 + $0x194] sm:$0xf]
        %v2700 = vld [vmem:[%s3 + $0x198] sm:$0xff]
        %v2701 = vld [vmem:[%s3 + $0x1a0] sm:$0xf]
        %v2702 = vld [vmem:[%s3 + $0x1a4] sm:$0xff]
        %v2703 = vld [vmem:[%s3 + $0x1ac] sm:$0xf]
        %v2704 = vld [vmem:[%s3 + $0x1b0] sm:$0xff]
        %v2705 = vld [vmem:[%s3 + $0x1b8] sm:$0xf]
        %v2706 = vld [vmem:[%s3 + $0x1bc] sm:$0xff]
        %v2707 = vld [vmem:[%s3 + $0x1c4] sm:$0xf]
        %v2708 = vld [vmem:[%s3 + $0x1c8] sm:$0xff]
        %v2709 = vld [vmem:[%s3 + $0x1d0] sm:$0xf]
        %v2710 = vld [vmem:[%s3 + $0x1d4] sm:$0xff]
        %v2711 = vld [vmem:[%s3 + $0x1dc] sm:$0xf]
        %v2712 = vld [vmem:[%s3 + $0x1e0] sm:$0xff]
        %v2713 = vld [vmem:[%s3 + $0x1e8] sm:$0xf]
        %v2714 = vld [vmem:[%s3 + $0x1ec] sm:$0xff]
        %v2715 = vld [vmem:[%s3 + $0x1f4] sm:$0xf]
        %v2716 = vld [vmem:[%s3 + $0x1f8] sm:$0xff]
        %v2717 = vld [vmem:[%s3 + $0x200] sm:$0xf]
        %v2718 = vld [vmem:[%s3 + $0x204] sm:$0xff]
        %v2719 = vld [vmem:[%s3 + $0x20c] sm:$0xf]
        %v2720 = vld [vmem:[%s3 + $0x210] sm:$0xff]
        %v2721 = vld [vmem:[%s3 + $0x218] sm:$0xf]
        %v2722 = vld [vmem:[%s3 + $0x21c] sm:$0xff]
        %v2723 = vld [vmem:[%s3 + $0x224] sm:$0xf]
        %v2724 = vld [vmem:[%s3 + $0x228] sm:$0xff]
        %v2725 = vld [vmem:[%s3 + $0x230] sm:$0xf]
        %v2726 = vld [vmem:[%s3 + $0x234] sm:$0xff]
        %v2727 = vld [vmem:[%s3 + $0x23c] sm:$0xf]
        %v2728 = vpack.c.b16 %v2513, %v2512
        %v2729 = vpack.c.b16 %v2561, %v2560
        %v2730 = vpack.c.b16 %v2609, %v2608
        %v2731 = vpack.c.b16 %v2515, %v2514
        %v2732 = vpack.c.b16 %v2563, %v2562
        %v2733 = vpack.c.b16 %v2611, %v2610
        %v2734 = vpack.c.b16 %v2517, %v2516
        %v2735 = vpack.c.b16 %v2565, %v2564
        %v2736 = vpack.c.b16 %v2613, %v2612
        %v2737 = vpack.c.b16 %v2519, %v2518
        %v2738 = vpack.c.b16 %v2567, %v2566
        %v2739 = vpack.c.b16 %v2615, %v2614
        %v2740 = vpack.c.b16 %v2521, %v2520
        %v2741 = vpack.c.b16 %v2569, %v2568
        %v2742 = vpack.c.b16 %v2617, %v2616
        %v2743 = vpack.c.b16 %v2523, %v2522
        %v2744 = vpack.c.b16 %v2571, %v2570
        %v2745 = vpack.c.b16 %v2619, %v2618
        %v2746 = vpack.c.b16 %v2525, %v2524
        %v2747 = vpack.c.b16 %v2573, %v2572
        %v2748 = vpack.c.b16 %v2621, %v2620
        %v2749 = vpack.c.b16 %v2527, %v2526
        %v2750 = vpack.c.b16 %v2575, %v2574
        %v2751 = vpack.c.b16 %v2623, %v2622
        %v2752 = vpack.c.b16 %v2529, %v2528
        %v2753 = vpack.c.b16 %v2577, %v2576
        %v2754 = vpack.c.b16 %v2625, %v2624
        %v2755 = vpack.c.b16 %v2531, %v2530
        %v2756 = vpack.c.b16 %v2579, %v2578
        %v2757 = vpack.c.b16 %v2627, %v2626
        %v2758 = vpack.c.b16 %v2533, %v2532
        %v2759 = vpack.c.b16 %v2581, %v2580
        %v2760 = vpack.c.b16 %v2629, %v2628
        %v2761 = vpack.c.b16 %v2535, %v2534
        %v2762 = vpack.c.b16 %v2583, %v2582
        %v2763 = vpack.c.b16 %v2631, %v2630
        %v2896 = vunpack.c.l.b16 %v2632
        %v2897 = vunpack.c.h.b16 %v2632
        %v2898 = vunpack.c.l.b16 %v2633
        %v2899 = vunpack.c.l.b16 %v2634
        %v2900 = vunpack.c.h.b16 %v2634
        %v2901 = vunpack.c.l.b16 %v2635
        %v2902 = vunpack.c.l.b16 %v2636
        %v2903 = vunpack.c.h.b16 %v2636
        %v2904 = vunpack.c.l.b16 %v2637
        %v2905 = vunpack.c.l.b16 %v2638
        %v2906 = vunpack.c.h.b16 %v2638
        %v2907 = vunpack.c.l.b16 %v2639
        %v2908 = vunpack.c.l.b16 %v2640
        %v2909 = vunpack.c.h.b16 %v2640
        %v2910 = vunpack.c.l.b16 %v2641
        %v2911 = vunpack.c.l.b16 %v2642
        %v2912 = vunpack.c.h.b16 %v2642
        %v2913 = vunpack.c.l.b16 %v2643
        %v2914 = vunpack.c.l.b16 %v2644
        %v2915 = vunpack.c.h.b16 %v2644
        %v2916 = vunpack.c.l.b16 %v2645
        %v2917 = vunpack.c.l.b16 %v2646
        %v2918 = vunpack.c.h.b16 %v2646
        %v2919 = vunpack.c.l.b16 %v2647
        %v2920 = vunpack.c.l.b16 %v2648
        %v2921 = vunpack.c.h.b16 %v2648
        %v2922 = vunpack.c.l.b16 %v2649
        %v2923 = vunpack.c.l.b16 %v2650
        %v2924 = vunpack.c.h.b16 %v2650
        %v2925 = vunpack.c.l.b16 %v2651
        %v2926 = vunpack.c.l.b16 %v2652
        %v2927 = vunpack.c.h.b16 %v2652
        %v2928 = vunpack.c.l.b16 %v2653
        %v2929 = vunpack.c.l.b16 %v2654
        %v2930 = vunpack.c.h.b16 %v2654
        %v2931 = vunpack.c.l.b16 %v2655
        %v2932 = vunpack.c.l.b16 %v2656
        %v2933 = vunpack.c.h.b16 %v2656
        %v2934 = vunpack.c.l.b16 %v2657
        %v2935 = vunpack.c.l.b16 %v2658
        %v2936 = vunpack.c.h.b16 %v2658
        %v2937 = vunpack.c.l.b16 %v2659
        %v2938 = vunpack.c.l.b16 %v2660
        %v2939 = vunpack.c.h.b16 %v2660
        %v2940 = vunpack.c.l.b16 %v2661
        %v2941 = vunpack.c.l.b16 %v2662
        %v2942 = vunpack.c.h.b16 %v2662
        %v2943 = vunpack.c.l.b16 %v2663
        %v2944 = vunpack.c.l.b16 %v2664
        %v2945 = vunpack.c.h.b16 %v2664
        %v2946 = vunpack.c.l.b16 %v2665
        %v2947 = vunpack.c.l.b16 %v2666
        %v2948 = vunpack.c.h.b16 %v2666
        %v2949 = vunpack.c.l.b16 %v2667
        %v2950 = vunpack.c.l.b16 %v2668
        %v2951 = vunpack.c.h.b16 %v2668
        %v2952 = vunpack.c.l.b16 %v2669
        %v2953 = vunpack.c.l.b16 %v2670
        %v2954 = vunpack.c.h.b16 %v2670
        %v2955 = vunpack.c.l.b16 %v2671
        %v2956 = vunpack.c.l.b16 %v2672
        %v2957 = vunpack.c.h.b16 %v2672
        %v2958 = vunpack.c.l.b16 %v2673
        %v2959 = vunpack.c.l.b16 %v2674
        %v2960 = vunpack.c.h.b16 %v2674
        %v2961 = vunpack.c.l.b16 %v2675
        %v2962 = vunpack.c.l.b16 %v2676
        %v2963 = vunpack.c.h.b16 %v2676
        %v2964 = vunpack.c.l.b16 %v2677
        %v2965 = vunpack.c.l.b16 %v2678
        %v2966 = vunpack.c.h.b16 %v2678
        %v2967 = vunpack.c.l.b16 %v2679
        %v2968 = vunpack.c.l.b16 %v2680
        %v2969 = vunpack.c.h.b16 %v2680
        %v2970 = vunpack.c.l.b16 %v2681
        %v2971 = vunpack.c.l.b16 %v2682
        %v2972 = vunpack.c.h.b16 %v2682
        %v2973 = vunpack.c.l.b16 %v2683
        %v2974 = vunpack.c.l.b16 %v2684
        %v2975 = vunpack.c.h.b16 %v2684
        %v2976 = vunpack.c.l.b16 %v2685
        %v2977 = vunpack.c.l.b16 %v2686
        %v2978 = vunpack.c.h.b16 %v2686
        %v2979 = vunpack.c.l.b16 %v2687
        %v2980 = vunpack.c.l.b16 %v2688
        %v2981 = vunpack.c.h.b16 %v2688
        %v2982 = vunpack.c.l.b16 %v2689
        %v2983 = vunpack.c.l.b16 %v2690
        %v2984 = vunpack.c.h.b16 %v2690
        %v2985 = vunpack.c.l.b16 %v2691
        %v2986 = vunpack.c.l.b16 %v2692
        %v2987 = vunpack.c.h.b16 %v2692
        %v2988 = vunpack.c.l.b16 %v2693
        %v2989 = vunpack.c.l.b16 %v2694
        %v2990 = vunpack.c.h.b16 %v2694
        %v2991 = vunpack.c.l.b16 %v2695
        %v2992 = vunpack.c.l.b16 %v2696
        %v2993 = vunpack.c.h.b16 %v2696
        %v2994 = vunpack.c.l.b16 %v2697
        %v2995 = vunpack.c.l.b16 %v2698
        %v2996 = vunpack.c.h.b16 %v2698
        %v2997 = vunpack.c.l.b16 %v2699
        %v2998 = vunpack.c.l.b16 %v2700
        %v2999 = vunpack.c.h.b16 %v2700
        %v3000 = vunpack.c.l.b16 %v2701
        %v3001 = vunpack.c.l.b16 %v2702
        %v3002 = vunpack.c.h.b16 %v2702
        %v3003 = vunpack.c.l.b16 %v2703
        %v3004 = vunpack.c.l.b16 %v2704
        %v3005 = vunpack.c.h.b16 %v2704
        %v3006 = vunpack.c.l.b16 %v2705
        %v3007 = vunpack.c.l.b16 %v2706
        %v3008 = vunpack.c.h.b16 %v2706
        %v3009 = vunpack.c.l.b16 %v2707
        %v3010 = vunpack.c.l.b16 %v2708
        %v3011 = vunpack.c.h.b16 %v2708
        %v3012 = vunpack.c.l.b16 %v2709
        %v3013 = vunpack.c.l.b16 %v2710
        %v3014 = vunpack.c.h.b16 %v2710
        %v3015 = vunpack.c.l.b16 %v2711
        %v3016 = vunpack.c.l.b16 %v2712
        %v3017 = vunpack.c.h.b16 %v2712
        %v3018 = vunpack.c.l.b16 %v2713
        %v3019 = vunpack.c.l.b16 %v2714
        %v3020 = vunpack.c.h.b16 %v2714
        %v3021 = vunpack.c.l.b16 %v2715
        %v3022 = vunpack.c.l.b16 %v2716
        %v3023 = vunpack.c.h.b16 %v2716
        %v3024 = vunpack.c.l.b16 %v2717
        %v3025 = vunpack.c.l.b16 %v2718
        %v3026 = vunpack.c.h.b16 %v2718
        %v3027 = vunpack.c.l.b16 %v2719
        %v3028 = vunpack.c.l.b16 %v2720
        %v3029 = vunpack.c.h.b16 %v2720
        %v3030 = vunpack.c.l.b16 %v2721
        %v3031 = vunpack.c.l.b16 %v2722
        %v3032 = vunpack.c.h.b16 %v2722
        %v3033 = vunpack.c.l.b16 %v2723
        %v3034 = vunpack.c.l.b16 %v2724
        %v3035 = vunpack.c.h.b16 %v2724
        %v3036 = vunpack.c.l.b16 %v2725
        %v3037 = vunpack.c.l.b16 %v2726
        %v3038 = vunpack.c.h.b16 %v2726
        %v3039 = vunpack.c.l.b16 %v2727
        %v3040 = vpack.c.b16 %v2899, %v2896
        %v3041 = vpack.c.b16 %v2900, %v2897
        %v3042 = vpack.c.b16 %v2901, %v2898
        %v3043 = vpack.c.b16 %v2905, %v2902
        %v3044 = vpack.c.b16 %v2906, %v2903
        %v3045 = vpack.c.b16 %v2907, %v2904
        %v3046 = vpack.c.b16 %v2911, %v2908
        %v3047 = vpack.c.b16 %v2912, %v2909
        %v3048 = vpack.c.b16 %v2913, %v2910
        %v3049 = vpack.c.b16 %v2917, %v2914
        %v3050 = vpack.c.b16 %v2918, %v2915
        %v3051 = vpack.c.b16 %v2919, %v2916
        %v3052 = vpack.c.b16 %v2923, %v2920
        %v3053 = vpack.c.b16 %v2924, %v2921
        %v3054 = vpack.c.b16 %v2925, %v2922
        %v3055 = vpack.c.b16 %v2929, %v2926
        %v3056 = vpack.c.b16 %v2930, %v2927
        %v3057 = vpack.c.b16 %v2931, %v2928
        %v3058 = vpack.c.b16 %v2935, %v2932
        %v3059 = vpack.c.b16 %v2936, %v2933
        %v3060 = vpack.c.b16 %v2937, %v2934
        %v3061 = vpack.c.b16 %v2941, %v2938
        %v3062 = vpack.c.b16 %v2942, %v2939
        %v3063 = vpack.c.b16 %v2943, %v2940
        %v3064 = vpack.c.b16 %v2947, %v2944
        %v3065 = vpack.c.b16 %v2948, %v2945
        %v3066 = vpack.c.b16 %v2949, %v2946
        %v3067 = vpack.c.b16 %v2953, %v2950
        %v3068 = vpack.c.b16 %v2954, %v2951
        %v3069 = vpack.c.b16 %v2955, %v2952
        %v3070 = vpack.c.b16 %v2959, %v2956
        %v3071 = vpack.c.b16 %v2960, %v2957
        %v3072 = vpack.c.b16 %v2961, %v2958
        %v3073 = vpack.c.b16 %v2965, %v2962
        %v3074 = vpack.c.b16 %v2966, %v2963
        %v3075 = vpack.c.b16 %v2967, %v2964
        %v3076 = vpack.c.b16 %v2971, %v2968
        %v3077 = vpack.c.b16 %v2972, %v2969
        %v3078 = vpack.c.b16 %v2973, %v2970
        %v3079 = vpack.c.b16 %v2977, %v2974
        %v3080 = vpack.c.b16 %v2978, %v2975
        %v3081 = vpack.c.b16 %v2979, %v2976
        %v3082 = vpack.c.b16 %v2983, %v2980
        %v3083 = vpack.c.b16 %v2984, %v2981
        %v3084 = vpack.c.b16 %v2985, %v2982
        %v3085 = vpack.c.b16 %v2989, %v2986
        %v3086 = vpack.c.b16 %v2990, %v2987
        %v3087 = vpack.c.b16 %v2991, %v2988
        %v3088 = vpack.c.b16 %v2995, %v2992
        %v3089 = vpack.c.b16 %v2996, %v2993
        %v3090 = vpack.c.b16 %v2997, %v2994
        %v3091 = vpack.c.b16 %v3001, %v2998
        %v3092 = vpack.c.b16 %v3002, %v2999
        %v3093 = vpack.c.b16 %v3003, %v3000
        %v3094 = vpack.c.b16 %v3007, %v3004
        %v3095 = vpack.c.b16 %v3008, %v3005
        %v3096 = vpack.c.b16 %v3009, %v3006
        %v3097 = vpack.c.b16 %v3013, %v3010
        %v3098 = vpack.c.b16 %v3014, %v3011
        %v3099 = vpack.c.b16 %v3015, %v3012
        %v3100 = vpack.c.b16 %v3019, %v3016
        %v3101 = vpack.c.b16 %v3020, %v3017
        %v3102 = vpack.c.b16 %v3021, %v3018
        %v3103 = vpack.c.b16 %v3025, %v3022
        %v3104 = vpack.c.b16 %v3026, %v3023
        %v3105 = vpack.c.b16 %v3027, %v3024
        %v3106 = vpack.c.b16 %v3031, %v3028
        %v3107 = vpack.c.b16 %v3032, %v3029
        %v3108 = vpack.c.b16 %v3033, %v3030
        %v3109 = vpack.c.b16 %v3037, %v3034
        %v3110 = vpack.c.b16 %v3038, %v3035
        %v3111 = vpack.c.b16 %v3039, %v3036
        %3184 = vmatpush.bf16.msra.mxu0 %v3061
        %3185 = vmatpush.bf16.msra.mxu0 %v3058
        %3186 = vmatpush.bf16.msra.mxu0 %v3055
        %3187 = vmatpush.bf16.msra.mxu0 %v3052
        %3188 = vmatpush.bf16.msra.mxu0 %v3049
        %3189 = vmatpush.bf16.msra.mxu0 %v3046
        %3190 = vmatpush.bf16.msra.mxu0 %v3043
        %3191 = vmatpush.bf16.msra.mxu0 %v3040
        %3192 = vmatmul.bf16.gmra.mxu0 %v2728
        %v3193 = vpop.f32.mrf.mxu0
        %v3194 = vadd.f32 0.0, %v3193
        %v3195 = vpop.f32.mrf.mxu0
        %v3196 = vadd.f32 0.0, %v3195
        %3197 = vmatmul.bf16.gmra.mxu0 %v2731
        %v3198 = vpop.f32.mrf.mxu0
        %v3199 = vpop.f32.mrf.mxu0
        %v3200 = vadd.f32 0.0, %v3199
        %3201 = vmatmul.bf16.gmra.mxu0 %v2734
        %v3202 = vpop.f32.mrf.mxu0
        %v3203 = vadd.f32 0.0, %v3202
        %v3204 = vpop.f32.mrf.mxu0
        %3205 = vmatmul.bf16.gmra.mxu0 %v2737
        %v3206 = vpop.f32.mrf.mxu0
        %v3207 = vadd.f32 0.0, %v3206
        %v3208 = vpop.f32.mrf.mxu0
        %v3209 = vadd.f32 0.0, %v3208
        %3210 = vmatmul.bf16.gmra.mxu0 %v2740
        %v3211 = vpop.f32.mrf.mxu0
        %v3212 = vpop.f32.mrf.mxu0
        %v3213 = vadd.f32 0.0, %v3212
        %3214 = vmatmul.bf16.gmra.mxu0 %v2743
        %v3215 = vpop.f32.mrf.mxu0
        %v3216 = vadd.f32 0.0, %v3215
        %v3217 = vpop.f32.mrf.mxu0
        %3218 = vmatmul.bf16.gmra.mxu0 %v2746
        %v3219 = vpop.f32.mrf.mxu0
        %v3220 = vadd.f32 0.0, %v3219
        %v3221 = vpop.f32.mrf.mxu0
        %v3222 = vadd.f32 0.0, %v3221
        %3223 = vmatmul.bf16.gmra.mxu0 %v2749
        %v3224 = vpop.f32.mrf.mxu0
        %v3225 = vpop.f32.mrf.mxu0
        %v3226 = vadd.f32 0.0, %v3225
        %3227 = vmatmul.bf16.gmra.mxu0 %v2752
        %v3228 = vpop.f32.mrf.mxu0
        %v3229 = vadd.f32 0.0, %v3228
        %v3230 = vpop.f32.mrf.mxu0
        %3231 = vmatmul.bf16.gmra.mxu0 %v2755
        %v3232 = vpop.f32.mrf.mxu0
        %v3233 = vadd.f32 0.0, %v3232
        %v3234 = vpop.f32.mrf.mxu0
        %v3235 = vadd.f32 0.0, %v3234
        %3236 = vmatmul.bf16.gmra.mxu0 %v2758
        %v3237 = vpop.f32.mrf.mxu0
        %v3238 = vpop.f32.mrf.mxu0
        %v3239 = vadd.f32 0.0, %v3238
        %3240 = vmatmul.bf16.gmra.mxu0 %v2761
        %v3241 = vpop.f32.mrf.mxu0
        %v3242 = vadd.f32 0.0, %v3241
        %v3243 = vpop.f32.mrf.mxu0
        %3244 = vdwg.mxu0
        %3245 = vmatpush.bf16.msra.mxu0 %v3085
        %3246 = vmatpush.bf16.msra.mxu0 %v3082
        %3247 = vmatpush.bf16.msra.mxu0 %v3079
        %3248 = vmatpush.bf16.msra.mxu0 %v3076
        %3249 = vmatpush.bf16.msra.mxu0 %v3073
        %3250 = vmatpush.bf16.msra.mxu0 %v3070
        %3251 = vmatpush.bf16.msra.mxu0 %v3067
        %3252 = vmatpush.bf16.msra.mxu0 %v3064
        %3253 = vmatmul.bf16.gmra.mxu0 %v2729
        %v3254 = vpop.f32.mrf.mxu0
        %v3255 = vadd.f32 %v3194, %v3254
        %v3256 = vpop.f32.mrf.mxu0
        %v3257 = vadd.f32 %v3196, %v3256
        %3258 = vmatmul.bf16.gmra.mxu0 %v2732
        %v3259 = vpop.f32.mrf.mxu0
        %v3260 = vpop.f32.mrf.mxu0
        %v3261 = vadd.f32 %v3200, %v3260
        %3262 = vmatmul.bf16.gmra.mxu0 %v2735
        %v3263 = vpop.f32.mrf.mxu0
        %v3264 = vadd.f32 %v3203, %v3263
        %v3265 = vpop.f32.mrf.mxu0
        %3266 = vmatmul.bf16.gmra.mxu0 %v2738
        %v3267 = vpop.f32.mrf.mxu0
        %v3268 = vadd.f32 %v3207, %v3267
        %v3269 = vpop.f32.mrf.mxu0
        %v3270 = vadd.f32 %v3209, %v3269
        %3271 = vmatmul.bf16.gmra.mxu0 %v2741
        %v3272 = vpop.f32.mrf.mxu0
        %v3273 = vpop.f32.mrf.mxu0
        %v3274 = vadd.f32 %v3213, %v3273
        %3275 = vmatmul.bf16.gmra.mxu0 %v2744
        %v3276 = vpop.f32.mrf.mxu0
        %v3277 = vadd.f32 %v3216, %v3276
        %v3278 = vpop.f32.mrf.mxu0
        %3279 = vmatmul.bf16.gmra.mxu0 %v2747
        %v3280 = vpop.f32.mrf.mxu0
        %v3281 = vadd.f32 %v3220, %v3280
        %v3282 = vpop.f32.mrf.mxu0
        %v3283 = vadd.f32 %v3222, %v3282
        %3284 = vmatmul.bf16.gmra.mxu0 %v2750
        %v3285 = vpop.f32.mrf.mxu0
        %v3286 = vpop.f32.mrf.mxu0
        %v3287 = vadd.f32 %v3226, %v3286
        %3288 = vmatmul.bf16.gmra.mxu0 %v2753
        %v3289 = vpop.f32.mrf.mxu0
        %v3290 = vadd.f32 %v3229, %v3289
        %v3291 = vpop.f32.mrf.mxu0
        %3292 = vmatmul.bf16.gmra.mxu0 %v2756
        %v3293 = vpop.f32.mrf.mxu0
        %v3294 = vadd.f32 %v3233, %v3293
        %v3295 = vpop.f32.mrf.mxu0
        %v3296 = vadd.f32 %v3235, %v3295
        %3297 = vmatmul.bf16.gmra.mxu0 %v2759
        %v3298 = vpop.f32.mrf.mxu0
        %v3299 = vpop.f32.mrf.mxu0
        %v3300 = vadd.f32 %v3239, %v3299
        %3301 = vmatmul.bf16.gmra.mxu0 %v2762
        %v3302 = vpop.f32.mrf.mxu0
        %v3303 = vadd.f32 %v3242, %v3302
        %v3304 = vpop.f32.mrf.mxu0
        %3305 = vdwg.mxu0
        %3306 = vmatpush.bf16.msra.mxu0 %v3109
        %3307 = vmatpush.bf16.msra.mxu0 %v3106
        %3308 = vmatpush.bf16.msra.mxu0 %v3103
        %3309 = vmatpush.bf16.msra.mxu0 %v3100
        %3310 = vmatpush.bf16.msra.mxu0 %v3097
        %3311 = vmatpush.bf16.msra.mxu0 %v3094
        %3312 = vmatpush.bf16.msra.mxu0 %v3091
        %3313 = vmatpush.bf16.msra.mxu0 %v3088
        %3314 = vmatmul.bf16.gmra.mxu0 %v2730
        %v3315 = vpop.f32.mrf.mxu0
        %v3316 = vadd.f32 %v3255, %v3315
        %v3317 = vpop.f32.mrf.mxu0
        %v3318 = vadd.f32 %v3257, %v3317
        %3319 = vmatmul.bf16.gmra.mxu0 %v2733
        %v3320 = vpop.f32.mrf.mxu0
        %v3321 = vpop.f32.mrf.mxu0
        %v3322 = vadd.f32 %v3261, %v3321
        %3323 = vmatmul.bf16.gmra.mxu0 %v2736
        %v3324 = vpop.f32.mrf.mxu0
        %v3325 = vadd.f32 %v3264, %v3324
        %v3326 = vpop.f32.mrf.mxu0
        %3327 = vmatmul.bf16.gmra.mxu0 %v2739
        %v3328 = vpop.f32.mrf.mxu0
        %v3329 = vadd.f32 %v3268, %v3328
        %v3330 = vpop.f32.mrf.mxu0
        %v3331 = vadd.f32 %v3270, %v3330
        %3332 = vmatmul.bf16.gmra.mxu0 %v2742
        %v3333 = vpop.f32.mrf.mxu0
        %v3334 = vpop.f32.mrf.mxu0
        %v3335 = vadd.f32 %v3274, %v3334
        %3336 = vmatmul.bf16.gmra.mxu0 %v2745
        %v3337 = vpop.f32.mrf.mxu0
        %v3338 = vadd.f32 %v3277, %v3337
        %v3339 = vpop.f32.mrf.mxu0
        %3340 = vmatmul.bf16.gmra.mxu0 %v2748
        %v3341 = vpop.f32.mrf.mxu0
        %v3342 = vadd.f32 %v3281, %v3341
        %v3343 = vpop.f32.mrf.mxu0
        %v3344 = vadd.f32 %v3283, %v3343
        %3345 = vmatmul.bf16.gmra.mxu0 %v2751
        %v3346 = vpop.f32.mrf.mxu0
        %v3347 = vpop.f32.mrf.mxu0
        %v3348 = vadd.f32 %v3287, %v3347
        %3349 = vmatmul.bf16.gmra.mxu0 %v2754
        %v3350 = vpop.f32.mrf.mxu0
        %v3351 = vadd.f32 %v3290, %v3350
        %v3352 = vpop.f32.mrf.mxu0
        %3353 = vmatmul.bf16.gmra.mxu0 %v2757
        %v3354 = vpop.f32.mrf.mxu0
        %v3355 = vadd.f32 %v3294, %v3354
        %v3356 = vpop.f32.mrf.mxu0
        %v3357 = vadd.f32 %v3296, %v3356
        %3358 = vmatmul.bf16.gmra.mxu0 %v2760
        %v3359 = vpop.f32.mrf.mxu0
        %v3360 = vpop.f32.mrf.mxu0
        %v3361 = vadd.f32 %v3300, %v3360
        %3362 = vmatmul.bf16.gmra.mxu0 %v2763
        %v3363 = vpop.f32.mrf.mxu0
        %v3364 = vadd.f32 %v3303, %v3363
        %v3365 = vpop.f32.mrf.mxu0
        %3366 = vdwg.mxu0
        %3367 = vmatpush.bf16.msra.mxu0 %v3062
        %3368 = vmatpush.bf16.msra.mxu0 %v3059
        %3369 = vmatpush.bf16.msra.mxu0 %v3056
        %3370 = vmatpush.bf16.msra.mxu0 %v3053
        %3371 = vmatpush.bf16.msra.mxu0 %v3050
        %3372 = vmatpush.bf16.msra.mxu0 %v3047
        %3373 = vmatpush.bf16.msra.mxu0 %v3044
        %3374 = vmatpush.bf16.msra.mxu0 %v3041
        %3375 = vmatmul.bf16.gmra.mxu0 %v2728
        %v3376 = vpop.f32.mrf.mxu0
        %v3377 = vadd.f32 0.0, %v3376
        %v3378 = vpop.f32.mrf.mxu0
        %v3379 = vadd.f32 0.0, %v3378
        %3380 = vmatmul.bf16.gmra.mxu0 %v2731
        %v3381 = vpop.f32.mrf.mxu0
        %v3382 = vadd.f32 0.0, %v3381
        %v3383 = vpop.f32.mrf.mxu0
        %v3384 = vadd.f32 0.0, %v3383
        %3385 = vmatmul.bf16.gmra.mxu0 %v2734
        %v3386 = vpop.f32.mrf.mxu0
        %v3387 = vadd.f32 0.0, %v3386
        %v3388 = vpop.f32.mrf.mxu0
        %v3389 = vadd.f32 0.0, %v3388
        %3390 = vmatmul.bf16.gmra.mxu0 %v2737
        %v3391 = vpop.f32.mrf.mxu0
        %v3392 = vadd.f32 0.0, %v3391
        %v3393 = vpop.f32.mrf.mxu0
        %v3394 = vadd.f32 0.0, %v3393
        %3395 = vmatmul.bf16.gmra.mxu0 %v2740
        %v3396 = vpop.f32.mrf.mxu0
        %v3397 = vadd.f32 0.0, %v3396
        %v3398 = vpop.f32.mrf.mxu0
        %v3399 = vadd.f32 0.0, %v3398
        %3400 = vmatmul.bf16.gmra.mxu0 %v2743
        %v3401 = vpop.f32.mrf.mxu0
        %v3402 = vadd.f32 0.0, %v3401
        %v3403 = vpop.f32.mrf.mxu0
        %v3404 = vadd.f32 0.0, %v3403
        %3405 = vmatmul.bf16.gmra.mxu0 %v2746
        %v3406 = vpop.f32.mrf.mxu0
        %v3407 = vadd.f32 0.0, %v3406
        %v3408 = vpop.f32.mrf.mxu0
        %v3409 = vadd.f32 0.0, %v3408
        %3410 = vmatmul.bf16.gmra.mxu0 %v2749
        %v3411 = vpop.f32.mrf.mxu0
        %v3412 = vadd.f32 0.0, %v3411
        %v3413 = vpop.f32.mrf.mxu0
        %v3414 = vadd.f32 0.0, %v3413
        %3415 = vmatmul.bf16.gmra.mxu0 %v2752
        %v3416 = vpop.f32.mrf.mxu0
        %v3417 = vadd.f32 0.0, %v3416
        %v3418 = vpop.f32.mrf.mxu0
        %v3419 = vadd.f32 0.0, %v3418
        %3420 = vmatmul.bf16.gmra.mxu0 %v2755
        %v3421 = vpop.f32.mrf.mxu0
        %v3422 = vadd.f32 0.0, %v3421
        %v3423 = vpop.f32.mrf.mxu0
        %v3424 = vadd.f32 0.0, %v3423
        %3425 = vmatmul.bf16.gmra.mxu0 %v2758
        %v3426 = vpop.f32.mrf.mxu0
        %v3427 = vadd.f32 0.0, %v3426
        %v3428 = vpop.f32.mrf.mxu0
        %v3429 = vadd.f32 0.0, %v3428
        %3430 = vmatmul.bf16.gmra.mxu0 %v2761
        %v3431 = vpop.f32.mrf.mxu0
        %v3432 = vadd.f32 0.0, %v3431
        %v3433 = vpop.f32.mrf.mxu0
        %v3434 = vadd.f32 0.0, %v3433
        %3435 = vdwg.mxu0
        %3436 = vmatpush.bf16.msra.mxu0 %v3086
        %3437 = vmatpush.bf16.msra.mxu0 %v3083
        %3438 = vmatpush.bf16.msra.mxu0 %v3080
        %3439 = vmatpush.bf16.msra.mxu0 %v3077
        %3440 = vmatpush.bf16.msra.mxu0 %v3074
        %3441 = vmatpush.bf16.msra.mxu0 %v3071
        %3442 = vmatpush.bf16.msra.mxu0 %v3068
        %3443 = vmatpush.bf16.msra.mxu0 %v3065
        %3444 = vmatmul.bf16.gmra.mxu0 %v2729
        %v3445 = vpop.f32.mrf.mxu0
        %v3446 = vadd.f32 %v3377, %v3445
        %v3447 = vpop.f32.mrf.mxu0
        %v3448 = vadd.f32 %v3379, %v3447
        %3449 = vmatmul.bf16.gmra.mxu0 %v2732
        %v3450 = vpop.f32.mrf.mxu0
        %v3451 = vadd.f32 %v3382, %v3450
        %v3452 = vpop.f32.mrf.mxu0
        %v3453 = vadd.f32 %v3384, %v3452
        %3454 = vmatmul.bf16.gmra.mxu0 %v2735
        %v3455 = vpop.f32.mrf.mxu0
        %v3456 = vadd.f32 %v3387, %v3455
        %v3457 = vpop.f32.mrf.mxu0
        %v3458 = vadd.f32 %v3389, %v3457
        %3459 = vmatmul.bf16.gmra.mxu0 %v2738
        %v3460 = vpop.f32.mrf.mxu0
        %v3461 = vadd.f32 %v3392, %v3460
        %v3462 = vpop.f32.mrf.mxu0
        %v3463 = vadd.f32 %v3394, %v3462
        %3464 = vmatmul.bf16.gmra.mxu0 %v2741
        %v3465 = vpop.f32.mrf.mxu0
        %v3466 = vadd.f32 %v3397, %v3465
        %v3467 = vpop.f32.mrf.mxu0
        %v3468 = vadd.f32 %v3399, %v3467
        %3469 = vmatmul.bf16.gmra.mxu0 %v2744
        %v3470 = vpop.f32.mrf.mxu0
        %v3471 = vadd.f32 %v3402, %v3470
        %v3472 = vpop.f32.mrf.mxu0
        %v3473 = vadd.f32 %v3404, %v3472
        %3474 = vmatmul.bf16.gmra.mxu0 %v2747
        %v3475 = vpop.f32.mrf.mxu0
        %v3476 = vadd.f32 %v3407, %v3475
        %v3477 = vpop.f32.mrf.mxu0
        %v3478 = vadd.f32 %v3409, %v3477
        %3479 = vmatmul.bf16.gmra.mxu0 %v2750
        %v3480 = vpop.f32.mrf.mxu0
        %v3481 = vadd.f32 %v3412, %v3480
        %v3482 = vpop.f32.mrf.mxu0
        %v3483 = vadd.f32 %v3414, %v3482
        %3484 = vmatmul.bf16.gmra.mxu0 %v2753
        %v3485 = vpop.f32.mrf.mxu0
        %v3486 = vadd.f32 %v3417, %v3485
        %v3487 = vpop.f32.mrf.mxu0
        %v3488 = vadd.f32 %v3419, %v3487
        %3489 = vmatmul.bf16.gmra.mxu0 %v2756
        %v3490 = vpop.f32.mrf.mxu0
        %v3491 = vadd.f32 %v3422, %v3490
        %v3492 = vpop.f32.mrf.mxu0
        %v3493 = vadd.f32 %v3424, %v3492
        %3494 = vmatmul.bf16.gmra.mxu0 %v2759
        %v3495 = vpop.f32.mrf.mxu0
        %v3496 = vadd.f32 %v3427, %v3495
        %v3497 = vpop.f32.mrf.mxu0
        %v3498 = vadd.f32 %v3429, %v3497
        %3499 = vmatmul.bf16.gmra.mxu0 %v2762
        %v3500 = vpop.f32.mrf.mxu0
        %v3501 = vadd.f32 %v3432, %v3500
        %v3502 = vpop.f32.mrf.mxu0
        %v3503 = vadd.f32 %v3434, %v3502
        %3504 = vdwg.mxu0
        %3505 = vmatpush.bf16.msra.mxu0 %v3110
        %3506 = vmatpush.bf16.msra.mxu0 %v3107
        %3507 = vmatpush.bf16.msra.mxu0 %v3104
        %3508 = vmatpush.bf16.msra.mxu0 %v3101
        %3509 = vmatpush.bf16.msra.mxu0 %v3098
        %3510 = vmatpush.bf16.msra.mxu0 %v3095
        %3511 = vmatpush.bf16.msra.mxu0 %v3092
        %3512 = vmatpush.bf16.msra.mxu0 %v3089
        %3513 = vmatmul.bf16.gmra.mxu0 %v2730
        %v3514 = vpop.f32.mrf.mxu0
        %v3515 = vadd.f32 %v3446, %v3514
        %v3516 = vpop.f32.mrf.mxu0
        %v3517 = vadd.f32 %v3448, %v3516
        %3518 = vmatmul.bf16.gmra.mxu0 %v2733
        %v3519 = vpop.f32.mrf.mxu0
        %v3520 = vadd.f32 %v3451, %v3519
        %v3521 = vpop.f32.mrf.mxu0
        %v3522 = vadd.f32 %v3453, %v3521
        %3523 = vmatmul.bf16.gmra.mxu0 %v2736
        %v3524 = vpop.f32.mrf.mxu0
        %v3525 = vadd.f32 %v3456, %v3524
        %v3526 = vpop.f32.mrf.mxu0
        %v3527 = vadd.f32 %v3458, %v3526
        %3528 = vmatmul.bf16.gmra.mxu0 %v2739
        %v3529 = vpop.f32.mrf.mxu0
        %v3530 = vadd.f32 %v3461, %v3529
        %v3531 = vpop.f32.mrf.mxu0
        %v3532 = vadd.f32 %v3463, %v3531
        %3533 = vmatmul.bf16.gmra.mxu0 %v2742
        %v3534 = vpop.f32.mrf.mxu0
        %v3535 = vadd.f32 %v3466, %v3534
        %v3536 = vpop.f32.mrf.mxu0
        %v3537 = vadd.f32 %v3468, %v3536
        %3538 = vmatmul.bf16.gmra.mxu0 %v2745
        %v3539 = vpop.f32.mrf.mxu0
        %v3540 = vadd.f32 %v3471, %v3539
        %v3541 = vpop.f32.mrf.mxu0
        %v3542 = vadd.f32 %v3473, %v3541
        %3543 = vmatmul.bf16.gmra.mxu0 %v2748
        %v3544 = vpop.f32.mrf.mxu0
        %v3545 = vadd.f32 %v3476, %v3544
        %v3546 = vpop.f32.mrf.mxu0
        %v3547 = vadd.f32 %v3478, %v3546
        %3548 = vmatmul.bf16.gmra.mxu0 %v2751
        %v3549 = vpop.f32.mrf.mxu0
        %v3550 = vadd.f32 %v3481, %v3549
        %v3551 = vpop.f32.mrf.mxu0
        %v3552 = vadd.f32 %v3483, %v3551
        %3553 = vmatmul.bf16.gmra.mxu0 %v2754
        %v3554 = vpop.f32.mrf.mxu0
        %v3555 = vadd.f32 %v3486, %v3554
        %v3556 = vpop.f32.mrf.mxu0
        %v3557 = vadd.f32 %v3488, %v3556
        %3558 = vmatmul.bf16.gmra.mxu0 %v2757
        %v3559 = vpop.f32.mrf.mxu0
        %v3560 = vadd.f32 %v3491, %v3559
        %v3561 = vpop.f32.mrf.mxu0
        %v3562 = vadd.f32 %v3493, %v3561
        %3563 = vmatmul.bf16.gmra.mxu0 %v2760
        %v3564 = vpop.f32.mrf.mxu0
        %v3565 = vadd.f32 %v3496, %v3564
        %v3566 = vpop.f32.mrf.mxu0
        %v3567 = vadd.f32 %v3498, %v3566
        %3568 = vmatmul.bf16.gmra.mxu0 %v2763
        %v3569 = vpop.f32.mrf.mxu0
        %v3570 = vadd.f32 %v3501, %v3569
        %v3571 = vpop.f32.mrf.mxu0
        %v3572 = vadd.f32 %v3503, %v3571
        %3573 = vdwg.mxu0
        %3574 = vmatpush.bf16.msra.mxu0 %v3063
        %3575 = vmatpush.bf16.msra.mxu0 %v3060
        %3576 = vmatpush.bf16.msra.mxu0 %v3057
        %3577 = vmatpush.bf16.msra.mxu0 %v3054
        %3578 = vmatpush.bf16.msra.mxu0 %v3051
        %3579 = vmatpush.bf16.msra.mxu0 %v3048
        %3580 = vmatpush.bf16.msra.mxu0 %v3045
        %3581 = vmatpush.bf16.msra.mxu0 %v3042
        %3582 = vmatmul.bf16.gmra.mxu0 %v2728
        %v3583 = vpop.f32.mrf.mxu0
        %v3584 = vadd.f32 0.0, %v3583
        %v3585 = vpop.f32.mrf.mxu0
        %v3586 = vadd.f32 0.0, %v3585
        %3587 = vmatmul.bf16.gmra.mxu0 %v2731
        %v3588 = vpop.f32.mrf.mxu0
        %v3589 = vadd.f32 0.0, %v3588
        %v3590 = vpop.f32.mrf.mxu0
        %v3591 = vadd.f32 0.0, %v3590
        %3592 = vmatmul.bf16.gmra.mxu0 %v2734
        %v3593 = vpop.f32.mrf.mxu0
        %v3594 = vadd.f32 0.0, %v3593
        %v3595 = vpop.f32.mrf.mxu0
        %v3596 = vadd.f32 0.0, %v3595
        %3597 = vmatmul.bf16.gmra.mxu0 %v2737
        %v3598 = vpop.f32.mrf.mxu0
        %v3599 = vadd.f32 0.0, %v3598
        %v3600 = vpop.f32.mrf.mxu0
        %v3601 = vadd.f32 0.0, %v3600
        %3602 = vmatmul.bf16.gmra.mxu0 %v2740
        %v3603 = vpop.f32.mrf.mxu0
        %v3604 = vadd.f32 0.0, %v3603
        %v3605 = vpop.f32.mrf.mxu0
        %v3606 = vadd.f32 0.0, %v3605
        %3607 = vmatmul.bf16.gmra.mxu0 %v2743
        %v3608 = vpop.f32.mrf.mxu0
        %v3609 = vadd.f32 0.0, %v3608
        %v3610 = vpop.f32.mrf.mxu0
        %v3611 = vadd.f32 0.0, %v3610
        %3612 = vmatmul.bf16.gmra.mxu0 %v2746
        %v3613 = vpop.f32.mrf.mxu0
        %v3614 = vadd.f32 0.0, %v3613
        %v3615 = vpop.f32.mrf.mxu0
        %v3616 = vadd.f32 0.0, %v3615
        %3617 = vmatmul.bf16.gmra.mxu0 %v2749
        %v3618 = vpop.f32.mrf.mxu0
        %v3619 = vadd.f32 0.0, %v3618
        %v3620 = vpop.f32.mrf.mxu0
        %v3621 = vadd.f32 0.0, %v3620
        %3622 = vmatmul.bf16.gmra.mxu0 %v2752
        %v3623 = vpop.f32.mrf.mxu0
        %v3624 = vadd.f32 0.0, %v3623
        %v3625 = vpop.f32.mrf.mxu0
        %v3626 = vadd.f32 0.0, %v3625
        %3627 = vmatmul.bf16.gmra.mxu0 %v2755
        %v3628 = vpop.f32.mrf.mxu0
        %v3629 = vadd.f32 0.0, %v3628
        %v3630 = vpop.f32.mrf.mxu0
        %v3631 = vadd.f32 0.0, %v3630
        %3632 = vmatmul.bf16.gmra.mxu0 %v2758
        %v3633 = vpop.f32.mrf.mxu0
        %v3634 = vadd.f32 0.0, %v3633
        %v3635 = vpop.f32.mrf.mxu0
        %v3636 = vadd.f32 0.0, %v3635
        %3637 = vmatmul.bf16.gmra.mxu0 %v2761
        %v3638 = vpop.f32.mrf.mxu0
        %v3639 = vadd.f32 0.0, %v3638
        %v3640 = vpop.f32.mrf.mxu0
        %v3641 = vadd.f32 0.0, %v3640
        %3642 = vdwg.mxu0
        %3643 = vmatpush.bf16.msra.mxu0 %v3087
        %3644 = vmatpush.bf16.msra.mxu0 %v3084
        %3645 = vmatpush.bf16.msra.mxu0 %v3081
        %3646 = vmatpush.bf16.msra.mxu0 %v3078
        %3647 = vmatpush.bf16.msra.mxu0 %v3075
        %3648 = vmatpush.bf16.msra.mxu0 %v3072
        %3649 = vmatpush.bf16.msra.mxu0 %v3069
        %3650 = vmatpush.bf16.msra.mxu0 %v3066
        %3651 = vmatmul.bf16.gmra.mxu0 %v2729
        %v3652 = vpop.f32.mrf.mxu0
        %v3653 = vadd.f32 %v3584, %v3652
        %v3654 = vpop.f32.mrf.mxu0
        %v3655 = vadd.f32 %v3586, %v3654
        %3656 = vmatmul.bf16.gmra.mxu0 %v2732
        %v3657 = vpop.f32.mrf.mxu0
        %v3658 = vadd.f32 %v3589, %v3657
        %v3659 = vpop.f32.mrf.mxu0
        %v3660 = vadd.f32 %v3591, %v3659
        %3661 = vmatmul.bf16.gmra.mxu0 %v2735
        %v3662 = vpop.f32.mrf.mxu0
        %v3663 = vadd.f32 %v3594, %v3662
        %v3664 = vpop.f32.mrf.mxu0
        %v3665 = vadd.f32 %v3596, %v3664
        %3666 = vmatmul.bf16.gmra.mxu0 %v2738
        %v3667 = vpop.f32.mrf.mxu0
        %v3668 = vadd.f32 %v3599, %v3667
        %v3669 = vpop.f32.mrf.mxu0
        %v3670 = vadd.f32 %v3601, %v3669
        %3671 = vmatmul.bf16.gmra.mxu0 %v2741
        %v3672 = vpop.f32.mrf.mxu0
        %v3673 = vadd.f32 %v3604, %v3672
        %v3674 = vpop.f32.mrf.mxu0
        %v3675 = vadd.f32 %v3606, %v3674
        %3676 = vmatmul.bf16.gmra.mxu0 %v2744
        %v3677 = vpop.f32.mrf.mxu0
        %v3678 = vadd.f32 %v3609, %v3677
        %v3679 = vpop.f32.mrf.mxu0
        %v3680 = vadd.f32 %v3611, %v3679
        %3681 = vmatmul.bf16.gmra.mxu0 %v2747
        %v3682 = vpop.f32.mrf.mxu0
        %v3683 = vadd.f32 %v3614, %v3682
        %v3684 = vpop.f32.mrf.mxu0
        %v3685 = vadd.f32 %v3616, %v3684
        %3686 = vmatmul.bf16.gmra.mxu0 %v2750
        %v3687 = vpop.f32.mrf.mxu0
        %v3688 = vadd.f32 %v3619, %v3687
        %v3689 = vpop.f32.mrf.mxu0
        %v3690 = vadd.f32 %v3621, %v3689
        %3691 = vmatmul.bf16.gmra.mxu0 %v2753
        %v3692 = vpop.f32.mrf.mxu0
        %v3693 = vadd.f32 %v3624, %v3692
        %v3694 = vpop.f32.mrf.mxu0
        %v3695 = vadd.f32 %v3626, %v3694
        %3696 = vmatmul.bf16.gmra.mxu0 %v2756
        %v3697 = vpop.f32.mrf.mxu0
        %v3698 = vadd.f32 %v3629, %v3697
        %v3699 = vpop.f32.mrf.mxu0
        %v3700 = vadd.f32 %v3631, %v3699
        %3701 = vmatmul.bf16.gmra.mxu0 %v2759
        %v3702 = vpop.f32.mrf.mxu0
        %v3703 = vadd.f32 %v3634, %v3702
        %v3704 = vpop.f32.mrf.mxu0
        %v3705 = vadd.f32 %v3636, %v3704
        %3706 = vmatmul.bf16.gmra.mxu0 %v2762
        %v3707 = vpop.f32.mrf.mxu0
        %v3708 = vadd.f32 %v3639, %v3707
        %v3709 = vpop.f32.mrf.mxu0
        %v3710 = vadd.f32 %v3641, %v3709
        %3711 = vdwg.mxu0
        %3712 = vmatpush.bf16.msra.mxu0 %v3111
        %3713 = vmatpush.bf16.msra.mxu0 %v3108
        %3714 = vmatpush.bf16.msra.mxu0 %v3105
        %3715 = vmatpush.bf16.msra.mxu0 %v3102
        %3716 = vmatpush.bf16.msra.mxu0 %v3099
        %3717 = vmatpush.bf16.msra.mxu0 %v3096
        %3718 = vmatpush.bf16.msra.mxu0 %v3093
        %3719 = vmatpush.bf16.msra.mxu0 %v3090
        %3720 = vmatmul.bf16.gmra.mxu0 %v2730
        %v3721 = vpop.f32.mrf.mxu0
        %v3722 = vadd.f32 %v3653, %v3721
        %v3723 = vpop.f32.mrf.mxu0
        %v3724 = vadd.f32 %v3655, %v3723
        %3725 = vmatmul.bf16.gmra.mxu0 %v2733
        %v3726 = vpop.f32.mrf.mxu0
        %v3727 = vadd.f32 %v3658, %v3726
        %v3728 = vpop.f32.mrf.mxu0
        %v3729 = vadd.f32 %v3660, %v3728
        %3730 = vmatmul.bf16.gmra.mxu0 %v2736
        %v3731 = vpop.f32.mrf.mxu0
        %v3732 = vadd.f32 %v3663, %v3731
        %v3733 = vpop.f32.mrf.mxu0
        %v3734 = vadd.f32 %v3665, %v3733
        %3735 = vmatmul.bf16.gmra.mxu0 %v2739
        %v3736 = vpop.f32.mrf.mxu0
        %v3737 = vadd.f32 %v3668, %v3736
        %v3738 = vpop.f32.mrf.mxu0
        %v3739 = vadd.f32 %v3670, %v3738
        %3740 = vmatmul.bf16.gmra.mxu0 %v2742
        %v3741 = vpop.f32.mrf.mxu0
        %v3742 = vadd.f32 %v3673, %v3741
        %v3743 = vpop.f32.mrf.mxu0
        %v3744 = vadd.f32 %v3675, %v3743
        %3745 = vmatmul.bf16.gmra.mxu0 %v2745
        %v3746 = vpop.f32.mrf.mxu0
        %v3747 = vadd.f32 %v3678, %v3746
        %v3748 = vpop.f32.mrf.mxu0
        %v3749 = vadd.f32 %v3680, %v3748
        %3750 = vmatmul.bf16.gmra.mxu0 %v2748
        %v3751 = vpop.f32.mrf.mxu0
        %v3752 = vadd.f32 %v3683, %v3751
        %v3753 = vpop.f32.mrf.mxu0
        %v3754 = vadd.f32 %v3685, %v3753
        %3755 = vmatmul.bf16.gmra.mxu0 %v2751
        %v3756 = vpop.f32.mrf.mxu0
        %v3757 = vadd.f32 %v3688, %v3756
        %v3758 = vpop.f32.mrf.mxu0
        %v3759 = vadd.f32 %v3690, %v3758
        %3760 = vmatmul.bf16.gmra.mxu0 %v2754
        %v3761 = vpop.f32.mrf.mxu0
        %v3762 = vadd.f32 %v3693, %v3761
        %v3763 = vpop.f32.mrf.mxu0
        %v3764 = vadd.f32 %v3695, %v3763
        %3765 = vmatmul.bf16.gmra.mxu0 %v2757
        %v3766 = vpop.f32.mrf.mxu0
        %v3767 = vadd.f32 %v3698, %v3766
        %v3768 = vpop.f32.mrf.mxu0
        %v3769 = vadd.f32 %v3700, %v3768
        %3770 = vmatmul.bf16.gmra.mxu0 %v2760
        %v3771 = vpop.f32.mrf.mxu0
        %v3772 = vadd.f32 %v3703, %v3771
        %v3773 = vpop.f32.mrf.mxu0
        %v3774 = vadd.f32 %v3705, %v3773
        %3775 = vmatmul.bf16.gmra.mxu0 %v2763
        %v3776 = vpop.f32.mrf.mxu0
        %v3777 = vadd.f32 %v3708, %v3776
        %v3778 = vpop.f32.mrf.mxu0
        %v3779 = vadd.f32 %v3710, %v3778
        %3780 = vdwg.mxu0
        %vm3805 = vcmask 1046528
        %v3806 = vrot.slane %v3515, 1
        %v3807 = vrot.slane %v3517, 1
        %v3808 = vsel %vm3805, %v3806, %v3807
        %v3809 = vrot.slane %v3520, 1
        %v3810 = vsel %vm3805, %v3807, %v3809
        %v3811 = vrot.slane %v3522, 1
        %v3812 = vrot.slane %v3525, 1
        %v3813 = vsel %vm3805, %v3811, %v3812
        %v3814 = vrot.slane %v3527, 1
        %v3815 = vsel %vm3805, %v3812, %v3814
        %v3816 = vrot.slane %v3530, 1
        %v3817 = vrot.slane %v3532, 1
        %v3818 = vsel %vm3805, %v3816, %v3817
        %v3819 = vrot.slane %v3535, 1
        %v3820 = vsel %vm3805, %v3817, %v3819
        %v3821 = vrot.slane %v3537, 1
        %v3822 = vrot.slane %v3540, 1
        %v3823 = vsel %vm3805, %v3821, %v3822
        %v3824 = vrot.slane %v3542, 1
        %v3825 = vsel %vm3805, %v3822, %v3824
        %v3826 = vrot.slane %v3545, 1
        %v3827 = vrot.slane %v3547, 1
        %v3828 = vsel %vm3805, %v3826, %v3827
        %v3829 = vrot.slane %v3550, 1
        %v3830 = vsel %vm3805, %v3827, %v3829
        %v3831 = vrot.slane %v3552, 1
        %v3832 = vrot.slane %v3555, 1
        %v3833 = vsel %vm3805, %v3831, %v3832
        %v3834 = vrot.slane %v3557, 1
        %v3835 = vsel %vm3805, %v3832, %v3834
        %v3836 = vrot.slane %v3560, 1
        %v3837 = vrot.slane %v3562, 1
        %v3838 = vsel %vm3805, %v3836, %v3837
        %v3839 = vrot.slane %v3565, 1
        %v3840 = vsel %vm3805, %v3837, %v3839
        %v3841 = vrot.slane %v3567, 1
        %v3842 = vrot.slane %v3570, 1
        %v3843 = vsel %vm3805, %v3841, %v3842
        %v3844 = vrot.slane %v3572, 1
        %v3845 = vsel %vm3805, %v3842, %v3844
        %v3862 = vadd.f32 %v3316, %v3808
        %v3863 = vadd.f32 %v3318, %v3810
        %v3864 = vadd.f32 %v3322, %v3813
        %v3865 = vadd.f32 %v3325, %v3815
        %v3866 = vadd.f32 %v3329, %v3818
        %v3867 = vadd.f32 %v3331, %v3820
        %v3868 = vadd.f32 %v3335, %v3823
        %v3869 = vadd.f32 %v3338, %v3825
        %v3870 = vadd.f32 %v3342, %v3828
        %v3871 = vadd.f32 %v3344, %v3830
        %v3872 = vadd.f32 %v3348, %v3833
        %v3873 = vadd.f32 %v3351, %v3835
        %v3874 = vadd.f32 %v3355, %v3838
        %v3875 = vadd.f32 %v3357, %v3840
        %v3876 = vadd.f32 %v3361, %v3843
        %v3877 = vadd.f32 %v3364, %v3845
        %vm3902 = vcmask 1045504
        %v3903 = vrot.slane %v3722, 2
        %v3904 = vrot.slane %v3724, 2
        %v3905 = vsel %vm3902, %v3903, %v3904
        %v3906 = vrot.slane %v3727, 2
        %v3907 = vsel %vm3902, %v3904, %v3906
        %v3908 = vrot.slane %v3729, 2
        %v3909 = vrot.slane %v3732, 2
        %v3910 = vsel %vm3902, %v3908, %v3909
        %v3911 = vrot.slane %v3734, 2
        %v3912 = vsel %vm3902, %v3909, %v3911
        %v3913 = vrot.slane %v3737, 2
        %v3914 = vrot.slane %v3739, 2
        %v3915 = vsel %vm3902, %v3913, %v3914
        %v3916 = vrot.slane %v3742, 2
        %v3917 = vsel %vm3902, %v3914, %v3916
        %v3918 = vrot.slane %v3744, 2
        %v3919 = vrot.slane %v3747, 2
        %v3920 = vsel %vm3902, %v3918, %v3919
        %v3921 = vrot.slane %v3749, 2
        %v3922 = vsel %vm3902, %v3919, %v3921
        %v3923 = vrot.slane %v3752, 2
        %v3924 = vrot.slane %v3754, 2
        %v3925 = vsel %vm3902, %v3923, %v3924
        %v3926 = vrot.slane %v3757, 2
        %v3927 = vsel %vm3902, %v3924, %v3926
        %v3928 = vrot.slane %v3759, 2
        %v3929 = vrot.slane %v3762, 2
        %v3930 = vsel %vm3902, %v3928, %v3929
        %v3931 = vrot.slane %v3764, 2
        %v3932 = vsel %vm3902, %v3929, %v3931
        %v3933 = vrot.slane %v3767, 2
        %v3934 = vrot.slane %v3769, 2
        %v3935 = vsel %vm3902, %v3933, %v3934
        %v3936 = vrot.slane %v3772, 2
        %v3937 = vsel %vm3902, %v3934, %v3936
        %v3938 = vrot.slane %v3774, 2
        %v3939 = vrot.slane %v3777, 2
        %v3940 = vsel %vm3902, %v3938, %v3939
        %v3941 = vrot.slane %v3779, 2
        %v3942 = vsel %vm3902, %v3939, %v3941
        %v3959 = vadd.f32 %v3862, %v3905
        %v3960 = vadd.f32 %v3863, %v3907
        %v3961 = vadd.f32 %v3864, %v3910
        %v3962 = vadd.f32 %v3865, %v3912
        %v3963 = vadd.f32 %v3866, %v3915
        %v3964 = vadd.f32 %v3867, %v3917
        %v3965 = vadd.f32 %v3868, %v3920
        %v3966 = vadd.f32 %v3869, %v3922
        %v3967 = vadd.f32 %v3870, %v3925
        %v3968 = vadd.f32 %v3871, %v3927
        %v3969 = vadd.f32 %v3872, %v3930
        %v3970 = vadd.f32 %v3873, %v3932
        %v3971 = vadd.f32 %v3874, %v3935
        %v3972 = vadd.f32 %v3875, %v3937
        %v3973 = vadd.f32 %v3876, %v3940
        %v3974 = vadd.f32 %v3877, %v3942
        %v3976 = vperm.slane %v2404, 0
        %v3978 = vadd.f32 %v3959, %v3976
        %v3979 = vadd.f32 %v3960, %v3976
        %v3980 = vadd.f32 %v3961, %v3976
        %v3981 = vadd.f32 %v3962, %v3976
        %v3982 = vadd.f32 %v3963, %v3976
        %v3983 = vadd.f32 %v3964, %v3976
        %v3984 = vadd.f32 %v3965, %v3976
        %v3985 = vadd.f32 %v3966, %v3976
        %v3986 = vadd.f32 %v3967, %v3976
        %v3987 = vadd.f32 %v3968, %v3976
        %v3988 = vadd.f32 %v3969, %v3976
        %v3989 = vadd.f32 %v3970, %v3976
        %v3990 = vadd.f32 %v3971, %v3976
        %v3991 = vadd.f32 %v3972, %v3976
        %v3992 = vadd.f32 %v3973, %v3976
        %v3993 = vadd.f32 %v3974, %v3976
        %v3994 = vmax.f32 %v3978, 0.0
        %v3995 = vmax.f32 %v3979, 0.0
        %v3996 = vmax.f32 %v3980, 0.0
        %v3997 = vmax.f32 %v3981, 0.0
        %v3998 = vmax.f32 %v3982, 0.0
        %v3999 = vmax.f32 %v3983, 0.0
        %v4000 = vmax.f32 %v3984, 0.0
        %v4001 = vmax.f32 %v3985, 0.0
        %v4002 = vmax.f32 %v3986, 0.0
        %v4003 = vmax.f32 %v3987, 0.0
        %v4004 = vmax.f32 %v3988, 0.0
        %v4005 = vmax.f32 %v3989, 0.0
        %v4006 = vmax.f32 %v3990, 0.0
        %v4007 = vmax.f32 %v3991, 0.0
        %v4008 = vmax.f32 %v3992, 0.0
        %v4009 = vmax.f32 %v3993, 0.0
        %v4010 = vpack.c.bf16 %v3994, %v3994
        %v4011 = vpack.c.bf16 %v3995, %v3995
        %v4012 = vpack.c.bf16 %v3996, %v3996
        %v4013 = vpack.c.bf16 %v3997, %v3997
        %v4014 = vpack.c.bf16 %v3998, %v3998
        %v4015 = vpack.c.bf16 %v3999, %v3999
        %v4016 = vpack.c.bf16 %v4000, %v4000
        %v4017 = vpack.c.bf16 %v4001, %v4001
        %v4018 = vpack.c.bf16 %v4002, %v4002
        %v4019 = vpack.c.bf16 %v4003, %v4003
        %v4020 = vpack.c.bf16 %v4004, %v4004
        %v4021 = vpack.c.bf16 %v4005, %v4005
        %v4022 = vpack.c.bf16 %v4006, %v4006
        %v4023 = vpack.c.bf16 %v4007, %v4007
        %v4024 = vpack.c.bf16 %v4008, %v4008
        %v4025 = vpack.c.bf16 %v4009, %v4009
        %s4026 = smul.u32 %s2403, 2
        %s4027 = smul.addr %s4026, 4
        %s4028 = scalar_lea.vmem %s224, %s4027
        %4029 = vst [vmem:[%s4028] sm:$0xf] %v4010
        %4030 = vst [vmem:[%s4028 + $0x4] sm:$0xf] %v4011
        %4031 = vst [vmem:[%s4028 + $0x8] sm:$0xf] %v4012
        %4032 = vst [vmem:[%s4028 + $0xc] sm:$0xf] %v4013
        %4033 = vst [vmem:[%s4028 + $0x10] sm:$0xf] %v4014
        %4034 = vst [vmem:[%s4028 + $0x14] sm:$0xf] %v4015
        %4035 = vst [vmem:[%s4028 + $0x18] sm:$0xf] %v4016
        %4036 = vst [vmem:[%s4028 + $0x1c] sm:$0xf] %v4017
        %4037 = vst [vmem:[%s4028 + $0x20] sm:$0xf] %v4018
        %4038 = vst [vmem:[%s4028 + $0x24] sm:$0xf] %v4019
        %4039 = vst [vmem:[%s4028 + $0x28] sm:$0xf] %v4020
        %4040 = vst [vmem:[%s4028 + $0x2c] sm:$0xf] %v4021
        %4041 = vst [vmem:[%s4028 + $0x30] sm:$0xf] %v4022
        %4042 = vst [vmem:[%s4028 + $0x34] sm:$0xf] %v4023
        %4043 = vst [vmem:[%s4028 + $0x38] sm:$0xf] %v4024
        %4044 = vst [vmem:[%s4028 + $0x3c] sm:$0xf] %v4025
      $region59: #{basic_block_forward.1} parent=39 // loop_footer
        %s2402 = sadd.s32 1, %s2398
      $region60: #{basic_block_forward.1} parent=39 // loop_footer_branch
        %2397 = sbr.rel target = $region56
      $region61: #{basic_block_forward.1} parent=39 // loop_exit
        _
      %p4045 = scmp.lt.s32.totalorder %s16, 1
      %s4046 = scalar_select %p4045, %s16, 1
      %s4047 = smul.addr %s4046, 32
      %s4048 = smul.addr %s4047, 4
      %s4049 = scalar_lea.vmem %s5, %s4048
      // Predicated region
      $region62: #{basic_block_forward.1} parent=39 // pred_check
        %p4050 = pneg %p144
      $region63: #{basic_block_forward.1} parent=39 // pred_check_branch
        %4052 = sbr.rel (%p4050) target = $region65
      $region64: #{basic_block_forward.1} parent=39 // pred_region
        _
      $region65: #{basic_block_forward.1} parent=39 // pred_fallthru
        _
    $region40: #{basic_block_forward.1} parent=5 // pred_fallthru
      _
    %p4053 = scmp.le.s32.totalorder 2, %s11
    // Predicated region
    $region66: #{basic_block_forward.1} parent=5 // pred_check
      %p4054 = pneg %p4053
    $region67: #{basic_block_forward.1} parent=5 // pred_check_branch
      %4056 = sbr.rel (%p4054) target = $region69
    $region68: #{basic_block_forward.1} parent=5 // pred_region
      %s4057 = ssub.s32 %s11, 2
      // Predicated region
      $region70: #{basic_block_forward.1} parent=68 // pred_check
        %p4058 = pneg %p150
      $region71: #{basic_block_forward.1} parent=68 // pred_check_branch
        %4060 = sbr.rel (%p4058) target = $region73
      $region72: #{basic_block_forward.1} parent=68 // pred_region
        %p4061 = scmp.lt.s32.totalorder %s17, 1
        %s4062 = scalar_select %p4061, %s17, 1
        %s4063 = smul.addr %s4062, 32
        %s4064 = smul.addr %s4063, 4
        %s4065 = scalar_lea.vmem %s5, %s4064
      $region73: #{basic_block_forward.1} parent=68 // pred_fallthru
        _
    $region69: #{basic_block_forward.1} parent=5 // pred_fallthru
      _
  $region6: #{basic_block_forward.1} parent=0 // loop_footer
    %s15 = sadd.s32 1, %s11
  $region7: #{basic_block_forward.1} parent=0 // loop_footer_branch
    %10 = sbr.rel target = $region3
  $region8: #{basic_block_forward.1} parent=0 // loop_exit
    _

</llo_original>
